<compile_context>
chip_gen: v5e
topology: v5e:2x2
jax: 0.10.0
libtpu: 0.0.40
codegen_flags: <defaults>
</compile_context>

<pallas_src>
import jax
import jax.numpy as jnp
from jax.experimental import pallas as pl
from jax.experimental.pallas import tpu as pltpu


def _feature_encoding_kernel(freq_ref, feat_ref, out_ref):
    # freq_ref: (1, N) VMEM        - harmonic frequencies
    # feat_ref: (C, TB, F) VMEM    - TB batch elements, camera-major
    # out_ref : (TB, 2*F*N) VMEM   - lane-dense output slab
    C, TB, F = feat_ref.shape
    N = freq_ref.shape[-1]
    FN = F * N

    freqs = freq_ref[...].reshape(1, 1, N)              # (1, 1, N)

    acc_sin = jnp.zeros((TB, FN), jnp.float32)
    acc_cos = jnp.zeros((TB, FN), jnp.float32)

    # Static unroll over cameras (C is small); leading-axis index is a free view.
    for c in range(C):
        feats_c = feat_ref[c]                            # (TB, F)
        # Exact f32 product, matching torch's x[..., None] * frequencies,
        # then relayout to the lane-dense (TB, F*N) shape the sin/cos run on.
        embed = (feats_c[:, :, None] * freqs).reshape(TB, FN)
        acc_sin = acc_sin + jnp.sin(embed)
        acc_cos = acc_cos + jnp.cos(embed)

    inv_c = jnp.float32(1.0 / C)
    out_ref[:, 0:FN] = acc_sin * inv_c                   # sin half (aligned)
    out_ref[:, FN:2 * FN] = acc_cos * inv_c              # cos half (aligned)


def feature_encoding(features: jnp.ndarray,
                     n_harmonic_functions: int = 64,
                     block_b: int = 256) -> jnp.ndarray:
    """features: (B, n_cam, F) float32 -> (B, 2 * F * n_harmonic_functions) float32."""
    B, C, F = features.shape
    N = n_harmonic_functions
    FN = F * N
    out_dim = 2 * FN

    # Deterministic "parameters" (buffer): logspace=False, omega0=1.0
    freqs = jnp.linspace(1.0, 2.0 ** (N - 1), N, dtype=jnp.float32).reshape(1, N)

    # Batch-tile size: full B if small, otherwise a sublane-aligned tile.
    if B <= block_b:
        TB = B
    else:
        TB = max(8, (block_b // 8) * 8)
    n_blocks = pl.cdiv(B, TB)
    B_pad = n_blocks * TB

    feats = features.astype(jnp.float32)
    if B_pad != B:
        feats = jnp.pad(feats, ((0, B_pad - B), (0, 0), (0, 0)))
    # Camera-major layout so the in-kernel reduction is a plain accumulate.
    feats_t = jnp.transpose(feats, (1, 0, 2))            # (C, B_pad, F)

    cost = pl.CostEstimate(
        flops=3 * B * C * FN,                  # multiplies + reduction adds + scale
        transcendentals=2 * B * C * FN,        # sin + cos
        bytes_accessed=B * C * F * 4 + B * out_dim * 4 + N * 4,
    )

    out = pl.pallas_call(
        _feature_encoding_kernel,
        out_shape=jax.ShapeDtypeStruct((B_pad, out_dim), jnp.float32),
        grid_spec=pltpu.PrefetchScalarGridSpec(
            num_scalar_prefetch=0,
            grid=(n_blocks,),
            in_specs=[
                pl.BlockSpec((1, N), lambda i: (0, 0)),          # frequencies (shared)
                pl.BlockSpec((C, TB, F), lambda i: (0, i, 0)),   # TB batch elems
            ],
            out_specs=pl.BlockSpec((TB, out_dim), lambda i: (i, 0)),
        ),
        compiler_params=pltpu.CompilerParams(
            dimension_semantics=("parallel",),
            vmem_limit_bytes=48 << 20,
        ),
        cost_estimate=cost,
    )(freqs, feats_t)

    return out[:B] if B_pad != B else out


def _reference(features: jnp.ndarray, n_harmonic_functions: int = 64) -> jnp.ndarray:
    N = n_harmonic_functions
    freqs = jnp.linspace(1.0, 2.0 ** (N - 1), N, dtype=jnp.float32)
    embed = (features[..., None] * freqs).reshape(*features.shape[:-1], -1)
    he = jnp.concatenate([jnp.sin(embed), jnp.cos(embed)], axis=-1)
    return jnp.mean(he, axis=1)


if __name__ == "__main__":
    key = jax.random.PRNGKey(0)
    N = 64

    # Case 1: tiny batch (single block, TB == B).
    B, C, F = 2, 4, 8
    k1, k2 = jax.random.split(key)
    features = jax.random.normal(k1, (B, C, F), dtype=jnp.float32)
    out = jax.block_until_ready(feature_encoding(features, n_harmonic_functions=N))
    ref = _reference(features, n_harmonic_functions=N)
    assert out.shape == (B, 2 * F * N), out.shape
    assert jnp.allclose(out, ref, atol=1e-4, rtol=1e-4), "mismatch vs reference (case 1)"

    # Case 2: multi-block grid with batch padding (B not a multiple of TB).
    B2 = 20
    features2 = jax.random.normal(k2, (B2, C, F), dtype=jnp.float32)
    out2 = jax.block_until_ready(
        feature_encoding(features2, n_harmonic_functions=N, block_b=8))
    ref2 = _reference(features2, n_harmonic_functions=N)
    assert out2.shape == (B2, 2 * F * N), out2.shape
    assert jnp.allclose(out2, ref2, atol=1e-4, rtol=1e-4), "mismatch vs reference (case 2)"

    print("KERNEL_OK")
</pallas_src>

<mosaic_0001>
module attributes {stable_mosaic.version = 11 : i64} {
  func.func @_feature_encoding_kernel(%arg0: i32, %arg1: memref<1x64xf32, #tpu.memory_space<vmem>>, %arg2: memref<4x2x8xf32, #tpu.memory_space<vmem>>, %arg3: memref<2x1024xf32, #tpu.memory_space<vmem>>) attributes {dimension_semantics = [#tpu.dimension_semantics<parallel>], iteration_bounds = array<i64: 1>, scalar_prefetch = 0 : i64, scratch_operands = 0 : i64, tpu.core_type = #tpu.core_type<tc>, window_params = [{pipeline_mode = #tpu.pipeline_mode<synchronous>, transform_indices = @transform_0, window_bounds = array<i64: 1, 64>}, {transform_indices = @transform_1, window_bounds = array<i64: 4, 2, 8>}, {transform_indices = @transform_2, window_bounds = array<i64: 2, 1024>}]} {
    %c0 = arith.constant 0 : index
    %c0_0 = arith.constant 0 : index
    %0 = vector.load %arg1[%c0, %c0_0] : memref<1x64xf32, #tpu.memory_space<vmem>>, vector<1x64xf32>
    %1 = vector.shape_cast %0 : vector<1x64xf32> to vector<1x1x64xf32>
    %cst = arith.constant 0.000000e+00 : f32
    %2 = vector.broadcast %cst : f32 to vector<2x512xf32>
    %cst_1 = arith.constant 0.000000e+00 : f32
    %3 = vector.broadcast %cst_1 : f32 to vector<2x512xf32>
    %c0_2 = arith.constant 0 : index
    %c0_3 = arith.constant 0 : index
    %c0_4 = arith.constant 0 : index
    %4 = vector.load %arg2[%c0_2, %c0_3, %c0_4] : memref<4x2x8xf32, #tpu.memory_space<vmem>>, vector<1x2x8xf32>
    %5 = vector.shape_cast %4 : vector<1x2x8xf32> to vector<2x8xf32>
    %6 = vector.shape_cast %5 : vector<2x8xf32> to vector<2x8x1xf32>
    %7 = vector.broadcast %6 : vector<2x8x1xf32> to vector<2x8x64xf32>
    %8 = vector.broadcast %1 : vector<1x1x64xf32> to vector<2x8x64xf32>
    %9 = arith.mulf %7, %8 : vector<2x8x64xf32>
    %10 = vector.shape_cast %9 : vector<2x8x64xf32> to vector<2x512xf32>
    %11 = math.sin %10 : vector<2x512xf32>
    %12 = arith.addf %2, %11 : vector<2x512xf32>
    %13 = math.cos %10 : vector<2x512xf32>
    %14 = arith.addf %3, %13 : vector<2x512xf32>
    %c1 = arith.constant 1 : index
    %c0_5 = arith.constant 0 : index
    %c0_6 = arith.constant 0 : index
    %15 = vector.load %arg2[%c1, %c0_5, %c0_6] : memref<4x2x8xf32, #tpu.memory_space<vmem>>, vector<1x2x8xf32>
    %16 = vector.shape_cast %15 : vector<1x2x8xf32> to vector<2x8xf32>
    %17 = vector.shape_cast %16 : vector<2x8xf32> to vector<2x8x1xf32>
    %18 = vector.broadcast %17 : vector<2x8x1xf32> to vector<2x8x64xf32>
    %19 = vector.broadcast %1 : vector<1x1x64xf32> to vector<2x8x64xf32>
    %20 = arith.mulf %18, %19 : vector<2x8x64xf32>
    %21 = vector.shape_cast %20 : vector<2x8x64xf32> to vector<2x512xf32>
    %22 = math.sin %21 : vector<2x512xf32>
    %23 = arith.addf %12, %22 : vector<2x512xf32>
    %24 = math.cos %21 : vector<2x512xf32>
    %25 = arith.addf %14, %24 : vector<2x512xf32>
    %c2 = arith.constant 2 : index
    %c0_7 = arith.constant 0 : index
    %c0_8 = arith.constant 0 : index
    %26 = vector.load %arg2[%c2, %c0_7, %c0_8] : memref<4x2x8xf32, #tpu.memory_space<vmem>>, vector<1x2x8xf32>
    %27 = vector.shape_cast %26 : vector<1x2x8xf32> to vector<2x8xf32>
    %28 = vector.shape_cast %27 : vector<2x8xf32> to vector<2x8x1xf32>
    %29 = vector.broadcast %28 : vector<2x8x1xf32> to vector<2x8x64xf32>
    %30 = vector.broadcast %1 : vector<1x1x64xf32> to vector<2x8x64xf32>
    %31 = arith.mulf %29, %30 : vector<2x8x64xf32>
    %32 = vector.shape_cast %31 : vector<2x8x64xf32> to vector<2x512xf32>
    %33 = math.sin %32 : vector<2x512xf32>
    %34 = arith.addf %23, %33 : vector<2x512xf32>
    %35 = math.cos %32 : vector<2x512xf32>
    %36 = arith.addf %25, %35 : vector<2x512xf32>
    %c3 = arith.constant 3 : index
    %c0_9 = arith.constant 0 : index
    %c0_10 = arith.constant 0 : index
    %37 = vector.load %arg2[%c3, %c0_9, %c0_10] : memref<4x2x8xf32, #tpu.memory_space<vmem>>, vector<1x2x8xf32>
    %38 = vector.shape_cast %37 : vector<1x2x8xf32> to vector<2x8xf32>
    %39 = vector.shape_cast %38 : vector<2x8xf32> to vector<2x8x1xf32>
    %40 = vector.broadcast %39 : vector<2x8x1xf32> to vector<2x8x64xf32>
    %41 = vector.broadcast %1 : vector<1x1x64xf32> to vector<2x8x64xf32>
    %42 = arith.mulf %40, %41 : vector<2x8x64xf32>
    %43 = vector.shape_cast %42 : vector<2x8x64xf32> to vector<2x512xf32>
    %44 = math.sin %43 : vector<2x512xf32>
    %45 = arith.addf %34, %44 : vector<2x512xf32>
    %46 = math.cos %43 : vector<2x512xf32>
    %47 = arith.addf %36, %46 : vector<2x512xf32>
    %cst_11 = arith.constant 2.500000e-01 : f32
    %48 = vector.broadcast %cst_11 : f32 to vector<2x512xf32>
    %49 = arith.mulf %45, %48 : vector<2x512xf32>
    %c0_12 = arith.constant 0 : index
    %c0_13 = arith.constant 0 : index
    %50 = vector.load %arg3[%c0_12, %c0_13] : memref<2x1024xf32, #tpu.memory_space<vmem>>, vector<2x512xf32>
    tpu.vector_store %arg3[%c0_12, %c0_13], %49 {strides = array<i32>} : memref<2x1024xf32, #tpu.memory_space<vmem>>, vector<2x512xf32>,
    %cst_14 = arith.constant 2.500000e-01 : f32
    %51 = vector.broadcast %cst_14 : f32 to vector<2x512xf32>
    %52 = arith.mulf %47, %51 : vector<2x512xf32>
    %c0_15 = arith.constant 0 : index
    %c512 = arith.constant 512 : index
    %53 = vector.load %arg3[%c0_15, %c512] : memref<2x1024xf32, #tpu.memory_space<vmem>>, vector<2x512xf32>
    tpu.vector_store %arg3[%c0_15, %c512], %52 {strides = array<i32>} : memref<2x1024xf32, #tpu.memory_space<vmem>>, vector<2x512xf32>,
    return
  }
  func.func @transform_0(%arg0: i32) -> (i32, i32) {
    %c0_i32 = arith.constant 0 : i32
    %c0_i32_0 = arith.constant 0 : i32
    %c0_i32_1 = arith.constant 0 : i32
    return %c0_i32, %c0_i32_0 : i32, i32
  }
  func.func @transform_1(%arg0: i32) -> (i32, i32, i32) {
    %c0_i32 = arith.constant 0 : i32
    %c0_i32_0 = arith.constant 0 : i32
    %c0_i32_1 = arith.constant 0 : i32
    return %c0_i32, %arg0, %c0_i32_0 : i32, i32, i32
  }
  func.func @transform_2(%arg0: i32) -> (i32, i32) {
    %c0_i32 = arith.constant 0 : i32
    %c0_i32_0 = arith.constant 0 : i32
    return %arg0, %c0_i32 : i32, i32
  }
}

</mosaic_0001>

<llo_original>
// kernel: tpu_custom_call.1
$region0: #{tpu_custom_call.1}
  #allocation0 [shape = 'u32[]', space=smem, size = 0x4, offset = 0x4, fixed_abs, tag = 'smem constant byte address 0x4 - core index']
  #allocation1 [shape = 'u32[72,128]{1,0:T(1,128)}', space=vmem, size = 0x9000, scoped, tag = 'internal scratch']
  %s0 = inlined_call_operand.hbm [shape: f32[1,64], index: 0, kind: input, shape index: {}]
  %s1 = inlined_call_operand.hbm [shape: f32[4,2,8], index: 1, kind: input, shape index: {}]
  %s2 = inlined_call_operand.hbm [shape: f32[2,1024], index: 2, kind: output, shape index: {}]
  %s3 = sld [smem:[#allocation0]]
  $region26: #{tpu_custom_call.1} parent=0
    _
  %s5 = ssub.s32 1, %s3
  %s6 = scalar_select 0, %s5, %s3
  $region1: #{tpu_custom_call.1} parent=0
    #allocation2 [shape = 'u8[512]{0}', space=vmem, size = 0x400, scoped, tag = 'input window, operand 0, single buffered']
    #allocation3 [shape = 's32[1]{0}', space=sflag, size = 0x4, scoped, tag = 'scoped memory for tpu_custom_call.1']
    #allocation4 [shape = 's32[1]{0}', space=sflag, size = 0x4, scoped, tag = 'scoped memory for tpu_custom_call.1']
    #allocation5 [shape = 'u8[4096]{0}', space=vmem, size = 0x1000, scoped, tag = 'input window, operand 1, single buffered']
    #allocation6 [shape = 's32[1]{0}', space=sflag, size = 0x4, scoped, tag = 'scoped memory for tpu_custom_call.1']
    #allocation7 [shape = 'u8[8192]{0}', space=vmem, size = 0x2000, scoped, tag = 'output window, operand 0, single buffered']
    %7 = vsyncpa [#allocation3], 0
    %8 = vsyncpa [#allocation6], 0
    %9 = vsyncpa [#allocation4], 0
    // Predicated region
    $region2: #{tpu_custom_call.1} parent=1 // pred_check
      _
    $region3: #{tpu_custom_call.1} parent=1 // pred_check_branch
      %11 = sbr.rel (0) target = $region5
    $region4: #{tpu_custom_call.1} parent=1 // pred_region
      %13 = vsyncadd [#allocation3], 0
      %s15 = sshll.u32 %s0, 4
      %s16 = int_to_ptr.hbm [resolvable:$true] %s15
      %s17 = sshll.u32 [#allocation2], 4
      %s18 = int_to_ptr.vmem [resolvable:$true] %s17
      %20 = dma.hbm_to_vmem [thread:$0]  %s16, 16, %s18, [#allocation3]
    $region5: #{tpu_custom_call.1} parent=1 // pred_fallthru
      _
    // Predicated region
    $region6: #{tpu_custom_call.1} parent=1 // pred_check
      _
    $region7: #{tpu_custom_call.1} parent=1 // pred_check_branch
      %22 = sbr.rel (0) target = $region9
    $region8: #{tpu_custom_call.1} parent=1 // pred_region
      %24 = vsyncadd [#allocation6], 0
      %s25 = sshll.u32 %s1, 4
      %s26 = int_to_ptr.hbm [resolvable:$true] %s25
      %s27 = sshll.u32 [#allocation5], 4
      %s28 = int_to_ptr.vmem [resolvable:$true] %s27
      %33 = dma.hbm_to_vmem [thread:$0]  %s26, 128, %s28, [#allocation6], 32, 32, 2
    $region9: #{tpu_custom_call.1} parent=1 // pred_fallthru
      _
    // Predicated region
    $region10: #{tpu_custom_call.1} parent=1 // pred_check
      _
    $region11: #{tpu_custom_call.1} parent=1 // pred_check_branch
      %35 = sbr.rel (0) target = $region13
    $region12: #{tpu_custom_call.1} parent=1 // pred_region
      %37 = dma.done [#allocation3], 16
    $region13: #{tpu_custom_call.1} parent=1 // pred_fallthru
      _
    // Predicated region
    $region14: #{tpu_custom_call.1} parent=1 // pred_check
      _
    $region15: #{tpu_custom_call.1} parent=1 // pred_check_branch
      %39 = sbr.rel (0) target = $region17
    $region16: #{tpu_custom_call.1} parent=1 // pred_region
      %41 = dma.done [#allocation6], 128
    $region17: #{tpu_custom_call.1} parent=1 // pred_fallthru
      _
    %v42 = vld [vmem:[#allocation2] sm:$0x1]
    %v43 = vld [vmem:[#allocation5] sm:$0x3]
    %v44 = vperm.slane %v43, 0
    %v45 = vlaneseq
    %v46 = vshrl.u32 %v45, 7
    %48 = vset.pattern.permute.xlu0 %v46
    %49 = vperm.xlu0 %48, %v44
    %v50 = vpop.permute.xlu0 %49
    %v51 = vperm.slane %v43, 1
    %v52 = vlaneseq
    %v53 = vshrl.u32 %v52, 7
    %55 = vset.pattern.permute.xlu0 %v53
    %56 = vperm.xlu0 %55, %v51
    %v57 = vpop.permute.xlu0 %56
    %v59 = vperm.slane %v42, 0
    %v61 = vmul.f32 %v50, %v59
    %v62 = vmul.f32 %v57, %v59
    %v63 = vrot.slane %v61, 4
    %vm64 = vcmask 1047556
    %v65 = vsel %vm64, 0.0, %v63
    %v67 = vunpack.c.l.s4 1983009808
    %v68 = vunpack.c.0.s8 %v67
    %v69 = vperm.slane %v61, %v68
    %v71 = vunpack.c.l.s4 1983009808
    %v72 = vunpack.c.0.s8 %v71
    %v73 = vperm.slane %v65, %v72
    %v74 = vrot.slane %v62, 4
    %v75 = vsel %vm64, 0.0, %v74
    %v77 = vunpack.c.l.s4 1983009808
    %v78 = vunpack.c.0.s8 %v77
    %v79 = vperm.slane %v62, %v78
    %v81 = vunpack.c.l.s4 1983009808
    %v82 = vunpack.c.0.s8 %v81
    %v83 = vperm.slane %v75, %v82
    %v84 = vrot.slane %v79, 4
    %v85 = vsel %vm64, %v84, %v69
    %v86 = vrot.slane %v69, 4
    %v87 = vsel %vm64, %v79, %v86
    %v89 = vunpack.c.l.s4 1934713408
    %v90 = vunpack.c.0.s8 %v89
    %v91 = vperm.slane %v85, %v90
    %v93 = vunpack.c.l.s4 1934713408
    %v94 = vunpack.c.0.s8 %v93
    %v95 = vperm.slane %v87, %v94
    %v96 = vrot.slane %v83, 4
    %v97 = vsel %vm64, %v96, %v73
    %v98 = vrot.slane %v73, 4
    %v99 = vsel %vm64, %v83, %v98
    %v101 = vunpack.c.l.s4 1934713408
    %v102 = vunpack.c.0.s8 %v101
    %v103 = vperm.slane %v97, %v102
    %v105 = vunpack.c.l.s4 1934713408
    %v106 = vunpack.c.0.s8 %v105
    %v107 = vperm.slane %v99, %v106
    %v108 = vrot.slane %v91, 4
    %v109 = vsel %vm64, 0.0, %v108
    %v110 = vrot.slane %v95, 4
    %v111 = vsel %vm64, 0.0, %v110
    %v112 = vrot.slane %v103, 4
    %v113 = vsel %vm64, 0.0, %v112
    %v114 = vrot.slane %v107, 4
    %v115 = vsel %vm64, 0.0, %v114
    %117 = vrot.lane.b32.xlu0 %v109, 64
    %v118 = vpop.permute.xlu0 %117
    %121 = vrot.lane.b32.xlu0 %v111, 64
    %v122 = vpop.permute.xlu0 %121
    %125 = vrot.lane.b32.xlu0 %v113, 64
    %v126 = vpop.permute.xlu0 %125
    %129 = vrot.lane.b32.xlu0 %v115, 64
    %v130 = vpop.permute.xlu0 %129
    %vm132 = vcmask 523264
    %v133 = vsel %vm132, %v91, %v118
    %v134 = vsel %vm132, %v95, %v122
    %v135 = vsel %vm132, %v103, %v126
    %v136 = vsel %vm132, %v107, %v130
    %v137 = vand.u32 2147483647, %v133
    %vm138 = vcmp.le.f32.partialorder %v137, 0.7853982
    %vm139 = vcmp.lt.s32.totalorder %v133, 0
    %v140 = vand.u32 %v133, 2139095040
    %v141 = vshrl.u32 %v140, 23
    %v142 = vsub.s32 %v141, 127
    %v143 = vand.u32 2147483647, %v133
    %v144 = vand.u32 %v143, 8388607
    %v145 = vor.u32 %v144, 8388608
    %v146 = vsub.s32 0, %v145
    %v147 = vadd.s32 %v142, 1
    %vm148 = vcmp.gt.s32.totalorder %v147, 0
    %v149 = vsel %vm148, %v147, 0
    %v150 = vshrl.u32 %v149, 5
    %v151 = vand.u32 %v149, 31
    %v152 = vsub.s32 32, %v151
    %v153 = vshrl.u32 683565275, %v152
    %v154 = vshll.u32 683565275, %v151
    %v155 = vshrl.u32 2475754826, %v152
    %v156 = vor.u32 %v154, %v155
    %v157 = vshll.u32 2475754826, %v151
    %v158 = vshrl.u32 2131351028, %v152
    %v159 = vor.u32 %v157, %v158
    %v160 = vshll.u32 2131351028, %v151
    %v161 = vshrl.u32 2102212464, %v152
    %v162 = vor.u32 %v160, %v161
    %v163 = vshll.u32 2102212464, %v151
    %v164 = vshrl.u32 920167782, %v152
    %v165 = vor.u32 %v163, %v164
    %v166 = vshll.u32 920167782, %v151
    %v167 = vshrl.u32 1326507024, %v152
    %v168 = vor.u32 %v166, %v167
    %vm169 = vcmp.lt.s32.totalorder %v150, 1
    %vm170 = vcmp.lt.s32.totalorder %v150, 2
    %vm171 = vcmp.lt.s32.totalorder %v150, 3
    %vm172 = vcmp.lt.s32.totalorder %v150, 4
    %v173 = vsel %vm169, %v153, %v156
    %v174 = vsel %vm172, %v162, 2102212464
    %v175 = vsel %vm171, %v159, %v174
    %v176 = vsel %vm170, %v173, %v175
    %v177 = vsel %vm169, %v156, %v159
    %v178 = vsel %vm172, %v165, 920167782
    %v179 = vsel %vm171, %v162, %v178
    %v180 = vsel %vm170, %v177, %v179
    %v181 = vsel %vm169, %v159, %v162
    %v182 = vsel %vm172, %v168, 1326507024
    %v183 = vsel %vm171, %v165, %v182
    %v184 = vsel %vm170, %v181, %v183
    %v185 = vshll.u32 %v145, 8
    %v186 = vand.u32 %v185, 65535
    %v187 = vshrl.u32 %v185, 16
    %v188 = vand.u32 %v184, 65535
    %v189 = vshrl.u32 %v184, 16
    %v190 = vmul.u32 %v186, %v188
    %v191 = vmul.u32 %v186, %v189
    %v192 = vmul.u32 %v187, %v188
    %v193 = vmul.u32 %v187, %v189
    %v194 = vshll.u32 %v191, 16
    %v195 = vshrl.u32 %v191, 16
    %v196 = vshll.u32 %v192, 16
    %v197 = vshrl.u32 %v192, 16
    %vm198 = vc.u32 %v190, %v194
    %v199 = vsel %vm198, 1, 0
    %v200 = vadd.s32 %v190, %v194
    %v201 = vadd.s32 %v193, %v199
    %vm202 = vc.u32 %v200, %v196
    %v203 = vsel %vm202, 1, 0
    %v204 = vadd.s32 %v200, %v196
    %v205 = vadd.s32 %v201, %v203
    %v206 = vadd.s32 %v205, %v195
    %v207 = vadd.s32 %v206, %v197
    %v208 = vand.u32 %v185, 65535
    %v209 = vshrl.u32 %v185, 16
    %v210 = vand.u32 %v180, 65535
    %v211 = vshrl.u32 %v180, 16
    %v212 = vmul.u32 %v208, %v210
    %v213 = vmul.u32 %v208, %v211
    %v214 = vmul.u32 %v209, %v210
    %v215 = vmul.u32 %v209, %v211
    %v216 = vshll.u32 %v213, 16
    %v217 = vshrl.u32 %v213, 16
    %v218 = vshll.u32 %v214, 16
    %v219 = vshrl.u32 %v214, 16
    %vm220 = vc.u32 %v212, %v216
    %v221 = vsel %vm220, 1, 0
    %v222 = vadd.s32 %v212, %v216
    %v223 = vadd.s32 %v215, %v221
    %vm224 = vc.u32 %v222, %v218
    %v225 = vsel %vm224, 1, 0
    %v226 = vadd.s32 %v222, %v218
    %v227 = vadd.s32 %v223, %v225
    %v228 = vadd.s32 %v227, %v217
    %v229 = vadd.s32 %v228, %v219
    %v230 = vmul.u32 %v185, %v176
    %v231 = vadd.s32 %v207, %v226
    %vm232 = vc.u32 %v207, %v226
    %v233 = vadd.s32 %v229, 1
    %v234 = vsel %vm232, %v233, %v229
    %v235 = vadd.s32 %v230, %v234
    %v236 = vadd.s32 %v235, 536870912
    %v237 = vshrl.u32 %v236, 30
    %v238 = vshll.u32 %v237, 30
    %v239 = vsub.s32 %v235, %v238
    %vm240 = vcmp.lt.s32.totalorder %v239, 0
    %v241 = vsub.s32 0, %v239
    %v242 = vsel %vm240, %v241, %v239
    %v243 = vclz %v242
    %v244 = vsub.s32 %v243, 2
    %vm245 = vcmp.gt.s32.totalorder 0, %v244
    %v246 = vsel %vm245, 0, %v244
    %v247 = vsub.s32 32, %v246
    %v248 = vshll.u32 %v239, %v246
    %v249 = vshrl.u32 %v231, %v247
    %v250 = vor.u32 %v248, %v249
    %v251 = vsub.s32 4294967266, %v246
    %v252 = vadd.s32 %v251, 127
    %v253 = vshll.u32 %v252, 23
    %v254 = vor.u32 4788187, %v253
    %v255 = vand.u32 2147483647, %v254
    %v257 = vcvt.s32.f32 %v250
    %v258 = vmul.f32 %v257, %v255
    %v259 = vxor.u32 %v258, 2147483648
    %v260 = vsel %vm139, %v259, %v258
    %v261 = vsub.s32 4, %v237
    %v262 = vsel %vm139, %v261, %v237
    %v263 = vsel %vm138, %v133, %v260
    %v264 = vsel %vm138, 0, %v262
    %v265 = vmul.f32 %v263, %v263
    %v266 = vmul.f32 %v265, -0.001358992
    %v267 = vadd.f32 %v266, 0.041655596
    %v268 = vmul.f32 %v265, %v267
    %v269 = vadd.f32 %v268, -0.4999988
    %v270 = vmul.f32 %v265, %v269
    %v271 = vadd.f32 1.0, %v270
    %v272 = vmul.f32 %v263, %v263
    %v273 = vmul.f32 %v272, -0.00019511016
    %v274 = vadd.f32 %v273, 0.008332121
    %v275 = vmul.f32 %v272, %v274
    %v276 = vadd.f32 %v275, -0.16666654
    %v277 = vmul.f32 %v272, %v276
    %v278 = vadd.f32 %v277, 1.0
    %v279 = vmul.f32 %v278, %v263
    %vm280 = vweird.f32 %v133
    %v281 = vadd.s32 %v264, 3
    %v282 = vand.u32 %v281, 3
    %vm283 = vcmp.lt.s32.totalorder %v282, 2
    %vm284 = vcmp.eq.s32.totalorder %v282, 0
    %v285 = vxor.u32 %v279, 2147483648
    %v286 = vsel %vm284, %v271, %v285
    %vm287 = vcmp.eq.s32.totalorder %v282, 2
    %v288 = vxor.u32 %v271, 2147483648
    %v289 = vsel %vm287, %v288, %v279
    %v290 = vsel %vm283, %v286, %v289
    %v291 = vsel %vm280, nan, %v290
    %v292 = vand.u32 2147483647, %v134
    %vm293 = vcmp.le.f32.partialorder %v292, 0.7853982
    %vm294 = vcmp.lt.s32.totalorder %v134, 0
    %v295 = vand.u32 %v134, 2139095040
    %v296 = vshrl.u32 %v295, 23
    %v297 = vsub.s32 %v296, 127
    %v298 = vand.u32 2147483647, %v134
    %v299 = vand.u32 %v298, 8388607
    %v300 = vor.u32 %v299, 8388608
    %v301 = vsub.s32 0, %v300
    %v302 = vadd.s32 %v297, 1
    %vm303 = vcmp.gt.s32.totalorder %v302, 0
    %v304 = vsel %vm303, %v302, 0
    %v305 = vshrl.u32 %v304, 5
    %v306 = vand.u32 %v304, 31
    %v307 = vsub.s32 32, %v306
    %v308 = vshrl.u32 683565275, %v307
    %v309 = vshll.u32 683565275, %v306
    %v310 = vshrl.u32 2475754826, %v307
    %v311 = vor.u32 %v309, %v310
    %v312 = vshll.u32 2475754826, %v306
    %v313 = vshrl.u32 2131351028, %v307
    %v314 = vor.u32 %v312, %v313
    %v315 = vshll.u32 2131351028, %v306
    %v316 = vshrl.u32 2102212464, %v307
    %v317 = vor.u32 %v315, %v316
    %v318 = vshll.u32 2102212464, %v306
    %v319 = vshrl.u32 920167782, %v307
    %v320 = vor.u32 %v318, %v319
    %v321 = vshll.u32 920167782, %v306
    %v322 = vshrl.u32 1326507024, %v307
    %v323 = vor.u32 %v321, %v322
    %vm324 = vcmp.lt.s32.totalorder %v305, 1
    %vm325 = vcmp.lt.s32.totalorder %v305, 2
    %vm326 = vcmp.lt.s32.totalorder %v305, 3
    %vm327 = vcmp.lt.s32.totalorder %v305, 4
    %v328 = vsel %vm324, %v308, %v311
    %v329 = vsel %vm327, %v317, 2102212464
    %v330 = vsel %vm326, %v314, %v329
    %v331 = vsel %vm325, %v328, %v330
    %v332 = vsel %vm324, %v311, %v314
    %v333 = vsel %vm327, %v320, 920167782
    %v334 = vsel %vm326, %v317, %v333
    %v335 = vsel %vm325, %v332, %v334
    %v336 = vsel %vm324, %v314, %v317
    %v337 = vsel %vm327, %v323, 1326507024
    %v338 = vsel %vm326, %v320, %v337
    %v339 = vsel %vm325, %v336, %v338
    %v340 = vshll.u32 %v300, 8
    %v341 = vand.u32 %v340, 65535
    %v342 = vshrl.u32 %v340, 16
    %v343 = vand.u32 %v339, 65535
    %v344 = vshrl.u32 %v339, 16
    %v345 = vmul.u32 %v341, %v343
    %v346 = vmul.u32 %v341, %v344
    %v347 = vmul.u32 %v342, %v343
    %v348 = vmul.u32 %v342, %v344
    %v349 = vshll.u32 %v346, 16
    %v350 = vshrl.u32 %v346, 16
    %v351 = vshll.u32 %v347, 16
    %v352 = vshrl.u32 %v347, 16
    %vm353 = vc.u32 %v345, %v349
    %v354 = vsel %vm353, 1, 0
    %v355 = vadd.s32 %v345, %v349
    %v356 = vadd.s32 %v348, %v354
    %vm357 = vc.u32 %v355, %v351
    %v358 = vsel %vm357, 1, 0
    %v359 = vadd.s32 %v355, %v351
    %v360 = vadd.s32 %v356, %v358
    %v361 = vadd.s32 %v360, %v350
    %v362 = vadd.s32 %v361, %v352
    %v363 = vand.u32 %v340, 65535
    %v364 = vshrl.u32 %v340, 16
    %v365 = vand.u32 %v335, 65535
    %v366 = vshrl.u32 %v335, 16
    %v367 = vmul.u32 %v363, %v365
    %v368 = vmul.u32 %v363, %v366
    %v369 = vmul.u32 %v364, %v365
    %v370 = vmul.u32 %v364, %v366
    %v371 = vshll.u32 %v368, 16
    %v372 = vshrl.u32 %v368, 16
    %v373 = vshll.u32 %v369, 16
    %v374 = vshrl.u32 %v369, 16
    %vm375 = vc.u32 %v367, %v371
    %v376 = vsel %vm375, 1, 0
    %v377 = vadd.s32 %v367, %v371
    %v378 = vadd.s32 %v370, %v376
    %vm379 = vc.u32 %v377, %v373
    %v380 = vsel %vm379, 1, 0
    %v381 = vadd.s32 %v377, %v373
    %v382 = vadd.s32 %v378, %v380
    %v383 = vadd.s32 %v382, %v372
    %v384 = vadd.s32 %v383, %v374
    %v385 = vmul.u32 %v340, %v331
    %v386 = vadd.s32 %v362, %v381
    %vm387 = vc.u32 %v362, %v381
    %v388 = vadd.s32 %v384, 1
    %v389 = vsel %vm387, %v388, %v384
    %v390 = vadd.s32 %v385, %v389
    %v391 = vadd.s32 %v390, 536870912
    %v392 = vshrl.u32 %v391, 30
    %v393 = vshll.u32 %v392, 30
    %v394 = vsub.s32 %v390, %v393
    %vm395 = vcmp.lt.s32.totalorder %v394, 0
    %v396 = vsub.s32 0, %v394
    %v397 = vsel %vm395, %v396, %v394
    %v398 = vclz %v397
    %v399 = vsub.s32 %v398, 2
    %vm400 = vcmp.gt.s32.totalorder 0, %v399
    %v401 = vsel %vm400, 0, %v399
    %v402 = vsub.s32 32, %v401
    %v403 = vshll.u32 %v394, %v401
    %v404 = vshrl.u32 %v386, %v402
    %v405 = vor.u32 %v403, %v404
    %v406 = vsub.s32 4294967266, %v401
    %v407 = vadd.s32 %v406, 127
    %v408 = vshll.u32 %v407, 23
    %v409 = vor.u32 4788187, %v408
    %v410 = vand.u32 2147483647, %v409
    %v412 = vcvt.s32.f32 %v405
    %v413 = vmul.f32 %v412, %v410
    %v414 = vxor.u32 %v413, 2147483648
    %v415 = vsel %vm294, %v414, %v413
    %v416 = vsub.s32 4, %v392
    %v417 = vsel %vm294, %v416, %v392
    %v418 = vsel %vm293, %v134, %v415
    %v419 = vsel %vm293, 0, %v417
    %v420 = vmul.f32 %v418, %v418
    %v421 = vmul.f32 %v420, -0.001358992
    %v422 = vadd.f32 %v421, 0.041655596
    %v423 = vmul.f32 %v420, %v422
    %v424 = vadd.f32 %v423, -0.4999988
    %v425 = vmul.f32 %v420, %v424
    %v426 = vadd.f32 1.0, %v425
    %v427 = vmul.f32 %v418, %v418
    %v428 = vmul.f32 %v427, -0.00019511016
    %v429 = vadd.f32 %v428, 0.008332121
    %v430 = vmul.f32 %v427, %v429
    %v431 = vadd.f32 %v430, -0.16666654
    %v432 = vmul.f32 %v427, %v431
    %v433 = vadd.f32 %v432, 1.0
    %v434 = vmul.f32 %v433, %v418
    %vm435 = vweird.f32 %v134
    %v436 = vadd.s32 %v419, 3
    %v437 = vand.u32 %v436, 3
    %vm438 = vcmp.lt.s32.totalorder %v437, 2
    %vm439 = vcmp.eq.s32.totalorder %v437, 0
    %v440 = vxor.u32 %v434, 2147483648
    %v441 = vsel %vm439, %v426, %v440
    %vm442 = vcmp.eq.s32.totalorder %v437, 2
    %v443 = vxor.u32 %v426, 2147483648
    %v444 = vsel %vm442, %v443, %v434
    %v445 = vsel %vm438, %v441, %v444
    %v446 = vsel %vm435, nan, %v445
    %v447 = vand.u32 2147483647, %v135
    %vm448 = vcmp.le.f32.partialorder %v447, 0.7853982
    %vm449 = vcmp.lt.s32.totalorder %v135, 0
    %v450 = vand.u32 %v135, 2139095040
    %v451 = vshrl.u32 %v450, 23
    %v452 = vsub.s32 %v451, 127
    %v453 = vand.u32 2147483647, %v135
    %v454 = vand.u32 %v453, 8388607
    %v455 = vor.u32 %v454, 8388608
    %v456 = vsub.s32 0, %v455
    %v457 = vadd.s32 %v452, 1
    %vm458 = vcmp.gt.s32.totalorder %v457, 0
    %v459 = vsel %vm458, %v457, 0
    %v460 = vshrl.u32 %v459, 5
    %v461 = vand.u32 %v459, 31
    %v462 = vsub.s32 32, %v461
    %v463 = vshrl.u32 683565275, %v462
    %v464 = vshll.u32 683565275, %v461
    %v465 = vshrl.u32 2475754826, %v462
    %v466 = vor.u32 %v464, %v465
    %v467 = vshll.u32 2475754826, %v461
    %v468 = vshrl.u32 2131351028, %v462
    %v469 = vor.u32 %v467, %v468
    %v470 = vshll.u32 2131351028, %v461
    %v471 = vshrl.u32 2102212464, %v462
    %v472 = vor.u32 %v470, %v471
    %v473 = vshll.u32 2102212464, %v461
    %v474 = vshrl.u32 920167782, %v462
    %v475 = vor.u32 %v473, %v474
    %v476 = vshll.u32 920167782, %v461
    %v477 = vshrl.u32 1326507024, %v462
    %v478 = vor.u32 %v476, %v477
    %vm479 = vcmp.lt.s32.totalorder %v460, 1
    %vm480 = vcmp.lt.s32.totalorder %v460, 2
    %vm481 = vcmp.lt.s32.totalorder %v460, 3
    %vm482 = vcmp.lt.s32.totalorder %v460, 4
    %v483 = vsel %vm479, %v463, %v466
    %v484 = vsel %vm482, %v472, 2102212464
    %v485 = vsel %vm481, %v469, %v484
    %v486 = vsel %vm480, %v483, %v485
    %v487 = vsel %vm479, %v466, %v469
    %v488 = vsel %vm482, %v475, 920167782
    %v489 = vsel %vm481, %v472, %v488
    %v490 = vsel %vm480, %v487, %v489
    %v491 = vsel %vm479, %v469, %v472
    %v492 = vsel %vm482, %v478, 1326507024
    %v493 = vsel %vm481, %v475, %v492
    %v494 = vsel %vm480, %v491, %v493
    %v495 = vshll.u32 %v455, 8
    %v496 = vand.u32 %v495, 65535
    %v497 = vshrl.u32 %v495, 16
    %v498 = vand.u32 %v494, 65535
    %v499 = vshrl.u32 %v494, 16
    %v500 = vmul.u32 %v496, %v498
    %v501 = vmul.u32 %v496, %v499
    %v502 = vmul.u32 %v497, %v498
    %v503 = vmul.u32 %v497, %v499
    %v504 = vshll.u32 %v501, 16
    %v505 = vshrl.u32 %v501, 16
    %v506 = vshll.u32 %v502, 16
    %v507 = vshrl.u32 %v502, 16
    %vm508 = vc.u32 %v500, %v504
    %v509 = vsel %vm508, 1, 0
    %v510 = vadd.s32 %v500, %v504
    %v511 = vadd.s32 %v503, %v509
    %vm512 = vc.u32 %v510, %v506
    %v513 = vsel %vm512, 1, 0
    %v514 = vadd.s32 %v510, %v506
    %v515 = vadd.s32 %v511, %v513
    %v516 = vadd.s32 %v515, %v505
    %v517 = vadd.s32 %v516, %v507
    %v518 = vand.u32 %v495, 65535
    %v519 = vshrl.u32 %v495, 16
    %v520 = vand.u32 %v490, 65535
    %v521 = vshrl.u32 %v490, 16
    %v522 = vmul.u32 %v518, %v520
    %v523 = vmul.u32 %v518, %v521
    %v524 = vmul.u32 %v519, %v520
    %v525 = vmul.u32 %v519, %v521
    %v526 = vshll.u32 %v523, 16
    %v527 = vshrl.u32 %v523, 16
    %v528 = vshll.u32 %v524, 16
    %v529 = vshrl.u32 %v524, 16
    %vm530 = vc.u32 %v522, %v526
    %v531 = vsel %vm530, 1, 0
    %v532 = vadd.s32 %v522, %v526
    %v533 = vadd.s32 %v525, %v531
    %vm534 = vc.u32 %v532, %v528
    %v535 = vsel %vm534, 1, 0
    %v536 = vadd.s32 %v532, %v528
    %v537 = vadd.s32 %v533, %v535
    %v538 = vadd.s32 %v537, %v527
    %v539 = vadd.s32 %v538, %v529
    %v540 = vmul.u32 %v495, %v486
    %v541 = vadd.s32 %v517, %v536
    %vm542 = vc.u32 %v517, %v536
    %v543 = vadd.s32 %v539, 1
    %v544 = vsel %vm542, %v543, %v539
    %v545 = vadd.s32 %v540, %v544
    %v546 = vadd.s32 %v545, 536870912
    %v547 = vshrl.u32 %v546, 30
    %v548 = vshll.u32 %v547, 30
    %v549 = vsub.s32 %v545, %v548
    %vm550 = vcmp.lt.s32.totalorder %v549, 0
    %v551 = vsub.s32 0, %v549
    %v552 = vsel %vm550, %v551, %v549
    %v553 = vclz %v552
    %v554 = vsub.s32 %v553, 2
    %vm555 = vcmp.gt.s32.totalorder 0, %v554
    %v556 = vsel %vm555, 0, %v554
    %v557 = vsub.s32 32, %v556
    %v558 = vshll.u32 %v549, %v556
    %v559 = vshrl.u32 %v541, %v557
    %v560 = vor.u32 %v558, %v559
    %v561 = vsub.s32 4294967266, %v556
    %v562 = vadd.s32 %v561, 127
    %v563 = vshll.u32 %v562, 23
    %v564 = vor.u32 4788187, %v563
    %v565 = vand.u32 2147483647, %v564
    %v567 = vcvt.s32.f32 %v560
    %v568 = vmul.f32 %v567, %v565
    %v569 = vxor.u32 %v568, 2147483648
    %v570 = vsel %vm449, %v569, %v568
    %v571 = vsub.s32 4, %v547
    %v572 = vsel %vm449, %v571, %v547
    %v573 = vsel %vm448, %v135, %v570
    %v574 = vsel %vm448, 0, %v572
    %v575 = vmul.f32 %v573, %v573
    %v576 = vmul.f32 %v575, -0.001358992
    %v577 = vadd.f32 %v576, 0.041655596
    %v578 = vmul.f32 %v575, %v577
    %v579 = vadd.f32 %v578, -0.4999988
    %v580 = vmul.f32 %v575, %v579
    %v581 = vadd.f32 1.0, %v580
    %v582 = vmul.f32 %v573, %v573
    %v583 = vmul.f32 %v582, -0.00019511016
    %v584 = vadd.f32 %v583, 0.008332121
    %v585 = vmul.f32 %v582, %v584
    %v586 = vadd.f32 %v585, -0.16666654
    %v587 = vmul.f32 %v582, %v586
    %v588 = vadd.f32 %v587, 1.0
    %v589 = vmul.f32 %v588, %v573
    %vm590 = vweird.f32 %v135
    %v591 = vadd.s32 %v574, 3
    %v592 = vand.u32 %v591, 3
    %vm593 = vcmp.lt.s32.totalorder %v592, 2
    %vm594 = vcmp.eq.s32.totalorder %v592, 0
    %v595 = vxor.u32 %v589, 2147483648
    %v596 = vsel %vm594, %v581, %v595
    %vm597 = vcmp.eq.s32.totalorder %v592, 2
    %v598 = vxor.u32 %v581, 2147483648
    %v599 = vsel %vm597, %v598, %v589
    %v600 = vsel %vm593, %v596, %v599
    %v601 = vsel %vm590, nan, %v600
    %v602 = vand.u32 2147483647, %v136
    %vm603 = vcmp.le.f32.partialorder %v602, 0.7853982
    %vm604 = vcmp.lt.s32.totalorder %v136, 0
    %v605 = vand.u32 %v136, 2139095040
    %v606 = vshrl.u32 %v605, 23
    %v607 = vsub.s32 %v606, 127
    %v608 = vand.u32 2147483647, %v136
    %v609 = vand.u32 %v608, 8388607
    %v610 = vor.u32 %v609, 8388608
    %v611 = vsub.s32 0, %v610
    %v612 = vadd.s32 %v607, 1
    %vm613 = vcmp.gt.s32.totalorder %v612, 0
    %v614 = vsel %vm613, %v612, 0
    %v615 = vshrl.u32 %v614, 5
    %v616 = vand.u32 %v614, 31
    %v617 = vsub.s32 32, %v616
    %v618 = vshrl.u32 683565275, %v617
    %v619 = vshll.u32 683565275, %v616
    %v620 = vshrl.u32 2475754826, %v617
    %v621 = vor.u32 %v619, %v620
    %v622 = vshll.u32 2475754826, %v616
    %v623 = vshrl.u32 2131351028, %v617
    %v624 = vor.u32 %v622, %v623
    %v625 = vshll.u32 2131351028, %v616
    %v626 = vshrl.u32 2102212464, %v617
    %v627 = vor.u32 %v625, %v626
    %v628 = vshll.u32 2102212464, %v616
    %v629 = vshrl.u32 920167782, %v617
    %v630 = vor.u32 %v628, %v629
    %v631 = vshll.u32 920167782, %v616
    %v632 = vshrl.u32 1326507024, %v617
    %v633 = vor.u32 %v631, %v632
    %vm634 = vcmp.lt.s32.totalorder %v615, 1
    %vm635 = vcmp.lt.s32.totalorder %v615, 2
    %vm636 = vcmp.lt.s32.totalorder %v615, 3
    %vm637 = vcmp.lt.s32.totalorder %v615, 4
    %v638 = vsel %vm634, %v618, %v621
    %v639 = vsel %vm637, %v627, 2102212464
    %v640 = vsel %vm636, %v624, %v639
    %v641 = vsel %vm635, %v638, %v640
    %v642 = vsel %vm634, %v621, %v624
    %v643 = vsel %vm637, %v630, 920167782
    %v644 = vsel %vm636, %v627, %v643
    %v645 = vsel %vm635, %v642, %v644
    %v646 = vsel %vm634, %v624, %v627
    %v647 = vsel %vm637, %v633, 1326507024
    %v648 = vsel %vm636, %v630, %v647
    %v649 = vsel %vm635, %v646, %v648
    %v650 = vshll.u32 %v610, 8
    %v651 = vand.u32 %v650, 65535
    %v652 = vshrl.u32 %v650, 16
    %v653 = vand.u32 %v649, 65535
    %v654 = vshrl.u32 %v649, 16
    %v655 = vmul.u32 %v651, %v653
    %v656 = vmul.u32 %v651, %v654
    %v657 = vmul.u32 %v652, %v653
    %v658 = vmul.u32 %v652, %v654
    %v659 = vshll.u32 %v656, 16
    %v660 = vshrl.u32 %v656, 16
    %v661 = vshll.u32 %v657, 16
    %v662 = vshrl.u32 %v657, 16
    %vm663 = vc.u32 %v655, %v659
    %v664 = vsel %vm663, 1, 0
    %v665 = vadd.s32 %v655, %v659
    %v666 = vadd.s32 %v658, %v664
    %vm667 = vc.u32 %v665, %v661
    %v668 = vsel %vm667, 1, 0
    %v669 = vadd.s32 %v665, %v661
    %v670 = vadd.s32 %v666, %v668
    %v671 = vadd.s32 %v670, %v660
    %v672 = vadd.s32 %v671, %v662
    %v673 = vand.u32 %v650, 65535
    %v674 = vshrl.u32 %v650, 16
    %v675 = vand.u32 %v645, 65535
    %v676 = vshrl.u32 %v645, 16
    %v677 = vmul.u32 %v673, %v675
    %v678 = vmul.u32 %v673, %v676
    %v679 = vmul.u32 %v674, %v675
    %v680 = vmul.u32 %v674, %v676
    %v681 = vshll.u32 %v678, 16
    %v682 = vshrl.u32 %v678, 16
    %v683 = vshll.u32 %v679, 16
    %v684 = vshrl.u32 %v679, 16
    %vm685 = vc.u32 %v677, %v681
    %v686 = vsel %vm685, 1, 0
    %v687 = vadd.s32 %v677, %v681
    %v688 = vadd.s32 %v680, %v686
    %vm689 = vc.u32 %v687, %v683
    %v690 = vsel %vm689, 1, 0
    %v691 = vadd.s32 %v687, %v683
    %v692 = vadd.s32 %v688, %v690
    %v693 = vadd.s32 %v692, %v682
    %v694 = vadd.s32 %v693, %v684
    %v695 = vmul.u32 %v650, %v641
    %v696 = vadd.s32 %v672, %v691
    %vm697 = vc.u32 %v672, %v691
    %v698 = vadd.s32 %v694, 1
    %v699 = vsel %vm697, %v698, %v694
    %v700 = vadd.s32 %v695, %v699
    %v701 = vadd.s32 %v700, 536870912
    %v702 = vshrl.u32 %v701, 30
    %v703 = vshll.u32 %v702, 30
    %v704 = vsub.s32 %v700, %v703
    %vm705 = vcmp.lt.s32.totalorder %v704, 0
    %v706 = vsub.s32 0, %v704
    %v707 = vsel %vm705, %v706, %v704
    %v708 = vclz %v707
    %v709 = vsub.s32 %v708, 2
    %vm710 = vcmp.gt.s32.totalorder 0, %v709
    %v711 = vsel %vm710, 0, %v709
    %v712 = vsub.s32 32, %v711
    %v713 = vshll.u32 %v704, %v711
    %v714 = vshrl.u32 %v696, %v712
    %v715 = vor.u32 %v713, %v714
    %v716 = vsub.s32 4294967266, %v711
    %v717 = vadd.s32 %v716, 127
    %v718 = vshll.u32 %v717, 23
    %v719 = vor.u32 4788187, %v718
    %v720 = vand.u32 2147483647, %v719
    %v722 = vcvt.s32.f32 %v715
    %v723 = vmul.f32 %v722, %v720
    %v724 = vxor.u32 %v723, 2147483648
    %v725 = vsel %vm604, %v724, %v723
    %v726 = vsub.s32 4, %v702
    %v727 = vsel %vm604, %v726, %v702
    %v728 = vsel %vm603, %v136, %v725
    %v729 = vsel %vm603, 0, %v727
    %v730 = vmul.f32 %v728, %v728
    %v731 = vmul.f32 %v730, -0.001358992
    %v732 = vadd.f32 %v731, 0.041655596
    %v733 = vmul.f32 %v730, %v732
    %v734 = vadd.f32 %v733, -0.4999988
    %v735 = vmul.f32 %v730, %v734
    %v736 = vadd.f32 1.0, %v735
    %v737 = vmul.f32 %v728, %v728
    %v738 = vmul.f32 %v737, -0.00019511016
    %v739 = vadd.f32 %v738, 0.008332121
    %v740 = vmul.f32 %v737, %v739
    %v741 = vadd.f32 %v740, -0.16666654
    %v742 = vmul.f32 %v737, %v741
    %v743 = vadd.f32 %v742, 1.0
    %v744 = vmul.f32 %v743, %v728
    %vm745 = vweird.f32 %v136
    %v746 = vadd.s32 %v729, 3
    %v747 = vand.u32 %v746, 3
    %vm748 = vcmp.lt.s32.totalorder %v747, 2
    %vm749 = vcmp.eq.s32.totalorder %v747, 0
    %v750 = vxor.u32 %v744, 2147483648
    %v751 = vsel %vm749, %v736, %v750
    %vm752 = vcmp.eq.s32.totalorder %v747, 2
    %v753 = vxor.u32 %v736, 2147483648
    %v754 = vsel %vm752, %v753, %v744
    %v755 = vsel %vm748, %v751, %v754
    %v756 = vsel %vm745, nan, %v755
    %v757 = vadd.f32 %v291, 0.0
    %v758 = vadd.f32 %v446, 0.0
    %v759 = vadd.f32 %v601, 0.0
    %v760 = vadd.f32 %v756, 0.0
    %v761 = vand.u32 2147483647, %v133
    %vm762 = vcmp.le.f32.partialorder %v761, 0.7853982
    %vm763 = vcmp.lt.s32.totalorder %v133, 0
    %v764 = vand.u32 %v133, 2139095040
    %v765 = vshrl.u32 %v764, 23
    %v766 = vsub.s32 %v765, 127
    %v767 = vand.u32 2147483647, %v133
    %v768 = vand.u32 %v767, 8388607
    %v769 = vor.u32 %v768, 8388608
    %v770 = vsub.s32 0, %v769
    %v771 = vadd.s32 %v766, 1
    %vm772 = vcmp.gt.s32.totalorder %v771, 0
    %v773 = vsel %vm772, %v771, 0
    %v774 = vshrl.u32 %v773, 5
    %v775 = vand.u32 %v773, 31
    %v776 = vsub.s32 32, %v775
    %v777 = vshrl.u32 683565275, %v776
    %v778 = vshll.u32 683565275, %v775
    %v779 = vshrl.u32 2475754826, %v776
    %v780 = vor.u32 %v778, %v779
    %v781 = vshll.u32 2475754826, %v775
    %v782 = vshrl.u32 2131351028, %v776
    %v783 = vor.u32 %v781, %v782
    %v784 = vshll.u32 2131351028, %v775
    %v785 = vshrl.u32 2102212464, %v776
    %v786 = vor.u32 %v784, %v785
    %v787 = vshll.u32 2102212464, %v775
    %v788 = vshrl.u32 920167782, %v776
    %v789 = vor.u32 %v787, %v788
    %v790 = vshll.u32 920167782, %v775
    %v791 = vshrl.u32 1326507024, %v776
    %v792 = vor.u32 %v790, %v791
    %vm793 = vcmp.lt.s32.totalorder %v774, 1
    %vm794 = vcmp.lt.s32.totalorder %v774, 2
    %vm795 = vcmp.lt.s32.totalorder %v774, 3
    %vm796 = vcmp.lt.s32.totalorder %v774, 4
    %v797 = vsel %vm793, %v777, %v780
    %v798 = vsel %vm796, %v786, 2102212464
    %v799 = vsel %vm795, %v783, %v798
    %v800 = vsel %vm794, %v797, %v799
    %v801 = vsel %vm793, %v780, %v783
    %v802 = vsel %vm796, %v789, 920167782
    %v803 = vsel %vm795, %v786, %v802
    %v804 = vsel %vm794, %v801, %v803
    %v805 = vsel %vm793, %v783, %v786
    %v806 = vsel %vm796, %v792, 1326507024
    %v807 = vsel %vm795, %v789, %v806
    %v808 = vsel %vm794, %v805, %v807
    %v809 = vshll.u32 %v769, 8
    %v810 = vand.u32 %v809, 65535
    %v811 = vshrl.u32 %v809, 16
    %v812 = vand.u32 %v808, 65535
    %v813 = vshrl.u32 %v808, 16
    %v814 = vmul.u32 %v810, %v812
    %v815 = vmul.u32 %v810, %v813
    %v816 = vmul.u32 %v811, %v812
    %v817 = vmul.u32 %v811, %v813
    %v818 = vshll.u32 %v815, 16
    %v819 = vshrl.u32 %v815, 16
    %v820 = vshll.u32 %v816, 16
    %v821 = vshrl.u32 %v816, 16
    %vm822 = vc.u32 %v814, %v818
    %v823 = vsel %vm822, 1, 0
    %v824 = vadd.s32 %v814, %v818
    %v825 = vadd.s32 %v817, %v823
    %vm826 = vc.u32 %v824, %v820
    %v827 = vsel %vm826, 1, 0
    %v828 = vadd.s32 %v824, %v820
    %v829 = vadd.s32 %v825, %v827
    %v830 = vadd.s32 %v829, %v819
    %v831 = vadd.s32 %v830, %v821
    %v832 = vand.u32 %v809, 65535
    %v833 = vshrl.u32 %v809, 16
    %v834 = vand.u32 %v804, 65535
    %v835 = vshrl.u32 %v804, 16
    %v836 = vmul.u32 %v832, %v834
    %v837 = vmul.u32 %v832, %v835
    %v838 = vmul.u32 %v833, %v834
    %v839 = vmul.u32 %v833, %v835
    %v840 = vshll.u32 %v837, 16
    %v841 = vshrl.u32 %v837, 16
    %v842 = vshll.u32 %v838, 16
    %v843 = vshrl.u32 %v838, 16
    %vm844 = vc.u32 %v836, %v840
    %v845 = vsel %vm844, 1, 0
    %v846 = vadd.s32 %v836, %v840
    %v847 = vadd.s32 %v839, %v845
    %vm848 = vc.u32 %v846, %v842
    %v849 = vsel %vm848, 1, 0
    %v850 = vadd.s32 %v846, %v842
    %v851 = vadd.s32 %v847, %v849
    %v852 = vadd.s32 %v851, %v841
    %v853 = vadd.s32 %v852, %v843
    %v854 = vmul.u32 %v809, %v800
    %v855 = vadd.s32 %v831, %v850
    %vm856 = vc.u32 %v831, %v850
    %v857 = vadd.s32 %v853, 1
    %v858 = vsel %vm856, %v857, %v853
    %v859 = vadd.s32 %v854, %v858
    %v860 = vadd.s32 %v859, 536870912
    %v861 = vshrl.u32 %v860, 30
    %v862 = vshll.u32 %v861, 30
    %v863 = vsub.s32 %v859, %v862
    %vm864 = vcmp.lt.s32.totalorder %v863, 0
    %v865 = vsub.s32 0, %v863
    %v866 = vsel %vm864, %v865, %v863
    %v867 = vclz %v866
    %v868 = vsub.s32 %v867, 2
    %vm869 = vcmp.gt.s32.totalorder 0, %v868
    %v870 = vsel %vm869, 0, %v868
    %v871 = vsub.s32 32, %v870
    %v872 = vshll.u32 %v863, %v870
    %v873 = vshrl.u32 %v855, %v871
    %v874 = vor.u32 %v872, %v873
    %v875 = vsub.s32 4294967266, %v870
    %v876 = vadd.s32 %v875, 127
    %v877 = vshll.u32 %v876, 23
    %v878 = vor.u32 4788187, %v877
    %v879 = vand.u32 2147483647, %v878
    %v881 = vcvt.s32.f32 %v874
    %v882 = vmul.f32 %v881, %v879
    %v883 = vxor.u32 %v882, 2147483648
    %v884 = vsel %vm763, %v883, %v882
    %v885 = vsub.s32 4, %v861
    %v886 = vsel %vm763, %v885, %v861
    %v887 = vsel %vm762, %v133, %v884
    %v888 = vsel %vm762, 0, %v886
    %v889 = vmul.f32 %v887, %v887
    %v890 = vmul.f32 %v889, -0.001358992
    %v891 = vadd.f32 %v890, 0.041655596
    %v892 = vmul.f32 %v889, %v891
    %v893 = vadd.f32 %v892, -0.4999988
    %v894 = vmul.f32 %v889, %v893
    %v895 = vadd.f32 1.0, %v894
    %v896 = vmul.f32 %v887, %v887
    %v897 = vmul.f32 %v896, -0.00019511016
    %v898 = vadd.f32 %v897, 0.008332121
    %v899 = vmul.f32 %v896, %v898
    %v900 = vadd.f32 %v899, -0.16666654
    %v901 = vmul.f32 %v896, %v900
    %v902 = vadd.f32 %v901, 1.0
    %v903 = vmul.f32 %v902, %v887
    %vm904 = vweird.f32 %v133
    %v905 = vand.u32 %v888, 3
    %vm906 = vcmp.lt.s32.totalorder %v905, 2
    %vm907 = vcmp.eq.s32.totalorder %v905, 0
    %v908 = vxor.u32 %v903, 2147483648
    %v909 = vsel %vm907, %v895, %v908
    %vm910 = vcmp.eq.s32.totalorder %v905, 2
    %v911 = vxor.u32 %v895, 2147483648
    %v912 = vsel %vm910, %v911, %v903
    %v913 = vsel %vm906, %v909, %v912
    %v914 = vsel %vm904, nan, %v913
    %v915 = vand.u32 2147483647, %v134
    %vm916 = vcmp.le.f32.partialorder %v915, 0.7853982
    %vm917 = vcmp.lt.s32.totalorder %v134, 0
    %v918 = vand.u32 %v134, 2139095040
    %v919 = vshrl.u32 %v918, 23
    %v920 = vsub.s32 %v919, 127
    %v921 = vand.u32 2147483647, %v134
    %v922 = vand.u32 %v921, 8388607
    %v923 = vor.u32 %v922, 8388608
    %v924 = vsub.s32 0, %v923
    %v925 = vadd.s32 %v920, 1
    %vm926 = vcmp.gt.s32.totalorder %v925, 0
    %v927 = vsel %vm926, %v925, 0
    %v928 = vshrl.u32 %v927, 5
    %v929 = vand.u32 %v927, 31
    %v930 = vsub.s32 32, %v929
    %v931 = vshrl.u32 683565275, %v930
    %v932 = vshll.u32 683565275, %v929
    %v933 = vshrl.u32 2475754826, %v930
    %v934 = vor.u32 %v932, %v933
    %v935 = vshll.u32 2475754826, %v929
    %v936 = vshrl.u32 2131351028, %v930
    %v937 = vor.u32 %v935, %v936
    %v938 = vshll.u32 2131351028, %v929
    %v939 = vshrl.u32 2102212464, %v930
    %v940 = vor.u32 %v938, %v939
    %v941 = vshll.u32 2102212464, %v929
    %v942 = vshrl.u32 920167782, %v930
    %v943 = vor.u32 %v941, %v942
    %v944 = vshll.u32 920167782, %v929
    %v945 = vshrl.u32 1326507024, %v930
    %v946 = vor.u32 %v944, %v945
    %vm947 = vcmp.lt.s32.totalorder %v928, 1
    %vm948 = vcmp.lt.s32.totalorder %v928, 2
    %vm949 = vcmp.lt.s32.totalorder %v928, 3
    %vm950 = vcmp.lt.s32.totalorder %v928, 4
    %v951 = vsel %vm947, %v931, %v934
    %v952 = vsel %vm950, %v940, 2102212464
    %v953 = vsel %vm949, %v937, %v952
    %v954 = vsel %vm948, %v951, %v953
    %v955 = vsel %vm947, %v934, %v937
    %v956 = vsel %vm950, %v943, 920167782
    %v957 = vsel %vm949, %v940, %v956
    %v958 = vsel %vm948, %v955, %v957
    %v959 = vsel %vm947, %v937, %v940
    %v960 = vsel %vm950, %v946, 1326507024
    %v961 = vsel %vm949, %v943, %v960
    %v962 = vsel %vm948, %v959, %v961
    %v963 = vshll.u32 %v923, 8
    %v964 = vand.u32 %v963, 65535
    %v965 = vshrl.u32 %v963, 16
    %v966 = vand.u32 %v962, 65535
    %v967 = vshrl.u32 %v962, 16
    %v968 = vmul.u32 %v964, %v966
    %v969 = vmul.u32 %v964, %v967
    %v970 = vmul.u32 %v965, %v966
    %v971 = vmul.u32 %v965, %v967
    %v972 = vshll.u32 %v969, 16
    %v973 = vshrl.u32 %v969, 16
    %v974 = vshll.u32 %v970, 16
    %v975 = vshrl.u32 %v970, 16
    %vm976 = vc.u32 %v968, %v972
    %v977 = vsel %vm976, 1, 0
    %v978 = vadd.s32 %v968, %v972
    %v979 = vadd.s32 %v971, %v977
    %vm980 = vc.u32 %v978, %v974
    %v981 = vsel %vm980, 1, 0
    %v982 = vadd.s32 %v978, %v974
    %v983 = vadd.s32 %v979, %v981
    %v984 = vadd.s32 %v983, %v973
    %v985 = vadd.s32 %v984, %v975
    %v986 = vand.u32 %v963, 65535
    %v987 = vshrl.u32 %v963, 16
    %v988 = vand.u32 %v958, 65535
    %v989 = vshrl.u32 %v958, 16
    %v990 = vmul.u32 %v986, %v988
    %v991 = vmul.u32 %v986, %v989
    %v992 = vmul.u32 %v987, %v988
    %v993 = vmul.u32 %v987, %v989
    %v994 = vshll.u32 %v991, 16
    %v995 = vshrl.u32 %v991, 16
    %v996 = vshll.u32 %v992, 16
    %v997 = vshrl.u32 %v992, 16
    %vm998 = vc.u32 %v990, %v994
    %v999 = vsel %vm998, 1, 0
    %v1000 = vadd.s32 %v990, %v994
    %v1001 = vadd.s32 %v993, %v999
    %vm1002 = vc.u32 %v1000, %v996
    %v1003 = vsel %vm1002, 1, 0
    %v1004 = vadd.s32 %v1000, %v996
    %v1005 = vadd.s32 %v1001, %v1003
    %v1006 = vadd.s32 %v1005, %v995
    %v1007 = vadd.s32 %v1006, %v997
    %v1008 = vmul.u32 %v963, %v954
    %v1009 = vadd.s32 %v985, %v1004
    %vm1010 = vc.u32 %v985, %v1004
    %v1011 = vadd.s32 %v1007, 1
    %v1012 = vsel %vm1010, %v1011, %v1007
    %v1013 = vadd.s32 %v1008, %v1012
    %v1014 = vadd.s32 %v1013, 536870912
    %v1015 = vshrl.u32 %v1014, 30
    %v1016 = vshll.u32 %v1015, 30
    %v1017 = vsub.s32 %v1013, %v1016
    %vm1018 = vcmp.lt.s32.totalorder %v1017, 0
    %v1019 = vsub.s32 0, %v1017
    %v1020 = vsel %vm1018, %v1019, %v1017
    %v1021 = vclz %v1020
    %v1022 = vsub.s32 %v1021, 2
    %vm1023 = vcmp.gt.s32.totalorder 0, %v1022
    %v1024 = vsel %vm1023, 0, %v1022
    %v1025 = vsub.s32 32, %v1024
    %v1026 = vshll.u32 %v1017, %v1024
    %v1027 = vshrl.u32 %v1009, %v1025
    %v1028 = vor.u32 %v1026, %v1027
    %v1029 = vsub.s32 4294967266, %v1024
    %v1030 = vadd.s32 %v1029, 127
    %v1031 = vshll.u32 %v1030, 23
    %v1032 = vor.u32 4788187, %v1031
    %v1033 = vand.u32 2147483647, %v1032
    %v1035 = vcvt.s32.f32 %v1028
    %v1036 = vmul.f32 %v1035, %v1033
    %v1037 = vxor.u32 %v1036, 2147483648
    %v1038 = vsel %vm917, %v1037, %v1036
    %v1039 = vsub.s32 4, %v1015
    %v1040 = vsel %vm917, %v1039, %v1015
    %v1041 = vsel %vm916, %v134, %v1038
    %v1042 = vsel %vm916, 0, %v1040
    %v1043 = vmul.f32 %v1041, %v1041
    %v1044 = vmul.f32 %v1043, -0.001358992
    %v1045 = vadd.f32 %v1044, 0.041655596
    %v1046 = vmul.f32 %v1043, %v1045
    %v1047 = vadd.f32 %v1046, -0.4999988
    %v1048 = vmul.f32 %v1043, %v1047
    %v1049 = vadd.f32 1.0, %v1048
    %v1050 = vmul.f32 %v1041, %v1041
    %v1051 = vmul.f32 %v1050, -0.00019511016
    %v1052 = vadd.f32 %v1051, 0.008332121
    %v1053 = vmul.f32 %v1050, %v1052
    %v1054 = vadd.f32 %v1053, -0.16666654
    %v1055 = vmul.f32 %v1050, %v1054
    %v1056 = vadd.f32 %v1055, 1.0
    %v1057 = vmul.f32 %v1056, %v1041
    %vm1058 = vweird.f32 %v134
    %v1059 = vand.u32 %v1042, 3
    %vm1060 = vcmp.lt.s32.totalorder %v1059, 2
    %vm1061 = vcmp.eq.s32.totalorder %v1059, 0
    %v1062 = vxor.u32 %v1057, 2147483648
    %v1063 = vsel %vm1061, %v1049, %v1062
    %vm1064 = vcmp.eq.s32.totalorder %v1059, 2
    %v1065 = vxor.u32 %v1049, 2147483648
    %v1066 = vsel %vm1064, %v1065, %v1057
    %v1067 = vsel %vm1060, %v1063, %v1066
    %v1068 = vsel %vm1058, nan, %v1067
    %v1069 = vand.u32 2147483647, %v135
    %vm1070 = vcmp.le.f32.partialorder %v1069, 0.7853982
    %vm1071 = vcmp.lt.s32.totalorder %v135, 0
    %v1072 = vand.u32 %v135, 2139095040
    %v1073 = vshrl.u32 %v1072, 23
    %v1074 = vsub.s32 %v1073, 127
    %v1075 = vand.u32 2147483647, %v135
    %v1076 = vand.u32 %v1075, 8388607
    %v1077 = vor.u32 %v1076, 8388608
    %v1078 = vsub.s32 0, %v1077
    %v1079 = vadd.s32 %v1074, 1
    %vm1080 = vcmp.gt.s32.totalorder %v1079, 0
    %v1081 = vsel %vm1080, %v1079, 0
    %v1082 = vshrl.u32 %v1081, 5
    %v1083 = vand.u32 %v1081, 31
    %v1084 = vsub.s32 32, %v1083
    %v1085 = vshrl.u32 683565275, %v1084
    %v1086 = vshll.u32 683565275, %v1083
    %v1087 = vshrl.u32 2475754826, %v1084
    %v1088 = vor.u32 %v1086, %v1087
    %v1089 = vshll.u32 2475754826, %v1083
    %v1090 = vshrl.u32 2131351028, %v1084
    %v1091 = vor.u32 %v1089, %v1090
    %v1092 = vshll.u32 2131351028, %v1083
    %v1093 = vshrl.u32 2102212464, %v1084
    %v1094 = vor.u32 %v1092, %v1093
    %v1095 = vshll.u32 2102212464, %v1083
    %v1096 = vshrl.u32 920167782, %v1084
    %v1097 = vor.u32 %v1095, %v1096
    %v1098 = vshll.u32 920167782, %v1083
    %v1099 = vshrl.u32 1326507024, %v1084
    %v1100 = vor.u32 %v1098, %v1099
    %vm1101 = vcmp.lt.s32.totalorder %v1082, 1
    %vm1102 = vcmp.lt.s32.totalorder %v1082, 2
    %vm1103 = vcmp.lt.s32.totalorder %v1082, 3
    %vm1104 = vcmp.lt.s32.totalorder %v1082, 4
    %v1105 = vsel %vm1101, %v1085, %v1088
    %v1106 = vsel %vm1104, %v1094, 2102212464
    %v1107 = vsel %vm1103, %v1091, %v1106
    %v1108 = vsel %vm1102, %v1105, %v1107
    %v1109 = vsel %vm1101, %v1088, %v1091
    %v1110 = vsel %vm1104, %v1097, 920167782
    %v1111 = vsel %vm1103, %v1094, %v1110
    %v1112 = vsel %vm1102, %v1109, %v1111
    %v1113 = vsel %vm1101, %v1091, %v1094
    %v1114 = vsel %vm1104, %v1100, 1326507024
    %v1115 = vsel %vm1103, %v1097, %v1114
    %v1116 = vsel %vm1102, %v1113, %v1115
    %v1117 = vshll.u32 %v1077, 8
    %v1118 = vand.u32 %v1117, 65535
    %v1119 = vshrl.u32 %v1117, 16
    %v1120 = vand.u32 %v1116, 65535
    %v1121 = vshrl.u32 %v1116, 16
    %v1122 = vmul.u32 %v1118, %v1120
    %v1123 = vmul.u32 %v1118, %v1121
    %v1124 = vmul.u32 %v1119, %v1120
    %v1125 = vmul.u32 %v1119, %v1121
    %v1126 = vshll.u32 %v1123, 16
    %v1127 = vshrl.u32 %v1123, 16
    %v1128 = vshll.u32 %v1124, 16
    %v1129 = vshrl.u32 %v1124, 16
    %vm1130 = vc.u32 %v1122, %v1126
    %v1131 = vsel %vm1130, 1, 0
    %v1132 = vadd.s32 %v1122, %v1126
    %v1133 = vadd.s32 %v1125, %v1131
    %vm1134 = vc.u32 %v1132, %v1128
    %v1135 = vsel %vm1134, 1, 0
    %v1136 = vadd.s32 %v1132, %v1128
    %v1137 = vadd.s32 %v1133, %v1135
    %v1138 = vadd.s32 %v1137, %v1127
    %v1139 = vadd.s32 %v1138, %v1129
    %v1140 = vand.u32 %v1117, 65535
    %v1141 = vshrl.u32 %v1117, 16
    %v1142 = vand.u32 %v1112, 65535
    %v1143 = vshrl.u32 %v1112, 16
    %v1144 = vmul.u32 %v1140, %v1142
    %v1145 = vmul.u32 %v1140, %v1143
    %v1146 = vmul.u32 %v1141, %v1142
    %v1147 = vmul.u32 %v1141, %v1143
    %v1148 = vshll.u32 %v1145, 16
    %v1149 = vshrl.u32 %v1145, 16
    %v1150 = vshll.u32 %v1146, 16
    %v1151 = vshrl.u32 %v1146, 16
    %vm1152 = vc.u32 %v1144, %v1148
    %v1153 = vsel %vm1152, 1, 0
    %v1154 = vadd.s32 %v1144, %v1148
    %v1155 = vadd.s32 %v1147, %v1153
    %vm1156 = vc.u32 %v1154, %v1150
    %v1157 = vsel %vm1156, 1, 0
    %v1158 = vadd.s32 %v1154, %v1150
    %v1159 = vadd.s32 %v1155, %v1157
    %v1160 = vadd.s32 %v1159, %v1149
    %v1161 = vadd.s32 %v1160, %v1151
    %v1162 = vmul.u32 %v1117, %v1108
    %v1163 = vadd.s32 %v1139, %v1158
    %vm1164 = vc.u32 %v1139, %v1158
    %v1165 = vadd.s32 %v1161, 1
    %v1166 = vsel %vm1164, %v1165, %v1161
    %v1167 = vadd.s32 %v1162, %v1166
    %v1168 = vadd.s32 %v1167, 536870912
    %v1169 = vshrl.u32 %v1168, 30
    %v1170 = vshll.u32 %v1169, 30
    %v1171 = vsub.s32 %v1167, %v1170
    %vm1172 = vcmp.lt.s32.totalorder %v1171, 0
    %v1173 = vsub.s32 0, %v1171
    %v1174 = vsel %vm1172, %v1173, %v1171
    %v1175 = vclz %v1174
    %v1176 = vsub.s32 %v1175, 2
    %vm1177 = vcmp.gt.s32.totalorder 0, %v1176
    %v1178 = vsel %vm1177, 0, %v1176
    %v1179 = vsub.s32 32, %v1178
    %v1180 = vshll.u32 %v1171, %v1178
    %v1181 = vshrl.u32 %v1163, %v1179
    %v1182 = vor.u32 %v1180, %v1181
    %v1183 = vsub.s32 4294967266, %v1178
    %v1184 = vadd.s32 %v1183, 127
    %v1185 = vshll.u32 %v1184, 23
    %v1186 = vor.u32 4788187, %v1185
    %v1187 = vand.u32 2147483647, %v1186
    %v1189 = vcvt.s32.f32 %v1182
    %v1190 = vmul.f32 %v1189, %v1187
    %v1191 = vxor.u32 %v1190, 2147483648
    %v1192 = vsel %vm1071, %v1191, %v1190
    %v1193 = vsub.s32 4, %v1169
    %v1194 = vsel %vm1071, %v1193, %v1169
    %v1195 = vsel %vm1070, %v135, %v1192
    %v1196 = vsel %vm1070, 0, %v1194
    %v1197 = vmul.f32 %v1195, %v1195
    %v1198 = vmul.f32 %v1197, -0.001358992
    %v1199 = vadd.f32 %v1198, 0.041655596
    %v1200 = vmul.f32 %v1197, %v1199
    %v1201 = vadd.f32 %v1200, -0.4999988
    %v1202 = vmul.f32 %v1197, %v1201
    %v1203 = vadd.f32 1.0, %v1202
    %v1204 = vmul.f32 %v1195, %v1195
    %v1205 = vmul.f32 %v1204, -0.00019511016
    %v1206 = vadd.f32 %v1205, 0.008332121
    %v1207 = vmul.f32 %v1204, %v1206
    %v1208 = vadd.f32 %v1207, -0.16666654
    %v1209 = vmul.f32 %v1204, %v1208
    %v1210 = vadd.f32 %v1209, 1.0
    %v1211 = vmul.f32 %v1210, %v1195
    %vm1212 = vweird.f32 %v135
    %v1213 = vand.u32 %v1196, 3
    %vm1214 = vcmp.lt.s32.totalorder %v1213, 2
    %vm1215 = vcmp.eq.s32.totalorder %v1213, 0
    %v1216 = vxor.u32 %v1211, 2147483648
    %v1217 = vsel %vm1215, %v1203, %v1216
    %vm1218 = vcmp.eq.s32.totalorder %v1213, 2
    %v1219 = vxor.u32 %v1203, 2147483648
    %v1220 = vsel %vm1218, %v1219, %v1211
    %v1221 = vsel %vm1214, %v1217, %v1220
    %v1222 = vsel %vm1212, nan, %v1221
    %v1223 = vand.u32 2147483647, %v136
    %vm1224 = vcmp.le.f32.partialorder %v1223, 0.7853982
    %vm1225 = vcmp.lt.s32.totalorder %v136, 0
    %v1226 = vand.u32 %v136, 2139095040
    %v1227 = vshrl.u32 %v1226, 23
    %v1228 = vsub.s32 %v1227, 127
    %v1229 = vand.u32 2147483647, %v136
    %v1230 = vand.u32 %v1229, 8388607
    %v1231 = vor.u32 %v1230, 8388608
    %v1232 = vsub.s32 0, %v1231
    %v1233 = vadd.s32 %v1228, 1
    %vm1234 = vcmp.gt.s32.totalorder %v1233, 0
    %v1235 = vsel %vm1234, %v1233, 0
    %v1236 = vshrl.u32 %v1235, 5
    %v1237 = vand.u32 %v1235, 31
    %v1238 = vsub.s32 32, %v1237
    %v1239 = vshrl.u32 683565275, %v1238
    %v1240 = vshll.u32 683565275, %v1237
    %v1241 = vshrl.u32 2475754826, %v1238
    %v1242 = vor.u32 %v1240, %v1241
    %v1243 = vshll.u32 2475754826, %v1237
    %v1244 = vshrl.u32 2131351028, %v1238
    %v1245 = vor.u32 %v1243, %v1244
    %v1246 = vshll.u32 2131351028, %v1237
    %v1247 = vshrl.u32 2102212464, %v1238
    %v1248 = vor.u32 %v1246, %v1247
    %v1249 = vshll.u32 2102212464, %v1237
    %v1250 = vshrl.u32 920167782, %v1238
    %v1251 = vor.u32 %v1249, %v1250
    %v1252 = vshll.u32 920167782, %v1237
    %v1253 = vshrl.u32 1326507024, %v1238
    %v1254 = vor.u32 %v1252, %v1253
    %vm1255 = vcmp.lt.s32.totalorder %v1236, 1
    %vm1256 = vcmp.lt.s32.totalorder %v1236, 2
    %vm1257 = vcmp.lt.s32.totalorder %v1236, 3
    %vm1258 = vcmp.lt.s32.totalorder %v1236, 4
    %v1259 = vsel %vm1255, %v1239, %v1242
    %v1260 = vsel %vm1258, %v1248, 2102212464
    %v1261 = vsel %vm1257, %v1245, %v1260
    %v1262 = vsel %vm1256, %v1259, %v1261
    %v1263 = vsel %vm1255, %v1242, %v1245
    %v1264 = vsel %vm1258, %v1251, 920167782
    %v1265 = vsel %vm1257, %v1248, %v1264
    %v1266 = vsel %vm1256, %v1263, %v1265
    %v1267 = vsel %vm1255, %v1245, %v1248
    %v1268 = vsel %vm1258, %v1254, 1326507024
    %v1269 = vsel %vm1257, %v1251, %v1268
    %v1270 = vsel %vm1256, %v1267, %v1269
    %v1271 = vshll.u32 %v1231, 8
    %v1272 = vand.u32 %v1271, 65535
    %v1273 = vshrl.u32 %v1271, 16
    %v1274 = vand.u32 %v1270, 65535
    %v1275 = vshrl.u32 %v1270, 16
    %v1276 = vmul.u32 %v1272, %v1274
    %v1277 = vmul.u32 %v1272, %v1275
    %v1278 = vmul.u32 %v1273, %v1274
    %v1279 = vmul.u32 %v1273, %v1275
    %v1280 = vshll.u32 %v1277, 16
    %v1281 = vshrl.u32 %v1277, 16
    %v1282 = vshll.u32 %v1278, 16
    %v1283 = vshrl.u32 %v1278, 16
    %vm1284 = vc.u32 %v1276, %v1280
    %v1285 = vsel %vm1284, 1, 0
    %v1286 = vadd.s32 %v1276, %v1280
    %v1287 = vadd.s32 %v1279, %v1285
    %vm1288 = vc.u32 %v1286, %v1282
    %v1289 = vsel %vm1288, 1, 0
    %v1290 = vadd.s32 %v1286, %v1282
    %v1291 = vadd.s32 %v1287, %v1289
    %v1292 = vadd.s32 %v1291, %v1281
    %v1293 = vadd.s32 %v1292, %v1283
    %v1294 = vand.u32 %v1271, 65535
    %v1295 = vshrl.u32 %v1271, 16
    %v1296 = vand.u32 %v1266, 65535
    %v1297 = vshrl.u32 %v1266, 16
    %v1298 = vmul.u32 %v1294, %v1296
    %v1299 = vmul.u32 %v1294, %v1297
    %v1300 = vmul.u32 %v1295, %v1296
    %v1301 = vmul.u32 %v1295, %v1297
    %v1302 = vshll.u32 %v1299, 16
    %v1303 = vshrl.u32 %v1299, 16
    %v1304 = vshll.u32 %v1300, 16
    %v1305 = vshrl.u32 %v1300, 16
    %vm1306 = vc.u32 %v1298, %v1302
    %v1307 = vsel %vm1306, 1, 0
    %v1308 = vadd.s32 %v1298, %v1302
    %v1309 = vadd.s32 %v1301, %v1307
    %vm1310 = vc.u32 %v1308, %v1304
    %v1311 = vsel %vm1310, 1, 0
    %v1312 = vadd.s32 %v1308, %v1304
    %v1313 = vadd.s32 %v1309, %v1311
    %v1314 = vadd.s32 %v1313, %v1303
    %v1315 = vadd.s32 %v1314, %v1305
    %v1316 = vmul.u32 %v1271, %v1262
    %v1317 = vadd.s32 %v1293, %v1312
    %vm1318 = vc.u32 %v1293, %v1312
    %v1319 = vadd.s32 %v1315, 1
    %v1320 = vsel %vm1318, %v1319, %v1315
    %v1321 = vadd.s32 %v1316, %v1320
    %v1322 = vadd.s32 %v1321, 536870912
    %v1323 = vshrl.u32 %v1322, 30
    %v1324 = vshll.u32 %v1323, 30
    %v1325 = vsub.s32 %v1321, %v1324
    %vm1326 = vcmp.lt.s32.totalorder %v1325, 0
    %v1327 = vsub.s32 0, %v1325
    %v1328 = vsel %vm1326, %v1327, %v1325
    %v1329 = vclz %v1328
    %v1330 = vsub.s32 %v1329, 2
    %vm1331 = vcmp.gt.s32.totalorder 0, %v1330
    %v1332 = vsel %vm1331, 0, %v1330
    %v1333 = vsub.s32 32, %v1332
    %v1334 = vshll.u32 %v1325, %v1332
    %v1335 = vshrl.u32 %v1317, %v1333
    %v1336 = vor.u32 %v1334, %v1335
    %v1337 = vsub.s32 4294967266, %v1332
    %v1338 = vadd.s32 %v1337, 127
    %v1339 = vshll.u32 %v1338, 23
    %v1340 = vor.u32 4788187, %v1339
    %v1341 = vand.u32 2147483647, %v1340
    %v1343 = vcvt.s32.f32 %v1336
    %v1344 = vmul.f32 %v1343, %v1341
    %v1345 = vxor.u32 %v1344, 2147483648
    %v1346 = vsel %vm1225, %v1345, %v1344
    %v1347 = vsub.s32 4, %v1323
    %v1348 = vsel %vm1225, %v1347, %v1323
    %v1349 = vsel %vm1224, %v136, %v1346
    %v1350 = vsel %vm1224, 0, %v1348
    %v1351 = vmul.f32 %v1349, %v1349
    %v1352 = vmul.f32 %v1351, -0.001358992
    %v1353 = vadd.f32 %v1352, 0.041655596
    %v1354 = vmul.f32 %v1351, %v1353
    %v1355 = vadd.f32 %v1354, -0.4999988
    %v1356 = vmul.f32 %v1351, %v1355
    %v1357 = vadd.f32 1.0, %v1356
    %v1358 = vmul.f32 %v1349, %v1349
    %v1359 = vmul.f32 %v1358, -0.00019511016
    %v1360 = vadd.f32 %v1359, 0.008332121
    %v1361 = vmul.f32 %v1358, %v1360
    %v1362 = vadd.f32 %v1361, -0.16666654
    %v1363 = vmul.f32 %v1358, %v1362
    %v1364 = vadd.f32 %v1363, 1.0
    %v1365 = vmul.f32 %v1364, %v1349
    %vm1366 = vweird.f32 %v136
    %v1367 = vand.u32 %v1350, 3
    %vm1368 = vcmp.lt.s32.totalorder %v1367, 2
    %vm1369 = vcmp.eq.s32.totalorder %v1367, 0
    %v1370 = vxor.u32 %v1365, 2147483648
    %v1371 = vsel %vm1369, %v1357, %v1370
    %vm1372 = vcmp.eq.s32.totalorder %v1367, 2
    %v1373 = vxor.u32 %v1357, 2147483648
    %v1374 = vsel %vm1372, %v1373, %v1365
    %v1375 = vsel %vm1368, %v1371, %v1374
    %v1376 = vsel %vm1366, nan, %v1375
    %v1377 = vadd.f32 %v914, 0.0
    %v1378 = vadd.f32 %v1068, 0.0
    %v1379 = vadd.f32 %v1222, 0.0
    %v1380 = vadd.f32 %v1376, 0.0
    %s1381 = scalar_lea.vmem [#allocation5], 2
    %v1382 = vld [vmem:[%s1381] sm:$0x3]
    %v1383 = vperm.slane %v1382, 0
    %v1384 = vlaneseq
    %v1385 = vshrl.u32 %v1384, 7
    %1387 = vset.pattern.permute.xlu0 %v1385
    %1388 = vperm.xlu0 %1387, %v1383
    %v1389 = vpop.permute.xlu0 %1388
    %v1390 = vperm.slane %v1382, 1
    %v1391 = vlaneseq
    %v1392 = vshrl.u32 %v1391, 7
    %1394 = vset.pattern.permute.xlu0 %v1392
    %1395 = vperm.xlu0 %1394, %v1390
    %v1396 = vpop.permute.xlu0 %1395
    %v1397 = vmul.f32 %v1389, %v59
    %v1398 = vmul.f32 %v1396, %v59
    %v1399 = vrot.slane %v1397, 4
    %v1400 = vsel %vm64, 0.0, %v1399
    %v1402 = vunpack.c.l.s4 1983009808
    %v1403 = vunpack.c.0.s8 %v1402
    %v1404 = vperm.slane %v1397, %v1403
    %v1406 = vunpack.c.l.s4 1983009808
    %v1407 = vunpack.c.0.s8 %v1406
    %v1408 = vperm.slane %v1400, %v1407
    %v1409 = vrot.slane %v1398, 4
    %v1410 = vsel %vm64, 0.0, %v1409
    %v1412 = vunpack.c.l.s4 1983009808
    %v1413 = vunpack.c.0.s8 %v1412
    %v1414 = vperm.slane %v1398, %v1413
    %v1416 = vunpack.c.l.s4 1983009808
    %v1417 = vunpack.c.0.s8 %v1416
    %v1418 = vperm.slane %v1410, %v1417
    %v1419 = vrot.slane %v1414, 4
    %v1420 = vsel %vm64, %v1419, %v1404
    %v1421 = vrot.slane %v1404, 4
    %v1422 = vsel %vm64, %v1414, %v1421
    %v1424 = vunpack.c.l.s4 1934713408
    %v1425 = vunpack.c.0.s8 %v1424
    %v1426 = vperm.slane %v1420, %v1425
    %v1428 = vunpack.c.l.s4 1934713408
    %v1429 = vunpack.c.0.s8 %v1428
    %v1430 = vperm.slane %v1422, %v1429
    %v1431 = vrot.slane %v1418, 4
    %v1432 = vsel %vm64, %v1431, %v1408
    %v1433 = vrot.slane %v1408, 4
    %v1434 = vsel %vm64, %v1418, %v1433
    %v1436 = vunpack.c.l.s4 1934713408
    %v1437 = vunpack.c.0.s8 %v1436
    %v1438 = vperm.slane %v1432, %v1437
    %v1440 = vunpack.c.l.s4 1934713408
    %v1441 = vunpack.c.0.s8 %v1440
    %v1442 = vperm.slane %v1434, %v1441
    %v1443 = vrot.slane %v1426, 4
    %v1444 = vsel %vm64, 0.0, %v1443
    %v1445 = vrot.slane %v1430, 4
    %v1446 = vsel %vm64, 0.0, %v1445
    %v1447 = vrot.slane %v1438, 4
    %v1448 = vsel %vm64, 0.0, %v1447
    %v1449 = vrot.slane %v1442, 4
    %v1450 = vsel %vm64, 0.0, %v1449
    %1452 = vrot.lane.b32.xlu0 %v1444, 64
    %v1453 = vpop.permute.xlu0 %1452
    %1456 = vrot.lane.b32.xlu0 %v1446, 64
    %v1457 = vpop.permute.xlu0 %1456
    %1460 = vrot.lane.b32.xlu0 %v1448, 64
    %v1461 = vpop.permute.xlu0 %1460
    %1464 = vrot.lane.b32.xlu0 %v1450, 64
    %v1465 = vpop.permute.xlu0 %1464
    %v1467 = vsel %vm132, %v1426, %v1453
    %v1468 = vsel %vm132, %v1430, %v1457
    %v1469 = vsel %vm132, %v1438, %v1461
    %v1470 = vsel %vm132, %v1442, %v1465
    %v1471 = vand.u32 2147483647, %v1467
    %vm1472 = vcmp.le.f32.partialorder %v1471, 0.7853982
    %vm1473 = vcmp.lt.s32.totalorder %v1467, 0
    %v1474 = vand.u32 %v1467, 2139095040
    %v1475 = vshrl.u32 %v1474, 23
    %v1476 = vsub.s32 %v1475, 127
    %v1477 = vand.u32 2147483647, %v1467
    %v1478 = vand.u32 %v1477, 8388607
    %v1479 = vor.u32 %v1478, 8388608
    %v1480 = vsub.s32 0, %v1479
    %v1481 = vadd.s32 %v1476, 1
    %vm1482 = vcmp.gt.s32.totalorder %v1481, 0
    %v1483 = vsel %vm1482, %v1481, 0
    %v1484 = vshrl.u32 %v1483, 5
    %v1485 = vand.u32 %v1483, 31
    %v1486 = vsub.s32 32, %v1485
    %v1487 = vshrl.u32 683565275, %v1486
    %v1488 = vshll.u32 683565275, %v1485
    %v1489 = vshrl.u32 2475754826, %v1486
    %v1490 = vor.u32 %v1488, %v1489
    %v1491 = vshll.u32 2475754826, %v1485
    %v1492 = vshrl.u32 2131351028, %v1486
    %v1493 = vor.u32 %v1491, %v1492
    %v1494 = vshll.u32 2131351028, %v1485
    %v1495 = vshrl.u32 2102212464, %v1486
    %v1496 = vor.u32 %v1494, %v1495
    %v1497 = vshll.u32 2102212464, %v1485
    %v1498 = vshrl.u32 920167782, %v1486
    %v1499 = vor.u32 %v1497, %v1498
    %v1500 = vshll.u32 920167782, %v1485
    %v1501 = vshrl.u32 1326507024, %v1486
    %v1502 = vor.u32 %v1500, %v1501
    %vm1503 = vcmp.lt.s32.totalorder %v1484, 1
    %vm1504 = vcmp.lt.s32.totalorder %v1484, 2
    %vm1505 = vcmp.lt.s32.totalorder %v1484, 3
    %vm1506 = vcmp.lt.s32.totalorder %v1484, 4
    %v1507 = vsel %vm1503, %v1487, %v1490
    %v1508 = vsel %vm1506, %v1496, 2102212464
    %v1509 = vsel %vm1505, %v1493, %v1508
    %v1510 = vsel %vm1504, %v1507, %v1509
    %v1511 = vsel %vm1503, %v1490, %v1493
    %v1512 = vsel %vm1506, %v1499, 920167782
    %v1513 = vsel %vm1505, %v1496, %v1512
    %v1514 = vsel %vm1504, %v1511, %v1513
    %v1515 = vsel %vm1503, %v1493, %v1496
    %v1516 = vsel %vm1506, %v1502, 1326507024
    %v1517 = vsel %vm1505, %v1499, %v1516
    %v1518 = vsel %vm1504, %v1515, %v1517
    %v1519 = vshll.u32 %v1479, 8
    %v1520 = vand.u32 %v1519, 65535
    %v1521 = vshrl.u32 %v1519, 16
    %v1522 = vand.u32 %v1518, 65535
    %v1523 = vshrl.u32 %v1518, 16
    %v1524 = vmul.u32 %v1520, %v1522
    %v1525 = vmul.u32 %v1520, %v1523
    %v1526 = vmul.u32 %v1521, %v1522
    %v1527 = vmul.u32 %v1521, %v1523
    %v1528 = vshll.u32 %v1525, 16
    %v1529 = vshrl.u32 %v1525, 16
    %v1530 = vshll.u32 %v1526, 16
    %v1531 = vshrl.u32 %v1526, 16
    %vm1532 = vc.u32 %v1524, %v1528
    %v1533 = vsel %vm1532, 1, 0
    %v1534 = vadd.s32 %v1524, %v1528
    %v1535 = vadd.s32 %v1527, %v1533
    %vm1536 = vc.u32 %v1534, %v1530
    %v1537 = vsel %vm1536, 1, 0
    %v1538 = vadd.s32 %v1534, %v1530
    %v1539 = vadd.s32 %v1535, %v1537
    %v1540 = vadd.s32 %v1539, %v1529
    %v1541 = vadd.s32 %v1540, %v1531
    %v1542 = vand.u32 %v1519, 65535
    %v1543 = vshrl.u32 %v1519, 16
    %v1544 = vand.u32 %v1514, 65535
    %v1545 = vshrl.u32 %v1514, 16
    %v1546 = vmul.u32 %v1542, %v1544
    %v1547 = vmul.u32 %v1542, %v1545
    %v1548 = vmul.u32 %v1543, %v1544
    %v1549 = vmul.u32 %v1543, %v1545
    %v1550 = vshll.u32 %v1547, 16
    %v1551 = vshrl.u32 %v1547, 16
    %v1552 = vshll.u32 %v1548, 16
    %v1553 = vshrl.u32 %v1548, 16
    %vm1554 = vc.u32 %v1546, %v1550
    %v1555 = vsel %vm1554, 1, 0
    %v1556 = vadd.s32 %v1546, %v1550
    %v1557 = vadd.s32 %v1549, %v1555
    %vm1558 = vc.u32 %v1556, %v1552
    %v1559 = vsel %vm1558, 1, 0
    %v1560 = vadd.s32 %v1556, %v1552
    %v1561 = vadd.s32 %v1557, %v1559
    %v1562 = vadd.s32 %v1561, %v1551
    %v1563 = vadd.s32 %v1562, %v1553
    %v1564 = vmul.u32 %v1519, %v1510
    %v1565 = vadd.s32 %v1541, %v1560
    %vm1566 = vc.u32 %v1541, %v1560
    %v1567 = vadd.s32 %v1563, 1
    %v1568 = vsel %vm1566, %v1567, %v1563
    %v1569 = vadd.s32 %v1564, %v1568
    %v1570 = vadd.s32 %v1569, 536870912
    %v1571 = vshrl.u32 %v1570, 30
    %v1572 = vshll.u32 %v1571, 30
    %v1573 = vsub.s32 %v1569, %v1572
    %vm1574 = vcmp.lt.s32.totalorder %v1573, 0
    %v1575 = vsub.s32 0, %v1573
    %v1576 = vsel %vm1574, %v1575, %v1573
    %v1577 = vclz %v1576
    %v1578 = vsub.s32 %v1577, 2
    %vm1579 = vcmp.gt.s32.totalorder 0, %v1578
    %v1580 = vsel %vm1579, 0, %v1578
    %v1581 = vsub.s32 32, %v1580
    %v1582 = vshll.u32 %v1573, %v1580
    %v1583 = vshrl.u32 %v1565, %v1581
    %v1584 = vor.u32 %v1582, %v1583
    %v1585 = vsub.s32 4294967266, %v1580
    %v1586 = vadd.s32 %v1585, 127
    %v1587 = vshll.u32 %v1586, 23
    %v1588 = vor.u32 4788187, %v1587
    %v1589 = vand.u32 2147483647, %v1588
    %v1591 = vcvt.s32.f32 %v1584
    %v1592 = vmul.f32 %v1591, %v1589
    %v1593 = vxor.u32 %v1592, 2147483648
    %v1594 = vsel %vm1473, %v1593, %v1592
    %v1595 = vsub.s32 4, %v1571
    %v1596 = vsel %vm1473, %v1595, %v1571
    %v1597 = vsel %vm1472, %v1467, %v1594
    %v1598 = vsel %vm1472, 0, %v1596
    %v1599 = vmul.f32 %v1597, %v1597
    %v1600 = vmul.f32 %v1599, -0.001358992
    %v1601 = vadd.f32 %v1600, 0.041655596
    %v1602 = vmul.f32 %v1599, %v1601
    %v1603 = vadd.f32 %v1602, -0.4999988
    %v1604 = vmul.f32 %v1599, %v1603
    %v1605 = vadd.f32 1.0, %v1604
    %v1606 = vmul.f32 %v1597, %v1597
    %v1607 = vmul.f32 %v1606, -0.00019511016
    %v1608 = vadd.f32 %v1607, 0.008332121
    %v1609 = vmul.f32 %v1606, %v1608
    %v1610 = vadd.f32 %v1609, -0.16666654
    %v1611 = vmul.f32 %v1606, %v1610
    %v1612 = vadd.f32 %v1611, 1.0
    %v1613 = vmul.f32 %v1612, %v1597
    %vm1614 = vweird.f32 %v1467
    %v1615 = vadd.s32 %v1598, 3
    %v1616 = vand.u32 %v1615, 3
    %vm1617 = vcmp.lt.s32.totalorder %v1616, 2
    %vm1618 = vcmp.eq.s32.totalorder %v1616, 0
    %v1619 = vxor.u32 %v1613, 2147483648
    %v1620 = vsel %vm1618, %v1605, %v1619
    %vm1621 = vcmp.eq.s32.totalorder %v1616, 2
    %v1622 = vxor.u32 %v1605, 2147483648
    %v1623 = vsel %vm1621, %v1622, %v1613
    %v1624 = vsel %vm1617, %v1620, %v1623
    %v1625 = vsel %vm1614, nan, %v1624
    %v1626 = vand.u32 2147483647, %v1468
    %vm1627 = vcmp.le.f32.partialorder %v1626, 0.7853982
    %vm1628 = vcmp.lt.s32.totalorder %v1468, 0
    %v1629 = vand.u32 %v1468, 2139095040
    %v1630 = vshrl.u32 %v1629, 23
    %v1631 = vsub.s32 %v1630, 127
    %v1632 = vand.u32 2147483647, %v1468
    %v1633 = vand.u32 %v1632, 8388607
    %v1634 = vor.u32 %v1633, 8388608
    %v1635 = vsub.s32 0, %v1634
    %v1636 = vadd.s32 %v1631, 1
    %vm1637 = vcmp.gt.s32.totalorder %v1636, 0
    %v1638 = vsel %vm1637, %v1636, 0
    %v1639 = vshrl.u32 %v1638, 5
    %v1640 = vand.u32 %v1638, 31
    %v1641 = vsub.s32 32, %v1640
    %v1642 = vshrl.u32 683565275, %v1641
    %v1643 = vshll.u32 683565275, %v1640
    %v1644 = vshrl.u32 2475754826, %v1641
    %v1645 = vor.u32 %v1643, %v1644
    %v1646 = vshll.u32 2475754826, %v1640
    %v1647 = vshrl.u32 2131351028, %v1641
    %v1648 = vor.u32 %v1646, %v1647
    %v1649 = vshll.u32 2131351028, %v1640
    %v1650 = vshrl.u32 2102212464, %v1641
    %v1651 = vor.u32 %v1649, %v1650
    %v1652 = vshll.u32 2102212464, %v1640
    %v1653 = vshrl.u32 920167782, %v1641
    %v1654 = vor.u32 %v1652, %v1653
    %v1655 = vshll.u32 920167782, %v1640
    %v1656 = vshrl.u32 1326507024, %v1641
    %v1657 = vor.u32 %v1655, %v1656
    %vm1658 = vcmp.lt.s32.totalorder %v1639, 1
    %vm1659 = vcmp.lt.s32.totalorder %v1639, 2
    %vm1660 = vcmp.lt.s32.totalorder %v1639, 3
    %vm1661 = vcmp.lt.s32.totalorder %v1639, 4
    %v1662 = vsel %vm1658, %v1642, %v1645
    %v1663 = vsel %vm1661, %v1651, 2102212464
    %v1664 = vsel %vm1660, %v1648, %v1663
    %v1665 = vsel %vm1659, %v1662, %v1664
    %v1666 = vsel %vm1658, %v1645, %v1648
    %v1667 = vsel %vm1661, %v1654, 920167782
    %v1668 = vsel %vm1660, %v1651, %v1667
    %v1669 = vsel %vm1659, %v1666, %v1668
    %v1670 = vsel %vm1658, %v1648, %v1651
    %v1671 = vsel %vm1661, %v1657, 1326507024
    %v1672 = vsel %vm1660, %v1654, %v1671
    %v1673 = vsel %vm1659, %v1670, %v1672
    %v1674 = vshll.u32 %v1634, 8
    %v1675 = vand.u32 %v1674, 65535
    %v1676 = vshrl.u32 %v1674, 16
    %v1677 = vand.u32 %v1673, 65535
    %v1678 = vshrl.u32 %v1673, 16
    %v1679 = vmul.u32 %v1675, %v1677
    %v1680 = vmul.u32 %v1675, %v1678
    %v1681 = vmul.u32 %v1676, %v1677
    %v1682 = vmul.u32 %v1676, %v1678
    %v1683 = vshll.u32 %v1680, 16
    %v1684 = vshrl.u32 %v1680, 16
    %v1685 = vshll.u32 %v1681, 16
    %v1686 = vshrl.u32 %v1681, 16
    %vm1687 = vc.u32 %v1679, %v1683
    %v1688 = vsel %vm1687, 1, 0
    %v1689 = vadd.s32 %v1679, %v1683
    %v1690 = vadd.s32 %v1682, %v1688
    %vm1691 = vc.u32 %v1689, %v1685
    %v1692 = vsel %vm1691, 1, 0
    %v1693 = vadd.s32 %v1689, %v1685
    %v1694 = vadd.s32 %v1690, %v1692
    %v1695 = vadd.s32 %v1694, %v1684
    %v1696 = vadd.s32 %v1695, %v1686
    %v1697 = vand.u32 %v1674, 65535
    %v1698 = vshrl.u32 %v1674, 16
    %v1699 = vand.u32 %v1669, 65535
    %v1700 = vshrl.u32 %v1669, 16
    %v1701 = vmul.u32 %v1697, %v1699
    %v1702 = vmul.u32 %v1697, %v1700
    %v1703 = vmul.u32 %v1698, %v1699
    %v1704 = vmul.u32 %v1698, %v1700
    %v1705 = vshll.u32 %v1702, 16
    %v1706 = vshrl.u32 %v1702, 16
    %v1707 = vshll.u32 %v1703, 16
    %v1708 = vshrl.u32 %v1703, 16
    %vm1709 = vc.u32 %v1701, %v1705
    %v1710 = vsel %vm1709, 1, 0
    %v1711 = vadd.s32 %v1701, %v1705
    %v1712 = vadd.s32 %v1704, %v1710
    %vm1713 = vc.u32 %v1711, %v1707
    %v1714 = vsel %vm1713, 1, 0
    %v1715 = vadd.s32 %v1711, %v1707
    %v1716 = vadd.s32 %v1712, %v1714
    %v1717 = vadd.s32 %v1716, %v1706
    %v1718 = vadd.s32 %v1717, %v1708
    %v1719 = vmul.u32 %v1674, %v1665
    %v1720 = vadd.s32 %v1696, %v1715
    %vm1721 = vc.u32 %v1696, %v1715
    %v1722 = vadd.s32 %v1718, 1
    %v1723 = vsel %vm1721, %v1722, %v1718
    %v1724 = vadd.s32 %v1719, %v1723
    %v1725 = vadd.s32 %v1724, 536870912
    %v1726 = vshrl.u32 %v1725, 30
    %v1727 = vshll.u32 %v1726, 30
    %v1728 = vsub.s32 %v1724, %v1727
    %vm1729 = vcmp.lt.s32.totalorder %v1728, 0
    %v1730 = vsub.s32 0, %v1728
    %v1731 = vsel %vm1729, %v1730, %v1728
    %v1732 = vclz %v1731
    %v1733 = vsub.s32 %v1732, 2
    %vm1734 = vcmp.gt.s32.totalorder 0, %v1733
    %v1735 = vsel %vm1734, 0, %v1733
    %v1736 = vsub.s32 32, %v1735
    %v1737 = vshll.u32 %v1728, %v1735
    %v1738 = vshrl.u32 %v1720, %v1736
    %v1739 = vor.u32 %v1737, %v1738
    %v1740 = vsub.s32 4294967266, %v1735
    %v1741 = vadd.s32 %v1740, 127
    %v1742 = vshll.u32 %v1741, 23
    %v1743 = vor.u32 4788187, %v1742
    %v1744 = vand.u32 2147483647, %v1743
    %v1746 = vcvt.s32.f32 %v1739
    %v1747 = vmul.f32 %v1746, %v1744
    %v1748 = vxor.u32 %v1747, 2147483648
    %v1749 = vsel %vm1628, %v1748, %v1747
    %v1750 = vsub.s32 4, %v1726
    %v1751 = vsel %vm1628, %v1750, %v1726
    %v1752 = vsel %vm1627, %v1468, %v1749
    %v1753 = vsel %vm1627, 0, %v1751
    %v1754 = vmul.f32 %v1752, %v1752
    %v1755 = vmul.f32 %v1754, -0.001358992
    %v1756 = vadd.f32 %v1755, 0.041655596
    %v1757 = vmul.f32 %v1754, %v1756
    %v1758 = vadd.f32 %v1757, -0.4999988
    %v1759 = vmul.f32 %v1754, %v1758
    %v1760 = vadd.f32 1.0, %v1759
    %v1761 = vmul.f32 %v1752, %v1752
    %v1762 = vmul.f32 %v1761, -0.00019511016
    %v1763 = vadd.f32 %v1762, 0.008332121
    %v1764 = vmul.f32 %v1761, %v1763
    %v1765 = vadd.f32 %v1764, -0.16666654
    %v1766 = vmul.f32 %v1761, %v1765
    %v1767 = vadd.f32 %v1766, 1.0
    %v1768 = vmul.f32 %v1767, %v1752
    %vm1769 = vweird.f32 %v1468
    %v1770 = vadd.s32 %v1753, 3
    %v1771 = vand.u32 %v1770, 3
    %vm1772 = vcmp.lt.s32.totalorder %v1771, 2
    %vm1773 = vcmp.eq.s32.totalorder %v1771, 0
    %v1774 = vxor.u32 %v1768, 2147483648
    %v1775 = vsel %vm1773, %v1760, %v1774
    %vm1776 = vcmp.eq.s32.totalorder %v1771, 2
    %v1777 = vxor.u32 %v1760, 2147483648
    %v1778 = vsel %vm1776, %v1777, %v1768
    %v1779 = vsel %vm1772, %v1775, %v1778
    %v1780 = vsel %vm1769, nan, %v1779
    %v1781 = vand.u32 2147483647, %v1469
    %vm1782 = vcmp.le.f32.partialorder %v1781, 0.7853982
    %vm1783 = vcmp.lt.s32.totalorder %v1469, 0
    %v1784 = vand.u32 %v1469, 2139095040
    %v1785 = vshrl.u32 %v1784, 23
    %v1786 = vsub.s32 %v1785, 127
    %v1787 = vand.u32 2147483647, %v1469
    %v1788 = vand.u32 %v1787, 8388607
    %v1789 = vor.u32 %v1788, 8388608
    %v1790 = vsub.s32 0, %v1789
    %v1791 = vadd.s32 %v1786, 1
    %vm1792 = vcmp.gt.s32.totalorder %v1791, 0
    %v1793 = vsel %vm1792, %v1791, 0
    %v1794 = vshrl.u32 %v1793, 5
    %v1795 = vand.u32 %v1793, 31
    %v1796 = vsub.s32 32, %v1795
    %v1797 = vshrl.u32 683565275, %v1796
    %v1798 = vshll.u32 683565275, %v1795
    %v1799 = vshrl.u32 2475754826, %v1796
    %v1800 = vor.u32 %v1798, %v1799
    %v1801 = vshll.u32 2475754826, %v1795
    %v1802 = vshrl.u32 2131351028, %v1796
    %v1803 = vor.u32 %v1801, %v1802
    %v1804 = vshll.u32 2131351028, %v1795
    %v1805 = vshrl.u32 2102212464, %v1796
    %v1806 = vor.u32 %v1804, %v1805
    %v1807 = vshll.u32 2102212464, %v1795
    %v1808 = vshrl.u32 920167782, %v1796
    %v1809 = vor.u32 %v1807, %v1808
    %v1810 = vshll.u32 920167782, %v1795
    %v1811 = vshrl.u32 1326507024, %v1796
    %v1812 = vor.u32 %v1810, %v1811
    %vm1813 = vcmp.lt.s32.totalorder %v1794, 1
    %vm1814 = vcmp.lt.s32.totalorder %v1794, 2
    %vm1815 = vcmp.lt.s32.totalorder %v1794, 3
    %vm1816 = vcmp.lt.s32.totalorder %v1794, 4
    %v1817 = vsel %vm1813, %v1797, %v1800
    %v1818 = vsel %vm1816, %v1806, 2102212464
    %v1819 = vsel %vm1815, %v1803, %v1818
    %v1820 = vsel %vm1814, %v1817, %v1819
    %v1821 = vsel %vm1813, %v1800, %v1803
    %v1822 = vsel %vm1816, %v1809, 920167782
    %v1823 = vsel %vm1815, %v1806, %v1822
    %v1824 = vsel %vm1814, %v1821, %v1823
    %v1825 = vsel %vm1813, %v1803, %v1806
    %v1826 = vsel %vm1816, %v1812, 1326507024
    %v1827 = vsel %vm1815, %v1809, %v1826
    %v1828 = vsel %vm1814, %v1825, %v1827
    %v1829 = vshll.u32 %v1789, 8
    %v1830 = vand.u32 %v1829, 65535
    %v1831 = vshrl.u32 %v1829, 16
    %v1832 = vand.u32 %v1828, 65535
    %v1833 = vshrl.u32 %v1828, 16
    %v1834 = vmul.u32 %v1830, %v1832
    %v1835 = vmul.u32 %v1830, %v1833
    %v1836 = vmul.u32 %v1831, %v1832
    %v1837 = vmul.u32 %v1831, %v1833
    %v1838 = vshll.u32 %v1835, 16
    %v1839 = vshrl.u32 %v1835, 16
    %v1840 = vshll.u32 %v1836, 16
    %v1841 = vshrl.u32 %v1836, 16
    %vm1842 = vc.u32 %v1834, %v1838
    %v1843 = vsel %vm1842, 1, 0
    %v1844 = vadd.s32 %v1834, %v1838
    %v1845 = vadd.s32 %v1837, %v1843
    %vm1846 = vc.u32 %v1844, %v1840
    %v1847 = vsel %vm1846, 1, 0
    %v1848 = vadd.s32 %v1844, %v1840
    %v1849 = vadd.s32 %v1845, %v1847
    %v1850 = vadd.s32 %v1849, %v1839
    %v1851 = vadd.s32 %v1850, %v1841
    %v1852 = vand.u32 %v1829, 65535
    %v1853 = vshrl.u32 %v1829, 16
    %v1854 = vand.u32 %v1824, 65535
    %v1855 = vshrl.u32 %v1824, 16
    %v1856 = vmul.u32 %v1852, %v1854
    %v1857 = vmul.u32 %v1852, %v1855
    %v1858 = vmul.u32 %v1853, %v1854
    %v1859 = vmul.u32 %v1853, %v1855
    %v1860 = vshll.u32 %v1857, 16
    %v1861 = vshrl.u32 %v1857, 16
    %v1862 = vshll.u32 %v1858, 16
    %v1863 = vshrl.u32 %v1858, 16
    %vm1864 = vc.u32 %v1856, %v1860
    %v1865 = vsel %vm1864, 1, 0
    %v1866 = vadd.s32 %v1856, %v1860
    %v1867 = vadd.s32 %v1859, %v1865
    %vm1868 = vc.u32 %v1866, %v1862
    %v1869 = vsel %vm1868, 1, 0
    %v1870 = vadd.s32 %v1866, %v1862
    %v1871 = vadd.s32 %v1867, %v1869
    %v1872 = vadd.s32 %v1871, %v1861
    %v1873 = vadd.s32 %v1872, %v1863
    %v1874 = vmul.u32 %v1829, %v1820
    %v1875 = vadd.s32 %v1851, %v1870
    %vm1876 = vc.u32 %v1851, %v1870
    %v1877 = vadd.s32 %v1873, 1
    %v1878 = vsel %vm1876, %v1877, %v1873
    %v1879 = vadd.s32 %v1874, %v1878
    %v1880 = vadd.s32 %v1879, 536870912
    %v1881 = vshrl.u32 %v1880, 30
    %v1882 = vshll.u32 %v1881, 30
    %v1883 = vsub.s32 %v1879, %v1882
    %vm1884 = vcmp.lt.s32.totalorder %v1883, 0
    %v1885 = vsub.s32 0, %v1883
    %v1886 = vsel %vm1884, %v1885, %v1883
    %v1887 = vclz %v1886
    %v1888 = vsub.s32 %v1887, 2
    %vm1889 = vcmp.gt.s32.totalorder 0, %v1888
    %v1890 = vsel %vm1889, 0, %v1888
    %v1891 = vsub.s32 32, %v1890
    %v1892 = vshll.u32 %v1883, %v1890
    %v1893 = vshrl.u32 %v1875, %v1891
    %v1894 = vor.u32 %v1892, %v1893
    %v1895 = vsub.s32 4294967266, %v1890
    %v1896 = vadd.s32 %v1895, 127
    %v1897 = vshll.u32 %v1896, 23
    %v1898 = vor.u32 4788187, %v1897
    %v1899 = vand.u32 2147483647, %v1898
    %v1901 = vcvt.s32.f32 %v1894
    %v1902 = vmul.f32 %v1901, %v1899
    %v1903 = vxor.u32 %v1902, 2147483648
    %v1904 = vsel %vm1783, %v1903, %v1902
    %v1905 = vsub.s32 4, %v1881
    %v1906 = vsel %vm1783, %v1905, %v1881
    %v1907 = vsel %vm1782, %v1469, %v1904
    %v1908 = vsel %vm1782, 0, %v1906
    %v1909 = vmul.f32 %v1907, %v1907
    %v1910 = vmul.f32 %v1909, -0.001358992
    %v1911 = vadd.f32 %v1910, 0.041655596
    %v1912 = vmul.f32 %v1909, %v1911
    %v1913 = vadd.f32 %v1912, -0.4999988
    %v1914 = vmul.f32 %v1909, %v1913
    %v1915 = vadd.f32 1.0, %v1914
    %v1916 = vmul.f32 %v1907, %v1907
    %v1917 = vmul.f32 %v1916, -0.00019511016
    %v1918 = vadd.f32 %v1917, 0.008332121
    %v1919 = vmul.f32 %v1916, %v1918
    %v1920 = vadd.f32 %v1919, -0.16666654
    %v1921 = vmul.f32 %v1916, %v1920
    %v1922 = vadd.f32 %v1921, 1.0
    %v1923 = vmul.f32 %v1922, %v1907
    %vm1924 = vweird.f32 %v1469
    %v1925 = vadd.s32 %v1908, 3
    %v1926 = vand.u32 %v1925, 3
    %vm1927 = vcmp.lt.s32.totalorder %v1926, 2
    %vm1928 = vcmp.eq.s32.totalorder %v1926, 0
    %v1929 = vxor.u32 %v1923, 2147483648
    %v1930 = vsel %vm1928, %v1915, %v1929
    %vm1931 = vcmp.eq.s32.totalorder %v1926, 2
    %v1932 = vxor.u32 %v1915, 2147483648
    %v1933 = vsel %vm1931, %v1932, %v1923
    %v1934 = vsel %vm1927, %v1930, %v1933
    %v1935 = vsel %vm1924, nan, %v1934
    %v1936 = vand.u32 2147483647, %v1470
    %vm1937 = vcmp.le.f32.partialorder %v1936, 0.7853982
    %vm1938 = vcmp.lt.s32.totalorder %v1470, 0
    %v1939 = vand.u32 %v1470, 2139095040
    %v1940 = vshrl.u32 %v1939, 23
    %v1941 = vsub.s32 %v1940, 127
    %v1942 = vand.u32 2147483647, %v1470
    %v1943 = vand.u32 %v1942, 8388607
    %v1944 = vor.u32 %v1943, 8388608
    %v1945 = vsub.s32 0, %v1944
    %v1946 = vadd.s32 %v1941, 1
    %vm1947 = vcmp.gt.s32.totalorder %v1946, 0
    %v1948 = vsel %vm1947, %v1946, 0
    %v1949 = vshrl.u32 %v1948, 5
    %v1950 = vand.u32 %v1948, 31
    %v1951 = vsub.s32 32, %v1950
    %v1952 = vshrl.u32 683565275, %v1951
    %v1953 = vshll.u32 683565275, %v1950
    %v1954 = vshrl.u32 2475754826, %v1951
    %v1955 = vor.u32 %v1953, %v1954
    %v1956 = vshll.u32 2475754826, %v1950
    %v1957 = vshrl.u32 2131351028, %v1951
    %v1958 = vor.u32 %v1956, %v1957
    %v1959 = vshll.u32 2131351028, %v1950
    %v1960 = vshrl.u32 2102212464, %v1951
    %v1961 = vor.u32 %v1959, %v1960
    %v1962 = vshll.u32 2102212464, %v1950
    %v1963 = vshrl.u32 920167782, %v1951
    %v1964 = vor.u32 %v1962, %v1963
    %v1965 = vshll.u32 920167782, %v1950
    %v1966 = vshrl.u32 1326507024, %v1951
    %v1967 = vor.u32 %v1965, %v1966
    %vm1968 = vcmp.lt.s32.totalorder %v1949, 1
    %vm1969 = vcmp.lt.s32.totalorder %v1949, 2
    %vm1970 = vcmp.lt.s32.totalorder %v1949, 3
    %vm1971 = vcmp.lt.s32.totalorder %v1949, 4
    %v1972 = vsel %vm1968, %v1952, %v1955
    %v1973 = vsel %vm1971, %v1961, 2102212464
    %v1974 = vsel %vm1970, %v1958, %v1973
    %v1975 = vsel %vm1969, %v1972, %v1974
    %v1976 = vsel %vm1968, %v1955, %v1958
    %v1977 = vsel %vm1971, %v1964, 920167782
    %v1978 = vsel %vm1970, %v1961, %v1977
    %v1979 = vsel %vm1969, %v1976, %v1978
    %v1980 = vsel %vm1968, %v1958, %v1961
    %v1981 = vsel %vm1971, %v1967, 1326507024
    %v1982 = vsel %vm1970, %v1964, %v1981
    %v1983 = vsel %vm1969, %v1980, %v1982
    %v1984 = vshll.u32 %v1944, 8
    %v1985 = vand.u32 %v1984, 65535
    %v1986 = vshrl.u32 %v1984, 16
    %v1987 = vand.u32 %v1983, 65535
    %v1988 = vshrl.u32 %v1983, 16
    %v1989 = vmul.u32 %v1985, %v1987
    %v1990 = vmul.u32 %v1985, %v1988
    %v1991 = vmul.u32 %v1986, %v1987
    %v1992 = vmul.u32 %v1986, %v1988
    %v1993 = vshll.u32 %v1990, 16
    %v1994 = vshrl.u32 %v1990, 16
    %v1995 = vshll.u32 %v1991, 16
    %v1996 = vshrl.u32 %v1991, 16
    %vm1997 = vc.u32 %v1989, %v1993
    %v1998 = vsel %vm1997, 1, 0
    %v1999 = vadd.s32 %v1989, %v1993
    %v2000 = vadd.s32 %v1992, %v1998
    %vm2001 = vc.u32 %v1999, %v1995
    %v2002 = vsel %vm2001, 1, 0
    %v2003 = vadd.s32 %v1999, %v1995
    %v2004 = vadd.s32 %v2000, %v2002
    %v2005 = vadd.s32 %v2004, %v1994
    %v2006 = vadd.s32 %v2005, %v1996
    %v2007 = vand.u32 %v1984, 65535
    %v2008 = vshrl.u32 %v1984, 16
    %v2009 = vand.u32 %v1979, 65535
    %v2010 = vshrl.u32 %v1979, 16
    %v2011 = vmul.u32 %v2007, %v2009
    %v2012 = vmul.u32 %v2007, %v2010
    %v2013 = vmul.u32 %v2008, %v2009
    %v2014 = vmul.u32 %v2008, %v2010
    %v2015 = vshll.u32 %v2012, 16
    %v2016 = vshrl.u32 %v2012, 16
    %v2017 = vshll.u32 %v2013, 16
    %v2018 = vshrl.u32 %v2013, 16
    %vm2019 = vc.u32 %v2011, %v2015
    %v2020 = vsel %vm2019, 1, 0
    %v2021 = vadd.s32 %v2011, %v2015
    %v2022 = vadd.s32 %v2014, %v2020
    %vm2023 = vc.u32 %v2021, %v2017
    %v2024 = vsel %vm2023, 1, 0
    %v2025 = vadd.s32 %v2021, %v2017
    %v2026 = vadd.s32 %v2022, %v2024
    %v2027 = vadd.s32 %v2026, %v2016
    %v2028 = vadd.s32 %v2027, %v2018
    %v2029 = vmul.u32 %v1984, %v1975
    %v2030 = vadd.s32 %v2006, %v2025
    %vm2031 = vc.u32 %v2006, %v2025
    %v2032 = vadd.s32 %v2028, 1
    %v2033 = vsel %vm2031, %v2032, %v2028
    %v2034 = vadd.s32 %v2029, %v2033
    %v2035 = vadd.s32 %v2034, 536870912
    %v2036 = vshrl.u32 %v2035, 30
    %v2037 = vshll.u32 %v2036, 30
    %v2038 = vsub.s32 %v2034, %v2037
    %vm2039 = vcmp.lt.s32.totalorder %v2038, 0
    %v2040 = vsub.s32 0, %v2038
    %v2041 = vsel %vm2039, %v2040, %v2038
    %v2042 = vclz %v2041
    %v2043 = vsub.s32 %v2042, 2
    %vm2044 = vcmp.gt.s32.totalorder 0, %v2043
    %v2045 = vsel %vm2044, 0, %v2043
    %v2046 = vsub.s32 32, %v2045
    %v2047 = vshll.u32 %v2038, %v2045
    %v2048 = vshrl.u32 %v2030, %v2046
    %v2049 = vor.u32 %v2047, %v2048
    %v2050 = vsub.s32 4294967266, %v2045
    %v2051 = vadd.s32 %v2050, 127
    %v2052 = vshll.u32 %v2051, 23
    %v2053 = vor.u32 4788187, %v2052
    %v2054 = vand.u32 2147483647, %v2053
    %v2056 = vcvt.s32.f32 %v2049
    %v2057 = vmul.f32 %v2056, %v2054
    %v2058 = vxor.u32 %v2057, 2147483648
    %v2059 = vsel %vm1938, %v2058, %v2057
    %v2060 = vsub.s32 4, %v2036
    %v2061 = vsel %vm1938, %v2060, %v2036
    %v2062 = vsel %vm1937, %v1470, %v2059
    %v2063 = vsel %vm1937, 0, %v2061
    %v2064 = vmul.f32 %v2062, %v2062
    %v2065 = vmul.f32 %v2064, -0.001358992
    %v2066 = vadd.f32 %v2065, 0.041655596
    %v2067 = vmul.f32 %v2064, %v2066
    %v2068 = vadd.f32 %v2067, -0.4999988
    %v2069 = vmul.f32 %v2064, %v2068
    %v2070 = vadd.f32 1.0, %v2069
    %v2071 = vmul.f32 %v2062, %v2062
    %v2072 = vmul.f32 %v2071, -0.00019511016
    %v2073 = vadd.f32 %v2072, 0.008332121
    %v2074 = vmul.f32 %v2071, %v2073
    %v2075 = vadd.f32 %v2074, -0.16666654
    %v2076 = vmul.f32 %v2071, %v2075
    %v2077 = vadd.f32 %v2076, 1.0
    %v2078 = vmul.f32 %v2077, %v2062
    %vm2079 = vweird.f32 %v1470
    %v2080 = vadd.s32 %v2063, 3
    %v2081 = vand.u32 %v2080, 3
    %vm2082 = vcmp.lt.s32.totalorder %v2081, 2
    %vm2083 = vcmp.eq.s32.totalorder %v2081, 0
    %v2084 = vxor.u32 %v2078, 2147483648
    %v2085 = vsel %vm2083, %v2070, %v2084
    %vm2086 = vcmp.eq.s32.totalorder %v2081, 2
    %v2087 = vxor.u32 %v2070, 2147483648
    %v2088 = vsel %vm2086, %v2087, %v2078
    %v2089 = vsel %vm2082, %v2085, %v2088
    %v2090 = vsel %vm2079, nan, %v2089
    %v2091 = vadd.f32 %v757, %v1625
    %v2092 = vadd.f32 %v758, %v1780
    %v2093 = vadd.f32 %v759, %v1935
    %v2094 = vadd.f32 %v760, %v2090
    %v2095 = vand.u32 2147483647, %v1467
    %vm2096 = vcmp.le.f32.partialorder %v2095, 0.7853982
    %vm2097 = vcmp.lt.s32.totalorder %v1467, 0
    %v2098 = vand.u32 %v1467, 2139095040
    %v2099 = vshrl.u32 %v2098, 23
    %v2100 = vsub.s32 %v2099, 127
    %v2101 = vand.u32 2147483647, %v1467
    %v2102 = vand.u32 %v2101, 8388607
    %v2103 = vor.u32 %v2102, 8388608
    %v2104 = vsub.s32 0, %v2103
    %v2105 = vadd.s32 %v2100, 1
    %vm2106 = vcmp.gt.s32.totalorder %v2105, 0
    %v2107 = vsel %vm2106, %v2105, 0
    %v2108 = vshrl.u32 %v2107, 5
    %v2109 = vand.u32 %v2107, 31
    %v2110 = vsub.s32 32, %v2109
    %v2111 = vshrl.u32 683565275, %v2110
    %v2112 = vshll.u32 683565275, %v2109
    %v2113 = vshrl.u32 2475754826, %v2110
    %v2114 = vor.u32 %v2112, %v2113
    %v2115 = vshll.u32 2475754826, %v2109
    %v2116 = vshrl.u32 2131351028, %v2110
    %v2117 = vor.u32 %v2115, %v2116
    %v2118 = vshll.u32 2131351028, %v2109
    %v2119 = vshrl.u32 2102212464, %v2110
    %v2120 = vor.u32 %v2118, %v2119
    %v2121 = vshll.u32 2102212464, %v2109
    %v2122 = vshrl.u32 920167782, %v2110
    %v2123 = vor.u32 %v2121, %v2122
    %v2124 = vshll.u32 920167782, %v2109
    %v2125 = vshrl.u32 1326507024, %v2110
    %v2126 = vor.u32 %v2124, %v2125
    %vm2127 = vcmp.lt.s32.totalorder %v2108, 1
    %vm2128 = vcmp.lt.s32.totalorder %v2108, 2
    %vm2129 = vcmp.lt.s32.totalorder %v2108, 3
    %vm2130 = vcmp.lt.s32.totalorder %v2108, 4
    %v2131 = vsel %vm2127, %v2111, %v2114
    %v2132 = vsel %vm2130, %v2120, 2102212464
    %v2133 = vsel %vm2129, %v2117, %v2132
    %v2134 = vsel %vm2128, %v2131, %v2133
    %v2135 = vsel %vm2127, %v2114, %v2117
    %v2136 = vsel %vm2130, %v2123, 920167782
    %v2137 = vsel %vm2129, %v2120, %v2136
    %v2138 = vsel %vm2128, %v2135, %v2137
    %v2139 = vsel %vm2127, %v2117, %v2120
    %v2140 = vsel %vm2130, %v2126, 1326507024
    %v2141 = vsel %vm2129, %v2123, %v2140
    %v2142 = vsel %vm2128, %v2139, %v2141
    %v2143 = vshll.u32 %v2103, 8
    %v2144 = vand.u32 %v2143, 65535
    %v2145 = vshrl.u32 %v2143, 16
    %v2146 = vand.u32 %v2142, 65535
    %v2147 = vshrl.u32 %v2142, 16
    %v2148 = vmul.u32 %v2144, %v2146
    %v2149 = vmul.u32 %v2144, %v2147
    %v2150 = vmul.u32 %v2145, %v2146
    %v2151 = vmul.u32 %v2145, %v2147
    %v2152 = vshll.u32 %v2149, 16
    %v2153 = vshrl.u32 %v2149, 16
    %v2154 = vshll.u32 %v2150, 16
    %v2155 = vshrl.u32 %v2150, 16
    %vm2156 = vc.u32 %v2148, %v2152
    %v2157 = vsel %vm2156, 1, 0
    %v2158 = vadd.s32 %v2148, %v2152
    %v2159 = vadd.s32 %v2151, %v2157
    %vm2160 = vc.u32 %v2158, %v2154
    %v2161 = vsel %vm2160, 1, 0
    %v2162 = vadd.s32 %v2158, %v2154
    %v2163 = vadd.s32 %v2159, %v2161
    %v2164 = vadd.s32 %v2163, %v2153
    %v2165 = vadd.s32 %v2164, %v2155
    %v2166 = vand.u32 %v2143, 65535
    %v2167 = vshrl.u32 %v2143, 16
    %v2168 = vand.u32 %v2138, 65535
    %v2169 = vshrl.u32 %v2138, 16
    %v2170 = vmul.u32 %v2166, %v2168
    %v2171 = vmul.u32 %v2166, %v2169
    %v2172 = vmul.u32 %v2167, %v2168
    %v2173 = vmul.u32 %v2167, %v2169
    %v2174 = vshll.u32 %v2171, 16
    %v2175 = vshrl.u32 %v2171, 16
    %v2176 = vshll.u32 %v2172, 16
    %v2177 = vshrl.u32 %v2172, 16
    %vm2178 = vc.u32 %v2170, %v2174
    %v2179 = vsel %vm2178, 1, 0
    %v2180 = vadd.s32 %v2170, %v2174
    %v2181 = vadd.s32 %v2173, %v2179
    %vm2182 = vc.u32 %v2180, %v2176
    %v2183 = vsel %vm2182, 1, 0
    %v2184 = vadd.s32 %v2180, %v2176
    %v2185 = vadd.s32 %v2181, %v2183
    %v2186 = vadd.s32 %v2185, %v2175
    %v2187 = vadd.s32 %v2186, %v2177
    %v2188 = vmul.u32 %v2143, %v2134
    %v2189 = vadd.s32 %v2165, %v2184
    %vm2190 = vc.u32 %v2165, %v2184
    %v2191 = vadd.s32 %v2187, 1
    %v2192 = vsel %vm2190, %v2191, %v2187
    %v2193 = vadd.s32 %v2188, %v2192
    %v2194 = vadd.s32 %v2193, 536870912
    %v2195 = vshrl.u32 %v2194, 30
    %v2196 = vshll.u32 %v2195, 30
    %v2197 = vsub.s32 %v2193, %v2196
    %vm2198 = vcmp.lt.s32.totalorder %v2197, 0
    %v2199 = vsub.s32 0, %v2197
    %v2200 = vsel %vm2198, %v2199, %v2197
    %v2201 = vclz %v2200
    %v2202 = vsub.s32 %v2201, 2
    %vm2203 = vcmp.gt.s32.totalorder 0, %v2202
    %v2204 = vsel %vm2203, 0, %v2202
    %v2205 = vsub.s32 32, %v2204
    %v2206 = vshll.u32 %v2197, %v2204
    %v2207 = vshrl.u32 %v2189, %v2205
    %v2208 = vor.u32 %v2206, %v2207
    %v2209 = vsub.s32 4294967266, %v2204
    %v2210 = vadd.s32 %v2209, 127
    %v2211 = vshll.u32 %v2210, 23
    %v2212 = vor.u32 4788187, %v2211
    %v2213 = vand.u32 2147483647, %v2212
    %v2215 = vcvt.s32.f32 %v2208
    %v2216 = vmul.f32 %v2215, %v2213
    %v2217 = vxor.u32 %v2216, 2147483648
    %v2218 = vsel %vm2097, %v2217, %v2216
    %v2219 = vsub.s32 4, %v2195
    %v2220 = vsel %vm2097, %v2219, %v2195
    %v2221 = vsel %vm2096, %v1467, %v2218
    %v2222 = vsel %vm2096, 0, %v2220
    %v2223 = vmul.f32 %v2221, %v2221
    %v2224 = vmul.f32 %v2223, -0.001358992
    %v2225 = vadd.f32 %v2224, 0.041655596
    %v2226 = vmul.f32 %v2223, %v2225
    %v2227 = vadd.f32 %v2226, -0.4999988
    %v2228 = vmul.f32 %v2223, %v2227
    %v2229 = vadd.f32 1.0, %v2228
    %v2230 = vmul.f32 %v2221, %v2221
    %v2231 = vmul.f32 %v2230, -0.00019511016
    %v2232 = vadd.f32 %v2231, 0.008332121
    %v2233 = vmul.f32 %v2230, %v2232
    %v2234 = vadd.f32 %v2233, -0.16666654
    %v2235 = vmul.f32 %v2230, %v2234
    %v2236 = vadd.f32 %v2235, 1.0
    %v2237 = vmul.f32 %v2236, %v2221
    %vm2238 = vweird.f32 %v1467
    %v2239 = vand.u32 %v2222, 3
    %vm2240 = vcmp.lt.s32.totalorder %v2239, 2
    %vm2241 = vcmp.eq.s32.totalorder %v2239, 0
    %v2242 = vxor.u32 %v2237, 2147483648
    %v2243 = vsel %vm2241, %v2229, %v2242
    %vm2244 = vcmp.eq.s32.totalorder %v2239, 2
    %v2245 = vxor.u32 %v2229, 2147483648
    %v2246 = vsel %vm2244, %v2245, %v2237
    %v2247 = vsel %vm2240, %v2243, %v2246
    %v2248 = vsel %vm2238, nan, %v2247
    %v2249 = vand.u32 2147483647, %v1468
    %vm2250 = vcmp.le.f32.partialorder %v2249, 0.7853982
    %vm2251 = vcmp.lt.s32.totalorder %v1468, 0
    %v2252 = vand.u32 %v1468, 2139095040
    %v2253 = vshrl.u32 %v2252, 23
    %v2254 = vsub.s32 %v2253, 127
    %v2255 = vand.u32 2147483647, %v1468
    %v2256 = vand.u32 %v2255, 8388607
    %v2257 = vor.u32 %v2256, 8388608
    %v2258 = vsub.s32 0, %v2257
    %v2259 = vadd.s32 %v2254, 1
    %vm2260 = vcmp.gt.s32.totalorder %v2259, 0
    %v2261 = vsel %vm2260, %v2259, 0
    %v2262 = vshrl.u32 %v2261, 5
    %v2263 = vand.u32 %v2261, 31
    %v2264 = vsub.s32 32, %v2263
    %v2265 = vshrl.u32 683565275, %v2264
    %v2266 = vshll.u32 683565275, %v2263
    %v2267 = vshrl.u32 2475754826, %v2264
    %v2268 = vor.u32 %v2266, %v2267
    %v2269 = vshll.u32 2475754826, %v2263
    %v2270 = vshrl.u32 2131351028, %v2264
    %v2271 = vor.u32 %v2269, %v2270
    %v2272 = vshll.u32 2131351028, %v2263
    %v2273 = vshrl.u32 2102212464, %v2264
    %v2274 = vor.u32 %v2272, %v2273
    %v2275 = vshll.u32 2102212464, %v2263
    %v2276 = vshrl.u32 920167782, %v2264
    %v2277 = vor.u32 %v2275, %v2276
    %v2278 = vshll.u32 920167782, %v2263
    %v2279 = vshrl.u32 1326507024, %v2264
    %v2280 = vor.u32 %v2278, %v2279
    %vm2281 = vcmp.lt.s32.totalorder %v2262, 1
    %vm2282 = vcmp.lt.s32.totalorder %v2262, 2
    %vm2283 = vcmp.lt.s32.totalorder %v2262, 3
    %vm2284 = vcmp.lt.s32.totalorder %v2262, 4
    %v2285 = vsel %vm2281, %v2265, %v2268
    %v2286 = vsel %vm2284, %v2274, 2102212464
    %v2287 = vsel %vm2283, %v2271, %v2286
    %v2288 = vsel %vm2282, %v2285, %v2287
    %v2289 = vsel %vm2281, %v2268, %v2271
    %v2290 = vsel %vm2284, %v2277, 920167782
    %v2291 = vsel %vm2283, %v2274, %v2290
    %v2292 = vsel %vm2282, %v2289, %v2291
    %v2293 = vsel %vm2281, %v2271, %v2274
    %v2294 = vsel %vm2284, %v2280, 1326507024
    %v2295 = vsel %vm2283, %v2277, %v2294
    %v2296 = vsel %vm2282, %v2293, %v2295
    %v2297 = vshll.u32 %v2257, 8
    %v2298 = vand.u32 %v2297, 65535
    %v2299 = vshrl.u32 %v2297, 16
    %v2300 = vand.u32 %v2296, 65535
    %v2301 = vshrl.u32 %v2296, 16
    %v2302 = vmul.u32 %v2298, %v2300
    %v2303 = vmul.u32 %v2298, %v2301
    %v2304 = vmul.u32 %v2299, %v2300
    %v2305 = vmul.u32 %v2299, %v2301
    %v2306 = vshll.u32 %v2303, 16
    %v2307 = vshrl.u32 %v2303, 16
    %v2308 = vshll.u32 %v2304, 16
    %v2309 = vshrl.u32 %v2304, 16
    %vm2310 = vc.u32 %v2302, %v2306
    %v2311 = vsel %vm2310, 1, 0
    %v2312 = vadd.s32 %v2302, %v2306
    %v2313 = vadd.s32 %v2305, %v2311
    %vm2314 = vc.u32 %v2312, %v2308
    %v2315 = vsel %vm2314, 1, 0
    %v2316 = vadd.s32 %v2312, %v2308
    %v2317 = vadd.s32 %v2313, %v2315
    %v2318 = vadd.s32 %v2317, %v2307
    %v2319 = vadd.s32 %v2318, %v2309
    %v2320 = vand.u32 %v2297, 65535
    %v2321 = vshrl.u32 %v2297, 16
    %v2322 = vand.u32 %v2292, 65535
    %v2323 = vshrl.u32 %v2292, 16
    %v2324 = vmul.u32 %v2320, %v2322
    %v2325 = vmul.u32 %v2320, %v2323
    %v2326 = vmul.u32 %v2321, %v2322
    %v2327 = vmul.u32 %v2321, %v2323
    %v2328 = vshll.u32 %v2325, 16
    %v2329 = vshrl.u32 %v2325, 16
    %v2330 = vshll.u32 %v2326, 16
    %v2331 = vshrl.u32 %v2326, 16
    %vm2332 = vc.u32 %v2324, %v2328
    %v2333 = vsel %vm2332, 1, 0
    %v2334 = vadd.s32 %v2324, %v2328
    %v2335 = vadd.s32 %v2327, %v2333
    %vm2336 = vc.u32 %v2334, %v2330
    %v2337 = vsel %vm2336, 1, 0
    %v2338 = vadd.s32 %v2334, %v2330
    %v2339 = vadd.s32 %v2335, %v2337
    %v2340 = vadd.s32 %v2339, %v2329
    %v2341 = vadd.s32 %v2340, %v2331
    %v2342 = vmul.u32 %v2297, %v2288
    %v2343 = vadd.s32 %v2319, %v2338
    %vm2344 = vc.u32 %v2319, %v2338
    %v2345 = vadd.s32 %v2341, 1
    %v2346 = vsel %vm2344, %v2345, %v2341
    %v2347 = vadd.s32 %v2342, %v2346
    %v2348 = vadd.s32 %v2347, 536870912
    %v2349 = vshrl.u32 %v2348, 30
    %v2350 = vshll.u32 %v2349, 30
    %v2351 = vsub.s32 %v2347, %v2350
    %vm2352 = vcmp.lt.s32.totalorder %v2351, 0
    %v2353 = vsub.s32 0, %v2351
    %v2354 = vsel %vm2352, %v2353, %v2351
    %v2355 = vclz %v2354
    %v2356 = vsub.s32 %v2355, 2
    %vm2357 = vcmp.gt.s32.totalorder 0, %v2356
    %v2358 = vsel %vm2357, 0, %v2356
    %v2359 = vsub.s32 32, %v2358
    %v2360 = vshll.u32 %v2351, %v2358
    %v2361 = vshrl.u32 %v2343, %v2359
    %v2362 = vor.u32 %v2360, %v2361
    %v2363 = vsub.s32 4294967266, %v2358
    %v2364 = vadd.s32 %v2363, 127
    %v2365 = vshll.u32 %v2364, 23
    %v2366 = vor.u32 4788187, %v2365
    %v2367 = vand.u32 2147483647, %v2366
    %v2369 = vcvt.s32.f32 %v2362
    %v2370 = vmul.f32 %v2369, %v2367
    %v2371 = vxor.u32 %v2370, 2147483648
    %v2372 = vsel %vm2251, %v2371, %v2370
    %v2373 = vsub.s32 4, %v2349
    %v2374 = vsel %vm2251, %v2373, %v2349
    %v2375 = vsel %vm2250, %v1468, %v2372
    %v2376 = vsel %vm2250, 0, %v2374
    %v2377 = vmul.f32 %v2375, %v2375
    %v2378 = vmul.f32 %v2377, -0.001358992
    %v2379 = vadd.f32 %v2378, 0.041655596
    %v2380 = vmul.f32 %v2377, %v2379
    %v2381 = vadd.f32 %v2380, -0.4999988
    %v2382 = vmul.f32 %v2377, %v2381
    %v2383 = vadd.f32 1.0, %v2382
    %v2384 = vmul.f32 %v2375, %v2375
    %v2385 = vmul.f32 %v2384, -0.00019511016
    %v2386 = vadd.f32 %v2385, 0.008332121
    %v2387 = vmul.f32 %v2384, %v2386
    %v2388 = vadd.f32 %v2387, -0.16666654
    %v2389 = vmul.f32 %v2384, %v2388
    %v2390 = vadd.f32 %v2389, 1.0
    %v2391 = vmul.f32 %v2390, %v2375
    %vm2392 = vweird.f32 %v1468
    %v2393 = vand.u32 %v2376, 3
    %vm2394 = vcmp.lt.s32.totalorder %v2393, 2
    %vm2395 = vcmp.eq.s32.totalorder %v2393, 0
    %v2396 = vxor.u32 %v2391, 2147483648
    %v2397 = vsel %vm2395, %v2383, %v2396
    %vm2398 = vcmp.eq.s32.totalorder %v2393, 2
    %v2399 = vxor.u32 %v2383, 2147483648
    %v2400 = vsel %vm2398, %v2399, %v2391
    %v2401 = vsel %vm2394, %v2397, %v2400
    %v2402 = vsel %vm2392, nan, %v2401
    %v2403 = vand.u32 2147483647, %v1469
    %vm2404 = vcmp.le.f32.partialorder %v2403, 0.7853982
    %vm2405 = vcmp.lt.s32.totalorder %v1469, 0
    %v2406 = vand.u32 %v1469, 2139095040
    %v2407 = vshrl.u32 %v2406, 23
    %v2408 = vsub.s32 %v2407, 127
    %v2409 = vand.u32 2147483647, %v1469
    %v2410 = vand.u32 %v2409, 8388607
    %v2411 = vor.u32 %v2410, 8388608
    %v2412 = vsub.s32 0, %v2411
    %v2413 = vadd.s32 %v2408, 1
    %vm2414 = vcmp.gt.s32.totalorder %v2413, 0
    %v2415 = vsel %vm2414, %v2413, 0
    %v2416 = vshrl.u32 %v2415, 5
    %v2417 = vand.u32 %v2415, 31
    %v2418 = vsub.s32 32, %v2417
    %v2419 = vshrl.u32 683565275, %v2418
    %v2420 = vshll.u32 683565275, %v2417
    %v2421 = vshrl.u32 2475754826, %v2418
    %v2422 = vor.u32 %v2420, %v2421
    %v2423 = vshll.u32 2475754826, %v2417
    %v2424 = vshrl.u32 2131351028, %v2418
    %v2425 = vor.u32 %v2423, %v2424
    %v2426 = vshll.u32 2131351028, %v2417
    %v2427 = vshrl.u32 2102212464, %v2418
    %v2428 = vor.u32 %v2426, %v2427
    %v2429 = vshll.u32 2102212464, %v2417
    %v2430 = vshrl.u32 920167782, %v2418
    %v2431 = vor.u32 %v2429, %v2430
    %v2432 = vshll.u32 920167782, %v2417
    %v2433 = vshrl.u32 1326507024, %v2418
    %v2434 = vor.u32 %v2432, %v2433
    %vm2435 = vcmp.lt.s32.totalorder %v2416, 1
    %vm2436 = vcmp.lt.s32.totalorder %v2416, 2
    %vm2437 = vcmp.lt.s32.totalorder %v2416, 3
    %vm2438 = vcmp.lt.s32.totalorder %v2416, 4
    %v2439 = vsel %vm2435, %v2419, %v2422
    %v2440 = vsel %vm2438, %v2428, 2102212464
    %v2441 = vsel %vm2437, %v2425, %v2440
    %v2442 = vsel %vm2436, %v2439, %v2441
    %v2443 = vsel %vm2435, %v2422, %v2425
    %v2444 = vsel %vm2438, %v2431, 920167782
    %v2445 = vsel %vm2437, %v2428, %v2444
    %v2446 = vsel %vm2436, %v2443, %v2445
    %v2447 = vsel %vm2435, %v2425, %v2428
    %v2448 = vsel %vm2438, %v2434, 1326507024
    %v2449 = vsel %vm2437, %v2431, %v2448
    %v2450 = vsel %vm2436, %v2447, %v2449
    %v2451 = vshll.u32 %v2411, 8
    %v2452 = vand.u32 %v2451, 65535
    %v2453 = vshrl.u32 %v2451, 16
    %v2454 = vand.u32 %v2450, 65535
    %v2455 = vshrl.u32 %v2450, 16
    %v2456 = vmul.u32 %v2452, %v2454
    %v2457 = vmul.u32 %v2452, %v2455
    %v2458 = vmul.u32 %v2453, %v2454
    %v2459 = vmul.u32 %v2453, %v2455
    %v2460 = vshll.u32 %v2457, 16
    %v2461 = vshrl.u32 %v2457, 16
    %v2462 = vshll.u32 %v2458, 16
    %v2463 = vshrl.u32 %v2458, 16
    %vm2464 = vc.u32 %v2456, %v2460
    %v2465 = vsel %vm2464, 1, 0
    %v2466 = vadd.s32 %v2456, %v2460
    %v2467 = vadd.s32 %v2459, %v2465
    %vm2468 = vc.u32 %v2466, %v2462
    %v2469 = vsel %vm2468, 1, 0
    %v2470 = vadd.s32 %v2466, %v2462
    %v2471 = vadd.s32 %v2467, %v2469
    %v2472 = vadd.s32 %v2471, %v2461
    %v2473 = vadd.s32 %v2472, %v2463
    %v2474 = vand.u32 %v2451, 65535
    %v2475 = vshrl.u32 %v2451, 16
    %v2476 = vand.u32 %v2446, 65535
    %v2477 = vshrl.u32 %v2446, 16
    %v2478 = vmul.u32 %v2474, %v2476
    %v2479 = vmul.u32 %v2474, %v2477
    %v2480 = vmul.u32 %v2475, %v2476
    %v2481 = vmul.u32 %v2475, %v2477
    %v2482 = vshll.u32 %v2479, 16
    %v2483 = vshrl.u32 %v2479, 16
    %v2484 = vshll.u32 %v2480, 16
    %v2485 = vshrl.u32 %v2480, 16
    %vm2486 = vc.u32 %v2478, %v2482
    %v2487 = vsel %vm2486, 1, 0
    %v2488 = vadd.s32 %v2478, %v2482
    %v2489 = vadd.s32 %v2481, %v2487
    %vm2490 = vc.u32 %v2488, %v2484
    %v2491 = vsel %vm2490, 1, 0
    %v2492 = vadd.s32 %v2488, %v2484
    %v2493 = vadd.s32 %v2489, %v2491
    %v2494 = vadd.s32 %v2493, %v2483
    %v2495 = vadd.s32 %v2494, %v2485
    %v2496 = vmul.u32 %v2451, %v2442
    %v2497 = vadd.s32 %v2473, %v2492
    %vm2498 = vc.u32 %v2473, %v2492
    %v2499 = vadd.s32 %v2495, 1
    %v2500 = vsel %vm2498, %v2499, %v2495
    %v2501 = vadd.s32 %v2496, %v2500
    %v2502 = vadd.s32 %v2501, 536870912
    %v2503 = vshrl.u32 %v2502, 30
    %v2504 = vshll.u32 %v2503, 30
    %v2505 = vsub.s32 %v2501, %v2504
    %vm2506 = vcmp.lt.s32.totalorder %v2505, 0
    %v2507 = vsub.s32 0, %v2505
    %v2508 = vsel %vm2506, %v2507, %v2505
    %v2509 = vclz %v2508
    %v2510 = vsub.s32 %v2509, 2
    %vm2511 = vcmp.gt.s32.totalorder 0, %v2510
    %v2512 = vsel %vm2511, 0, %v2510
    %v2513 = vsub.s32 32, %v2512
    %v2514 = vshll.u32 %v2505, %v2512
    %v2515 = vshrl.u32 %v2497, %v2513
    %v2516 = vor.u32 %v2514, %v2515
    %v2517 = vsub.s32 4294967266, %v2512
    %v2518 = vadd.s32 %v2517, 127
    %v2519 = vshll.u32 %v2518, 23
    %v2520 = vor.u32 4788187, %v2519
    %v2521 = vand.u32 2147483647, %v2520
    %v2523 = vcvt.s32.f32 %v2516
    %v2524 = vmul.f32 %v2523, %v2521
    %v2525 = vxor.u32 %v2524, 2147483648
    %v2526 = vsel %vm2405, %v2525, %v2524
    %v2527 = vsub.s32 4, %v2503
    %v2528 = vsel %vm2405, %v2527, %v2503
    %v2529 = vsel %vm2404, %v1469, %v2526
    %v2530 = vsel %vm2404, 0, %v2528
    %v2531 = vmul.f32 %v2529, %v2529
    %v2532 = vmul.f32 %v2531, -0.001358992
    %v2533 = vadd.f32 %v2532, 0.041655596
    %v2534 = vmul.f32 %v2531, %v2533
    %v2535 = vadd.f32 %v2534, -0.4999988
    %v2536 = vmul.f32 %v2531, %v2535
    %v2537 = vadd.f32 1.0, %v2536
    %v2538 = vmul.f32 %v2529, %v2529
    %v2539 = vmul.f32 %v2538, -0.00019511016
    %v2540 = vadd.f32 %v2539, 0.008332121
    %v2541 = vmul.f32 %v2538, %v2540
    %v2542 = vadd.f32 %v2541, -0.16666654
    %v2543 = vmul.f32 %v2538, %v2542
    %v2544 = vadd.f32 %v2543, 1.0
    %v2545 = vmul.f32 %v2544, %v2529
    %vm2546 = vweird.f32 %v1469
    %v2547 = vand.u32 %v2530, 3
    %vm2548 = vcmp.lt.s32.totalorder %v2547, 2
    %vm2549 = vcmp.eq.s32.totalorder %v2547, 0
    %v2550 = vxor.u32 %v2545, 2147483648
    %v2551 = vsel %vm2549, %v2537, %v2550
    %vm2552 = vcmp.eq.s32.totalorder %v2547, 2
    %v2553 = vxor.u32 %v2537, 2147483648
    %v2554 = vsel %vm2552, %v2553, %v2545
    %v2555 = vsel %vm2548, %v2551, %v2554
    %v2556 = vsel %vm2546, nan, %v2555
    %v2557 = vand.u32 2147483647, %v1470
    %vm2558 = vcmp.le.f32.partialorder %v2557, 0.7853982
    %vm2559 = vcmp.lt.s32.totalorder %v1470, 0
    %v2560 = vand.u32 %v1470, 2139095040
    %v2561 = vshrl.u32 %v2560, 23
    %v2562 = vsub.s32 %v2561, 127
    %v2563 = vand.u32 2147483647, %v1470
    %v2564 = vand.u32 %v2563, 8388607
    %v2565 = vor.u32 %v2564, 8388608
    %v2566 = vsub.s32 0, %v2565
    %v2567 = vadd.s32 %v2562, 1
    %vm2568 = vcmp.gt.s32.totalorder %v2567, 0
    %v2569 = vsel %vm2568, %v2567, 0
    %v2570 = vshrl.u32 %v2569, 5
    %v2571 = vand.u32 %v2569, 31
    %v2572 = vsub.s32 32, %v2571
    %v2573 = vshrl.u32 683565275, %v2572
    %v2574 = vshll.u32 683565275, %v2571
    %v2575 = vshrl.u32 2475754826, %v2572
    %v2576 = vor.u32 %v2574, %v2575
    %v2577 = vshll.u32 2475754826, %v2571
    %v2578 = vshrl.u32 2131351028, %v2572
    %v2579 = vor.u32 %v2577, %v2578
    %v2580 = vshll.u32 2131351028, %v2571
    %v2581 = vshrl.u32 2102212464, %v2572
    %v2582 = vor.u32 %v2580, %v2581
    %v2583 = vshll.u32 2102212464, %v2571
    %v2584 = vshrl.u32 920167782, %v2572
    %v2585 = vor.u32 %v2583, %v2584
    %v2586 = vshll.u32 920167782, %v2571
    %v2587 = vshrl.u32 1326507024, %v2572
    %v2588 = vor.u32 %v2586, %v2587
    %vm2589 = vcmp.lt.s32.totalorder %v2570, 1
    %vm2590 = vcmp.lt.s32.totalorder %v2570, 2
    %vm2591 = vcmp.lt.s32.totalorder %v2570, 3
    %vm2592 = vcmp.lt.s32.totalorder %v2570, 4
    %v2593 = vsel %vm2589, %v2573, %v2576
    %v2594 = vsel %vm2592, %v2582, 2102212464
    %v2595 = vsel %vm2591, %v2579, %v2594
    %v2596 = vsel %vm2590, %v2593, %v2595
    %v2597 = vsel %vm2589, %v2576, %v2579
    %v2598 = vsel %vm2592, %v2585, 920167782
    %v2599 = vsel %vm2591, %v2582, %v2598
    %v2600 = vsel %vm2590, %v2597, %v2599
    %v2601 = vsel %vm2589, %v2579, %v2582
    %v2602 = vsel %vm2592, %v2588, 1326507024
    %v2603 = vsel %vm2591, %v2585, %v2602
    %v2604 = vsel %vm2590, %v2601, %v2603
    %v2605 = vshll.u32 %v2565, 8
    %v2606 = vand.u32 %v2605, 65535
    %v2607 = vshrl.u32 %v2605, 16
    %v2608 = vand.u32 %v2604, 65535
    %v2609 = vshrl.u32 %v2604, 16
    %v2610 = vmul.u32 %v2606, %v2608
    %v2611 = vmul.u32 %v2606, %v2609
    %v2612 = vmul.u32 %v2607, %v2608
    %v2613 = vmul.u32 %v2607, %v2609
    %v2614 = vshll.u32 %v2611, 16
    %v2615 = vshrl.u32 %v2611, 16
    %v2616 = vshll.u32 %v2612, 16
    %v2617 = vshrl.u32 %v2612, 16
    %vm2618 = vc.u32 %v2610, %v2614
    %v2619 = vsel %vm2618, 1, 0
    %v2620 = vadd.s32 %v2610, %v2614
    %v2621 = vadd.s32 %v2613, %v2619
    %vm2622 = vc.u32 %v2620, %v2616
    %v2623 = vsel %vm2622, 1, 0
    %v2624 = vadd.s32 %v2620, %v2616
    %v2625 = vadd.s32 %v2621, %v2623
    %v2626 = vadd.s32 %v2625, %v2615
    %v2627 = vadd.s32 %v2626, %v2617
    %v2628 = vand.u32 %v2605, 65535
    %v2629 = vshrl.u32 %v2605, 16
    %v2630 = vand.u32 %v2600, 65535
    %v2631 = vshrl.u32 %v2600, 16
    %v2632 = vmul.u32 %v2628, %v2630
    %v2633 = vmul.u32 %v2628, %v2631
    %v2634 = vmul.u32 %v2629, %v2630
    %v2635 = vmul.u32 %v2629, %v2631
    %v2636 = vshll.u32 %v2633, 16
    %v2637 = vshrl.u32 %v2633, 16
    %v2638 = vshll.u32 %v2634, 16
    %v2639 = vshrl.u32 %v2634, 16
    %vm2640 = vc.u32 %v2632, %v2636
    %v2641 = vsel %vm2640, 1, 0
    %v2642 = vadd.s32 %v2632, %v2636
    %v2643 = vadd.s32 %v2635, %v2641
    %vm2644 = vc.u32 %v2642, %v2638
    %v2645 = vsel %vm2644, 1, 0
    %v2646 = vadd.s32 %v2642, %v2638
    %v2647 = vadd.s32 %v2643, %v2645
    %v2648 = vadd.s32 %v2647, %v2637
    %v2649 = vadd.s32 %v2648, %v2639
    %v2650 = vmul.u32 %v2605, %v2596
    %v2651 = vadd.s32 %v2627, %v2646
    %vm2652 = vc.u32 %v2627, %v2646
    %v2653 = vadd.s32 %v2649, 1
    %v2654 = vsel %vm2652, %v2653, %v2649
    %v2655 = vadd.s32 %v2650, %v2654
    %v2656 = vadd.s32 %v2655, 536870912
    %v2657 = vshrl.u32 %v2656, 30
    %v2658 = vshll.u32 %v2657, 30
    %v2659 = vsub.s32 %v2655, %v2658
    %vm2660 = vcmp.lt.s32.totalorder %v2659, 0
    %v2661 = vsub.s32 0, %v2659
    %v2662 = vsel %vm2660, %v2661, %v2659
    %v2663 = vclz %v2662
    %v2664 = vsub.s32 %v2663, 2
    %vm2665 = vcmp.gt.s32.totalorder 0, %v2664
    %v2666 = vsel %vm2665, 0, %v2664
    %v2667 = vsub.s32 32, %v2666
    %v2668 = vshll.u32 %v2659, %v2666
    %v2669 = vshrl.u32 %v2651, %v2667
    %v2670 = vor.u32 %v2668, %v2669
    %v2671 = vsub.s32 4294967266, %v2666
    %v2672 = vadd.s32 %v2671, 127
    %v2673 = vshll.u32 %v2672, 23
    %v2674 = vor.u32 4788187, %v2673
    %v2675 = vand.u32 2147483647, %v2674
    %v2677 = vcvt.s32.f32 %v2670
    %v2678 = vmul.f32 %v2677, %v2675
    %v2679 = vxor.u32 %v2678, 2147483648
    %v2680 = vsel %vm2559, %v2679, %v2678
    %v2681 = vsub.s32 4, %v2657
    %v2682 = vsel %vm2559, %v2681, %v2657
    %v2683 = vsel %vm2558, %v1470, %v2680
    %v2684 = vsel %vm2558, 0, %v2682
    %v2685 = vmul.f32 %v2683, %v2683
    %v2686 = vmul.f32 %v2685, -0.001358992
    %v2687 = vadd.f32 %v2686, 0.041655596
    %v2688 = vmul.f32 %v2685, %v2687
    %v2689 = vadd.f32 %v2688, -0.4999988
    %v2690 = vmul.f32 %v2685, %v2689
    %v2691 = vadd.f32 1.0, %v2690
    %v2692 = vmul.f32 %v2683, %v2683
    %v2693 = vmul.f32 %v2692, -0.00019511016
    %v2694 = vadd.f32 %v2693, 0.008332121
    %v2695 = vmul.f32 %v2692, %v2694
    %v2696 = vadd.f32 %v2695, -0.16666654
    %v2697 = vmul.f32 %v2692, %v2696
    %v2698 = vadd.f32 %v2697, 1.0
    %v2699 = vmul.f32 %v2698, %v2683
    %vm2700 = vweird.f32 %v1470
    %v2701 = vand.u32 %v2684, 3
    %vm2702 = vcmp.lt.s32.totalorder %v2701, 2
    %vm2703 = vcmp.eq.s32.totalorder %v2701, 0
    %v2704 = vxor.u32 %v2699, 2147483648
    %v2705 = vsel %vm2703, %v2691, %v2704
    %vm2706 = vcmp.eq.s32.totalorder %v2701, 2
    %v2707 = vxor.u32 %v2691, 2147483648
    %v2708 = vsel %vm2706, %v2707, %v2699
    %v2709 = vsel %vm2702, %v2705, %v2708
    %v2710 = vsel %vm2700, nan, %v2709
    %v2711 = vadd.f32 %v1377, %v2248
    %v2712 = vadd.f32 %v1378, %v2402
    %v2713 = vadd.f32 %v1379, %v2556
    %v2714 = vadd.f32 %v1380, %v2710
    %s2715 = scalar_lea.vmem [#allocation5], 4
    %v2716 = vld [vmem:[%s2715] sm:$0x3]
    %v2717 = vperm.slane %v2716, 0
    %v2718 = vlaneseq
    %v2719 = vshrl.u32 %v2718, 7
    %2721 = vset.pattern.permute.xlu0 %v2719
    %2722 = vperm.xlu0 %2721, %v2717
    %v2723 = vpop.permute.xlu0 %2722
    %v2724 = vperm.slane %v2716, 1
    %v2725 = vlaneseq
    %v2726 = vshrl.u32 %v2725, 7
    %2728 = vset.pattern.permute.xlu0 %v2726
    %2729 = vperm.xlu0 %2728, %v2724
    %v2730 = vpop.permute.xlu0 %2729
    %v2731 = vmul.f32 %v2723, %v59
    %v2732 = vmul.f32 %v2730, %v59
    %v2733 = vrot.slane %v2731, 4
    %v2734 = vsel %vm64, 0.0, %v2733
    %v2736 = vunpack.c.l.s4 1983009808
    %v2737 = vunpack.c.0.s8 %v2736
    %v2738 = vperm.slane %v2731, %v2737
    %v2740 = vunpack.c.l.s4 1983009808
    %v2741 = vunpack.c.0.s8 %v2740
    %v2742 = vperm.slane %v2734, %v2741
    %v2743 = vrot.slane %v2732, 4
    %v2744 = vsel %vm64, 0.0, %v2743
    %v2746 = vunpack.c.l.s4 1983009808
    %v2747 = vunpack.c.0.s8 %v2746
    %v2748 = vperm.slane %v2732, %v2747
    %v2750 = vunpack.c.l.s4 1983009808
    %v2751 = vunpack.c.0.s8 %v2750
    %v2752 = vperm.slane %v2744, %v2751
    %v2753 = vrot.slane %v2748, 4
    %v2754 = vsel %vm64, %v2753, %v2738
    %v2755 = vrot.slane %v2738, 4
    %v2756 = vsel %vm64, %v2748, %v2755
    %v2758 = vunpack.c.l.s4 1934713408
    %v2759 = vunpack.c.0.s8 %v2758
    %v2760 = vperm.slane %v2754, %v2759
    %v2762 = vunpack.c.l.s4 1934713408
    %v2763 = vunpack.c.0.s8 %v2762
    %v2764 = vperm.slane %v2756, %v2763
    %v2765 = vrot.slane %v2752, 4
    %v2766 = vsel %vm64, %v2765, %v2742
    %v2767 = vrot.slane %v2742, 4
    %v2768 = vsel %vm64, %v2752, %v2767
    %v2770 = vunpack.c.l.s4 1934713408
    %v2771 = vunpack.c.0.s8 %v2770
    %v2772 = vperm.slane %v2766, %v2771
    %v2774 = vunpack.c.l.s4 1934713408
    %v2775 = vunpack.c.0.s8 %v2774
    %v2776 = vperm.slane %v2768, %v2775
    %v2777 = vrot.slane %v2760, 4
    %v2778 = vsel %vm64, 0.0, %v2777
    %v2779 = vrot.slane %v2764, 4
    %v2780 = vsel %vm64, 0.0, %v2779
    %v2781 = vrot.slane %v2772, 4
    %v2782 = vsel %vm64, 0.0, %v2781
    %v2783 = vrot.slane %v2776, 4
    %v2784 = vsel %vm64, 0.0, %v2783
    %2786 = vrot.lane.b32.xlu0 %v2778, 64
    %v2787 = vpop.permute.xlu0 %2786
    %2790 = vrot.lane.b32.xlu0 %v2780, 64
    %v2791 = vpop.permute.xlu0 %2790
    %2794 = vrot.lane.b32.xlu0 %v2782, 64
    %v2795 = vpop.permute.xlu0 %2794
    %2798 = vrot.lane.b32.xlu0 %v2784, 64
    %v2799 = vpop.permute.xlu0 %2798
    %v2801 = vsel %vm132, %v2760, %v2787
    %v2802 = vsel %vm132, %v2764, %v2791
    %v2803 = vsel %vm132, %v2772, %v2795
    %v2804 = vsel %vm132, %v2776, %v2799
    %v2805 = vand.u32 2147483647, %v2801
    %vm2806 = vcmp.le.f32.partialorder %v2805, 0.7853982
    %vm2807 = vcmp.lt.s32.totalorder %v2801, 0
    %v2808 = vand.u32 %v2801, 2139095040
    %v2809 = vshrl.u32 %v2808, 23
    %v2810 = vsub.s32 %v2809, 127
    %v2811 = vand.u32 2147483647, %v2801
    %v2812 = vand.u32 %v2811, 8388607
    %v2813 = vor.u32 %v2812, 8388608
    %v2814 = vsub.s32 0, %v2813
    %v2815 = vadd.s32 %v2810, 1
    %vm2816 = vcmp.gt.s32.totalorder %v2815, 0
    %v2817 = vsel %vm2816, %v2815, 0
    %v2818 = vshrl.u32 %v2817, 5
    %v2819 = vand.u32 %v2817, 31
    %v2820 = vsub.s32 32, %v2819
    %v2821 = vshrl.u32 683565275, %v2820
    %v2822 = vshll.u32 683565275, %v2819
    %v2823 = vshrl.u32 2475754826, %v2820
    %v2824 = vor.u32 %v2822, %v2823
    %v2825 = vshll.u32 2475754826, %v2819
    %v2826 = vshrl.u32 2131351028, %v2820
    %v2827 = vor.u32 %v2825, %v2826
    %v2828 = vshll.u32 2131351028, %v2819
    %v2829 = vshrl.u32 2102212464, %v2820
    %v2830 = vor.u32 %v2828, %v2829
    %v2831 = vshll.u32 2102212464, %v2819
    %v2832 = vshrl.u32 920167782, %v2820
    %v2833 = vor.u32 %v2831, %v2832
    %v2834 = vshll.u32 920167782, %v2819
    %v2835 = vshrl.u32 1326507024, %v2820
    %v2836 = vor.u32 %v2834, %v2835
    %vm2837 = vcmp.lt.s32.totalorder %v2818, 1
    %vm2838 = vcmp.lt.s32.totalorder %v2818, 2
    %vm2839 = vcmp.lt.s32.totalorder %v2818, 3
    %vm2840 = vcmp.lt.s32.totalorder %v2818, 4
    %v2841 = vsel %vm2837, %v2821, %v2824
    %v2842 = vsel %vm2840, %v2830, 2102212464
    %v2843 = vsel %vm2839, %v2827, %v2842
    %v2844 = vsel %vm2838, %v2841, %v2843
    %v2845 = vsel %vm2837, %v2824, %v2827
    %v2846 = vsel %vm2840, %v2833, 920167782
    %v2847 = vsel %vm2839, %v2830, %v2846
    %v2848 = vsel %vm2838, %v2845, %v2847
    %v2849 = vsel %vm2837, %v2827, %v2830
    %v2850 = vsel %vm2840, %v2836, 1326507024
    %v2851 = vsel %vm2839, %v2833, %v2850
    %v2852 = vsel %vm2838, %v2849, %v2851
    %v2853 = vshll.u32 %v2813, 8
    %v2854 = vand.u32 %v2853, 65535
    %v2855 = vshrl.u32 %v2853, 16
    %v2856 = vand.u32 %v2852, 65535
    %v2857 = vshrl.u32 %v2852, 16
    %v2858 = vmul.u32 %v2854, %v2856
    %v2859 = vmul.u32 %v2854, %v2857
    %v2860 = vmul.u32 %v2855, %v2856
    %v2861 = vmul.u32 %v2855, %v2857
    %v2862 = vshll.u32 %v2859, 16
    %v2863 = vshrl.u32 %v2859, 16
    %v2864 = vshll.u32 %v2860, 16
    %v2865 = vshrl.u32 %v2860, 16
    %vm2866 = vc.u32 %v2858, %v2862
    %v2867 = vsel %vm2866, 1, 0
    %v2868 = vadd.s32 %v2858, %v2862
    %v2869 = vadd.s32 %v2861, %v2867
    %vm2870 = vc.u32 %v2868, %v2864
    %v2871 = vsel %vm2870, 1, 0
    %v2872 = vadd.s32 %v2868, %v2864
    %v2873 = vadd.s32 %v2869, %v2871
    %v2874 = vadd.s32 %v2873, %v2863
    %v2875 = vadd.s32 %v2874, %v2865
    %v2876 = vand.u32 %v2853, 65535
    %v2877 = vshrl.u32 %v2853, 16
    %v2878 = vand.u32 %v2848, 65535
    %v2879 = vshrl.u32 %v2848, 16
    %v2880 = vmul.u32 %v2876, %v2878
    %v2881 = vmul.u32 %v2876, %v2879
    %v2882 = vmul.u32 %v2877, %v2878
    %v2883 = vmul.u32 %v2877, %v2879
    %v2884 = vshll.u32 %v2881, 16
    %v2885 = vshrl.u32 %v2881, 16
    %v2886 = vshll.u32 %v2882, 16
    %v2887 = vshrl.u32 %v2882, 16
    %vm2888 = vc.u32 %v2880, %v2884
    %v2889 = vsel %vm2888, 1, 0
    %v2890 = vadd.s32 %v2880, %v2884
    %v2891 = vadd.s32 %v2883, %v2889
    %vm2892 = vc.u32 %v2890, %v2886
    %v2893 = vsel %vm2892, 1, 0
    %v2894 = vadd.s32 %v2890, %v2886
    %v2895 = vadd.s32 %v2891, %v2893
    %v2896 = vadd.s32 %v2895, %v2885
    %v2897 = vadd.s32 %v2896, %v2887
    %v2898 = vmul.u32 %v2853, %v2844
    %v2899 = vadd.s32 %v2875, %v2894
    %vm2900 = vc.u32 %v2875, %v2894
    %v2901 = vadd.s32 %v2897, 1
    %v2902 = vsel %vm2900, %v2901, %v2897
    %v2903 = vadd.s32 %v2898, %v2902
    %v2904 = vadd.s32 %v2903, 536870912
    %v2905 = vshrl.u32 %v2904, 30
    %v2906 = vshll.u32 %v2905, 30
    %v2907 = vsub.s32 %v2903, %v2906
    %vm2908 = vcmp.lt.s32.totalorder %v2907, 0
    %v2909 = vsub.s32 0, %v2907
    %v2910 = vsel %vm2908, %v2909, %v2907
    %v2911 = vclz %v2910
    %v2912 = vsub.s32 %v2911, 2
    %vm2913 = vcmp.gt.s32.totalorder 0, %v2912
    %v2914 = vsel %vm2913, 0, %v2912
    %v2915 = vsub.s32 32, %v2914
    %v2916 = vshll.u32 %v2907, %v2914
    %v2917 = vshrl.u32 %v2899, %v2915
    %v2918 = vor.u32 %v2916, %v2917
    %v2919 = vsub.s32 4294967266, %v2914
    %v2920 = vadd.s32 %v2919, 127
    %v2921 = vshll.u32 %v2920, 23
    %v2922 = vor.u32 4788187, %v2921
    %v2923 = vand.u32 2147483647, %v2922
    %v2925 = vcvt.s32.f32 %v2918
    %v2926 = vmul.f32 %v2925, %v2923
    %v2927 = vxor.u32 %v2926, 2147483648
    %v2928 = vsel %vm2807, %v2927, %v2926
    %v2929 = vsub.s32 4, %v2905
    %v2930 = vsel %vm2807, %v2929, %v2905
    %v2931 = vsel %vm2806, %v2801, %v2928
    %v2932 = vsel %vm2806, 0, %v2930
    %v2933 = vmul.f32 %v2931, %v2931
    %v2934 = vmul.f32 %v2933, -0.001358992
    %v2935 = vadd.f32 %v2934, 0.041655596
    %v2936 = vmul.f32 %v2933, %v2935
    %v2937 = vadd.f32 %v2936, -0.4999988
    %v2938 = vmul.f32 %v2933, %v2937
    %v2939 = vadd.f32 1.0, %v2938
    %v2940 = vmul.f32 %v2931, %v2931
    %v2941 = vmul.f32 %v2940, -0.00019511016
    %v2942 = vadd.f32 %v2941, 0.008332121
    %v2943 = vmul.f32 %v2940, %v2942
    %v2944 = vadd.f32 %v2943, -0.16666654
    %v2945 = vmul.f32 %v2940, %v2944
    %v2946 = vadd.f32 %v2945, 1.0
    %v2947 = vmul.f32 %v2946, %v2931
    %vm2948 = vweird.f32 %v2801
    %v2949 = vadd.s32 %v2932, 3
    %v2950 = vand.u32 %v2949, 3
    %vm2951 = vcmp.lt.s32.totalorder %v2950, 2
    %vm2952 = vcmp.eq.s32.totalorder %v2950, 0
    %v2953 = vxor.u32 %v2947, 2147483648
    %v2954 = vsel %vm2952, %v2939, %v2953
    %vm2955 = vcmp.eq.s32.totalorder %v2950, 2
    %v2956 = vxor.u32 %v2939, 2147483648
    %v2957 = vsel %vm2955, %v2956, %v2947
    %v2958 = vsel %vm2951, %v2954, %v2957
    %v2959 = vsel %vm2948, nan, %v2958
    %v2960 = vand.u32 2147483647, %v2802
    %vm2961 = vcmp.le.f32.partialorder %v2960, 0.7853982
    %vm2962 = vcmp.lt.s32.totalorder %v2802, 0
    %v2963 = vand.u32 %v2802, 2139095040
    %v2964 = vshrl.u32 %v2963, 23
    %v2965 = vsub.s32 %v2964, 127
    %v2966 = vand.u32 2147483647, %v2802
    %v2967 = vand.u32 %v2966, 8388607
    %v2968 = vor.u32 %v2967, 8388608
    %v2969 = vsub.s32 0, %v2968
    %v2970 = vadd.s32 %v2965, 1
    %vm2971 = vcmp.gt.s32.totalorder %v2970, 0
    %v2972 = vsel %vm2971, %v2970, 0
    %v2973 = vshrl.u32 %v2972, 5
    %v2974 = vand.u32 %v2972, 31
    %v2975 = vsub.s32 32, %v2974
    %v2976 = vshrl.u32 683565275, %v2975
    %v2977 = vshll.u32 683565275, %v2974
    %v2978 = vshrl.u32 2475754826, %v2975
    %v2979 = vor.u32 %v2977, %v2978
    %v2980 = vshll.u32 2475754826, %v2974
    %v2981 = vshrl.u32 2131351028, %v2975
    %v2982 = vor.u32 %v2980, %v2981
    %v2983 = vshll.u32 2131351028, %v2974
    %v2984 = vshrl.u32 2102212464, %v2975
    %v2985 = vor.u32 %v2983, %v2984
    %v2986 = vshll.u32 2102212464, %v2974
    %v2987 = vshrl.u32 920167782, %v2975
    %v2988 = vor.u32 %v2986, %v2987
    %v2989 = vshll.u32 920167782, %v2974
    %v2990 = vshrl.u32 1326507024, %v2975
    %v2991 = vor.u32 %v2989, %v2990
    %vm2992 = vcmp.lt.s32.totalorder %v2973, 1
    %vm2993 = vcmp.lt.s32.totalorder %v2973, 2
    %vm2994 = vcmp.lt.s32.totalorder %v2973, 3
    %vm2995 = vcmp.lt.s32.totalorder %v2973, 4
    %v2996 = vsel %vm2992, %v2976, %v2979
    %v2997 = vsel %vm2995, %v2985, 2102212464
    %v2998 = vsel %vm2994, %v2982, %v2997
    %v2999 = vsel %vm2993, %v2996, %v2998
    %v3000 = vsel %vm2992, %v2979, %v2982
    %v3001 = vsel %vm2995, %v2988, 920167782
    %v3002 = vsel %vm2994, %v2985, %v3001
    %v3003 = vsel %vm2993, %v3000, %v3002
    %v3004 = vsel %vm2992, %v2982, %v2985
    %v3005 = vsel %vm2995, %v2991, 1326507024
    %v3006 = vsel %vm2994, %v2988, %v3005
    %v3007 = vsel %vm2993, %v3004, %v3006
    %v3008 = vshll.u32 %v2968, 8
    %v3009 = vand.u32 %v3008, 65535
    %v3010 = vshrl.u32 %v3008, 16
    %v3011 = vand.u32 %v3007, 65535
    %v3012 = vshrl.u32 %v3007, 16
    %v3013 = vmul.u32 %v3009, %v3011
    %v3014 = vmul.u32 %v3009, %v3012
    %v3015 = vmul.u32 %v3010, %v3011
    %v3016 = vmul.u32 %v3010, %v3012
    %v3017 = vshll.u32 %v3014, 16
    %v3018 = vshrl.u32 %v3014, 16
    %v3019 = vshll.u32 %v3015, 16
    %v3020 = vshrl.u32 %v3015, 16
    %vm3021 = vc.u32 %v3013, %v3017
    %v3022 = vsel %vm3021, 1, 0
    %v3023 = vadd.s32 %v3013, %v3017
    %v3024 = vadd.s32 %v3016, %v3022
    %vm3025 = vc.u32 %v3023, %v3019
    %v3026 = vsel %vm3025, 1, 0
    %v3027 = vadd.s32 %v3023, %v3019
    %v3028 = vadd.s32 %v3024, %v3026
    %v3029 = vadd.s32 %v3028, %v3018
    %v3030 = vadd.s32 %v3029, %v3020
    %v3031 = vand.u32 %v3008, 65535
    %v3032 = vshrl.u32 %v3008, 16
    %v3033 = vand.u32 %v3003, 65535
    %v3034 = vshrl.u32 %v3003, 16
    %v3035 = vmul.u32 %v3031, %v3033
    %v3036 = vmul.u32 %v3031, %v3034
    %v3037 = vmul.u32 %v3032, %v3033
    %v3038 = vmul.u32 %v3032, %v3034
    %v3039 = vshll.u32 %v3036, 16
    %v3040 = vshrl.u32 %v3036, 16
    %v3041 = vshll.u32 %v3037, 16
    %v3042 = vshrl.u32 %v3037, 16
    %vm3043 = vc.u32 %v3035, %v3039
    %v3044 = vsel %vm3043, 1, 0
    %v3045 = vadd.s32 %v3035, %v3039
    %v3046 = vadd.s32 %v3038, %v3044
    %vm3047 = vc.u32 %v3045, %v3041
    %v3048 = vsel %vm3047, 1, 0
    %v3049 = vadd.s32 %v3045, %v3041
    %v3050 = vadd.s32 %v3046, %v3048
    %v3051 = vadd.s32 %v3050, %v3040
    %v3052 = vadd.s32 %v3051, %v3042
    %v3053 = vmul.u32 %v3008, %v2999
    %v3054 = vadd.s32 %v3030, %v3049
    %vm3055 = vc.u32 %v3030, %v3049
    %v3056 = vadd.s32 %v3052, 1
    %v3057 = vsel %vm3055, %v3056, %v3052
    %v3058 = vadd.s32 %v3053, %v3057
    %v3059 = vadd.s32 %v3058, 536870912
    %v3060 = vshrl.u32 %v3059, 30
    %v3061 = vshll.u32 %v3060, 30
    %v3062 = vsub.s32 %v3058, %v3061
    %vm3063 = vcmp.lt.s32.totalorder %v3062, 0
    %v3064 = vsub.s32 0, %v3062
    %v3065 = vsel %vm3063, %v3064, %v3062
    %v3066 = vclz %v3065
    %v3067 = vsub.s32 %v3066, 2
    %vm3068 = vcmp.gt.s32.totalorder 0, %v3067
    %v3069 = vsel %vm3068, 0, %v3067
    %v3070 = vsub.s32 32, %v3069
    %v3071 = vshll.u32 %v3062, %v3069
    %v3072 = vshrl.u32 %v3054, %v3070
    %v3073 = vor.u32 %v3071, %v3072
    %v3074 = vsub.s32 4294967266, %v3069
    %v3075 = vadd.s32 %v3074, 127
    %v3076 = vshll.u32 %v3075, 23
    %v3077 = vor.u32 4788187, %v3076
    %v3078 = vand.u32 2147483647, %v3077
    %v3080 = vcvt.s32.f32 %v3073
    %v3081 = vmul.f32 %v3080, %v3078
    %v3082 = vxor.u32 %v3081, 2147483648
    %v3083 = vsel %vm2962, %v3082, %v3081
    %v3084 = vsub.s32 4, %v3060
    %v3085 = vsel %vm2962, %v3084, %v3060
    %v3086 = vsel %vm2961, %v2802, %v3083
    %v3087 = vsel %vm2961, 0, %v3085
    %v3088 = vmul.f32 %v3086, %v3086
    %v3089 = vmul.f32 %v3088, -0.001358992
    %v3090 = vadd.f32 %v3089, 0.041655596
    %v3091 = vmul.f32 %v3088, %v3090
    %v3092 = vadd.f32 %v3091, -0.4999988
    %v3093 = vmul.f32 %v3088, %v3092
    %v3094 = vadd.f32 1.0, %v3093
    %v3095 = vmul.f32 %v3086, %v3086
    %v3096 = vmul.f32 %v3095, -0.00019511016
    %v3097 = vadd.f32 %v3096, 0.008332121
    %v3098 = vmul.f32 %v3095, %v3097
    %v3099 = vadd.f32 %v3098, -0.16666654
    %v3100 = vmul.f32 %v3095, %v3099
    %v3101 = vadd.f32 %v3100, 1.0
    %v3102 = vmul.f32 %v3101, %v3086
    %vm3103 = vweird.f32 %v2802
    %v3104 = vadd.s32 %v3087, 3
    %v3105 = vand.u32 %v3104, 3
    %vm3106 = vcmp.lt.s32.totalorder %v3105, 2
    %vm3107 = vcmp.eq.s32.totalorder %v3105, 0
    %v3108 = vxor.u32 %v3102, 2147483648
    %v3109 = vsel %vm3107, %v3094, %v3108
    %vm3110 = vcmp.eq.s32.totalorder %v3105, 2
    %v3111 = vxor.u32 %v3094, 2147483648
    %v3112 = vsel %vm3110, %v3111, %v3102
    %v3113 = vsel %vm3106, %v3109, %v3112
    %v3114 = vsel %vm3103, nan, %v3113
    %v3115 = vand.u32 2147483647, %v2803
    %vm3116 = vcmp.le.f32.partialorder %v3115, 0.7853982
    %vm3117 = vcmp.lt.s32.totalorder %v2803, 0
    %v3118 = vand.u32 %v2803, 2139095040
    %v3119 = vshrl.u32 %v3118, 23
    %v3120 = vsub.s32 %v3119, 127
    %v3121 = vand.u32 2147483647, %v2803
    %v3122 = vand.u32 %v3121, 8388607
    %v3123 = vor.u32 %v3122, 8388608
    %v3124 = vsub.s32 0, %v3123
    %v3125 = vadd.s32 %v3120, 1
    %vm3126 = vcmp.gt.s32.totalorder %v3125, 0
    %v3127 = vsel %vm3126, %v3125, 0
    %v3128 = vshrl.u32 %v3127, 5
    %v3129 = vand.u32 %v3127, 31
    %v3130 = vsub.s32 32, %v3129
    %v3131 = vshrl.u32 683565275, %v3130
    %v3132 = vshll.u32 683565275, %v3129
    %v3133 = vshrl.u32 2475754826, %v3130
    %v3134 = vor.u32 %v3132, %v3133
    %v3135 = vshll.u32 2475754826, %v3129
    %v3136 = vshrl.u32 2131351028, %v3130
    %v3137 = vor.u32 %v3135, %v3136
    %v3138 = vshll.u32 2131351028, %v3129
    %v3139 = vshrl.u32 2102212464, %v3130
    %v3140 = vor.u32 %v3138, %v3139
    %v3141 = vshll.u32 2102212464, %v3129
    %v3142 = vshrl.u32 920167782, %v3130
    %v3143 = vor.u32 %v3141, %v3142
    %v3144 = vshll.u32 920167782, %v3129
    %v3145 = vshrl.u32 1326507024, %v3130
    %v3146 = vor.u32 %v3144, %v3145
    %vm3147 = vcmp.lt.s32.totalorder %v3128, 1
    %vm3148 = vcmp.lt.s32.totalorder %v3128, 2
    %vm3149 = vcmp.lt.s32.totalorder %v3128, 3
    %vm3150 = vcmp.lt.s32.totalorder %v3128, 4
    %v3151 = vsel %vm3147, %v3131, %v3134
    %v3152 = vsel %vm3150, %v3140, 2102212464
    %v3153 = vsel %vm3149, %v3137, %v3152
    %v3154 = vsel %vm3148, %v3151, %v3153
    %v3155 = vsel %vm3147, %v3134, %v3137
    %v3156 = vsel %vm3150, %v3143, 920167782
    %v3157 = vsel %vm3149, %v3140, %v3156
    %v3158 = vsel %vm3148, %v3155, %v3157
    %v3159 = vsel %vm3147, %v3137, %v3140
    %v3160 = vsel %vm3150, %v3146, 1326507024
    %v3161 = vsel %vm3149, %v3143, %v3160
    %v3162 = vsel %vm3148, %v3159, %v3161
    %v3163 = vshll.u32 %v3123, 8
    %v3164 = vand.u32 %v3163, 65535
    %v3165 = vshrl.u32 %v3163, 16
    %v3166 = vand.u32 %v3162, 65535
    %v3167 = vshrl.u32 %v3162, 16
    %v3168 = vmul.u32 %v3164, %v3166
    %v3169 = vmul.u32 %v3164, %v3167
    %v3170 = vmul.u32 %v3165, %v3166
    %v3171 = vmul.u32 %v3165, %v3167
    %v3172 = vshll.u32 %v3169, 16
    %v3173 = vshrl.u32 %v3169, 16
    %v3174 = vshll.u32 %v3170, 16
    %v3175 = vshrl.u32 %v3170, 16
    %vm3176 = vc.u32 %v3168, %v3172
    %v3177 = vsel %vm3176, 1, 0
    %v3178 = vadd.s32 %v3168, %v3172
    %v3179 = vadd.s32 %v3171, %v3177
    %vm3180 = vc.u32 %v3178, %v3174
    %v3181 = vsel %vm3180, 1, 0
    %v3182 = vadd.s32 %v3178, %v3174
    %v3183 = vadd.s32 %v3179, %v3181
    %v3184 = vadd.s32 %v3183, %v3173
    %v3185 = vadd.s32 %v3184, %v3175
    %v3186 = vand.u32 %v3163, 65535
    %v3187 = vshrl.u32 %v3163, 16
    %v3188 = vand.u32 %v3158, 65535
    %v3189 = vshrl.u32 %v3158, 16
    %v3190 = vmul.u32 %v3186, %v3188
    %v3191 = vmul.u32 %v3186, %v3189
    %v3192 = vmul.u32 %v3187, %v3188
    %v3193 = vmul.u32 %v3187, %v3189
    %v3194 = vshll.u32 %v3191, 16
    %v3195 = vshrl.u32 %v3191, 16
    %v3196 = vshll.u32 %v3192, 16
    %v3197 = vshrl.u32 %v3192, 16
    %vm3198 = vc.u32 %v3190, %v3194
    %v3199 = vsel %vm3198, 1, 0
    %v3200 = vadd.s32 %v3190, %v3194
    %v3201 = vadd.s32 %v3193, %v3199
    %vm3202 = vc.u32 %v3200, %v3196
    %v3203 = vsel %vm3202, 1, 0
    %v3204 = vadd.s32 %v3200, %v3196
    %v3205 = vadd.s32 %v3201, %v3203
    %v3206 = vadd.s32 %v3205, %v3195
    %v3207 = vadd.s32 %v3206, %v3197
    %v3208 = vmul.u32 %v3163, %v3154
    %v3209 = vadd.s32 %v3185, %v3204
    %vm3210 = vc.u32 %v3185, %v3204
    %v3211 = vadd.s32 %v3207, 1
    %v3212 = vsel %vm3210, %v3211, %v3207
    %v3213 = vadd.s32 %v3208, %v3212
    %v3214 = vadd.s32 %v3213, 536870912
    %v3215 = vshrl.u32 %v3214, 30
    %v3216 = vshll.u32 %v3215, 30
    %v3217 = vsub.s32 %v3213, %v3216
    %vm3218 = vcmp.lt.s32.totalorder %v3217, 0
    %v3219 = vsub.s32 0, %v3217
    %v3220 = vsel %vm3218, %v3219, %v3217
    %v3221 = vclz %v3220
    %v3222 = vsub.s32 %v3221, 2
    %vm3223 = vcmp.gt.s32.totalorder 0, %v3222
    %v3224 = vsel %vm3223, 0, %v3222
    %v3225 = vsub.s32 32, %v3224
    %v3226 = vshll.u32 %v3217, %v3224
    %v3227 = vshrl.u32 %v3209, %v3225
    %v3228 = vor.u32 %v3226, %v3227
    %v3229 = vsub.s32 4294967266, %v3224
    %v3230 = vadd.s32 %v3229, 127
    %v3231 = vshll.u32 %v3230, 23
    %v3232 = vor.u32 4788187, %v3231
    %v3233 = vand.u32 2147483647, %v3232
    %v3235 = vcvt.s32.f32 %v3228
    %v3236 = vmul.f32 %v3235, %v3233
    %v3237 = vxor.u32 %v3236, 2147483648
    %v3238 = vsel %vm3117, %v3237, %v3236
    %v3239 = vsub.s32 4, %v3215
    %v3240 = vsel %vm3117, %v3239, %v3215
    %v3241 = vsel %vm3116, %v2803, %v3238
    %v3242 = vsel %vm3116, 0, %v3240
    %v3243 = vmul.f32 %v3241, %v3241
    %v3244 = vmul.f32 %v3243, -0.001358992
    %v3245 = vadd.f32 %v3244, 0.041655596
    %v3246 = vmul.f32 %v3243, %v3245
    %v3247 = vadd.f32 %v3246, -0.4999988
    %v3248 = vmul.f32 %v3243, %v3247
    %v3249 = vadd.f32 1.0, %v3248
    %v3250 = vmul.f32 %v3241, %v3241
    %v3251 = vmul.f32 %v3250, -0.00019511016
    %v3252 = vadd.f32 %v3251, 0.008332121
    %v3253 = vmul.f32 %v3250, %v3252
    %v3254 = vadd.f32 %v3253, -0.16666654
    %v3255 = vmul.f32 %v3250, %v3254
    %v3256 = vadd.f32 %v3255, 1.0
    %v3257 = vmul.f32 %v3256, %v3241
    %vm3258 = vweird.f32 %v2803
    %v3259 = vadd.s32 %v3242, 3
    %v3260 = vand.u32 %v3259, 3
    %vm3261 = vcmp.lt.s32.totalorder %v3260, 2
    %vm3262 = vcmp.eq.s32.totalorder %v3260, 0
    %v3263 = vxor.u32 %v3257, 2147483648
    %v3264 = vsel %vm3262, %v3249, %v3263
    %vm3265 = vcmp.eq.s32.totalorder %v3260, 2
    %v3266 = vxor.u32 %v3249, 2147483648
    %v3267 = vsel %vm3265, %v3266, %v3257
    %v3268 = vsel %vm3261, %v3264, %v3267
    %v3269 = vsel %vm3258, nan, %v3268
    %v3270 = vand.u32 2147483647, %v2804
    %vm3271 = vcmp.le.f32.partialorder %v3270, 0.7853982
    %vm3272 = vcmp.lt.s32.totalorder %v2804, 0
    %v3273 = vand.u32 %v2804, 2139095040
    %v3274 = vshrl.u32 %v3273, 23
    %v3275 = vsub.s32 %v3274, 127
    %v3276 = vand.u32 2147483647, %v2804
    %v3277 = vand.u32 %v3276, 8388607
    %v3278 = vor.u32 %v3277, 8388608
    %v3279 = vsub.s32 0, %v3278
    %v3280 = vadd.s32 %v3275, 1
    %vm3281 = vcmp.gt.s32.totalorder %v3280, 0
    %v3282 = vsel %vm3281, %v3280, 0
    %v3283 = vshrl.u32 %v3282, 5
    %v3284 = vand.u32 %v3282, 31
    %v3285 = vsub.s32 32, %v3284
    %v3286 = vshrl.u32 683565275, %v3285
    %v3287 = vshll.u32 683565275, %v3284
    %v3288 = vshrl.u32 2475754826, %v3285
    %v3289 = vor.u32 %v3287, %v3288
    %v3290 = vshll.u32 2475754826, %v3284
    %v3291 = vshrl.u32 2131351028, %v3285
    %v3292 = vor.u32 %v3290, %v3291
    %v3293 = vshll.u32 2131351028, %v3284
    %v3294 = vshrl.u32 2102212464, %v3285
    %v3295 = vor.u32 %v3293, %v3294
    %v3296 = vshll.u32 2102212464, %v3284
    %v3297 = vshrl.u32 920167782, %v3285
    %v3298 = vor.u32 %v3296, %v3297
    %v3299 = vshll.u32 920167782, %v3284
    %v3300 = vshrl.u32 1326507024, %v3285
    %v3301 = vor.u32 %v3299, %v3300
    %vm3302 = vcmp.lt.s32.totalorder %v3283, 1
    %vm3303 = vcmp.lt.s32.totalorder %v3283, 2
    %vm3304 = vcmp.lt.s32.totalorder %v3283, 3
    %vm3305 = vcmp.lt.s32.totalorder %v3283, 4
    %v3306 = vsel %vm3302, %v3286, %v3289
    %v3307 = vsel %vm3305, %v3295, 2102212464
    %v3308 = vsel %vm3304, %v3292, %v3307
    %v3309 = vsel %vm3303, %v3306, %v3308
    %v3310 = vsel %vm3302, %v3289, %v3292
    %v3311 = vsel %vm3305, %v3298, 920167782
    %v3312 = vsel %vm3304, %v3295, %v3311
    %v3313 = vsel %vm3303, %v3310, %v3312
    %v3314 = vsel %vm3302, %v3292, %v3295
    %v3315 = vsel %vm3305, %v3301, 1326507024
    %v3316 = vsel %vm3304, %v3298, %v3315
    %v3317 = vsel %vm3303, %v3314, %v3316
    %v3318 = vshll.u32 %v3278, 8
    %v3319 = vand.u32 %v3318, 65535
    %v3320 = vshrl.u32 %v3318, 16
    %v3321 = vand.u32 %v3317, 65535
    %v3322 = vshrl.u32 %v3317, 16
    %v3323 = vmul.u32 %v3319, %v3321
    %v3324 = vmul.u32 %v3319, %v3322
    %v3325 = vmul.u32 %v3320, %v3321
    %v3326 = vmul.u32 %v3320, %v3322
    %v3327 = vshll.u32 %v3324, 16
    %v3328 = vshrl.u32 %v3324, 16
    %v3329 = vshll.u32 %v3325, 16
    %v3330 = vshrl.u32 %v3325, 16
    %vm3331 = vc.u32 %v3323, %v3327
    %v3332 = vsel %vm3331, 1, 0
    %v3333 = vadd.s32 %v3323, %v3327
    %v3334 = vadd.s32 %v3326, %v3332
    %vm3335 = vc.u32 %v3333, %v3329
    %v3336 = vsel %vm3335, 1, 0
    %v3337 = vadd.s32 %v3333, %v3329
    %v3338 = vadd.s32 %v3334, %v3336
    %v3339 = vadd.s32 %v3338, %v3328
    %v3340 = vadd.s32 %v3339, %v3330
    %v3341 = vand.u32 %v3318, 65535
    %v3342 = vshrl.u32 %v3318, 16
    %v3343 = vand.u32 %v3313, 65535
    %v3344 = vshrl.u32 %v3313, 16
    %v3345 = vmul.u32 %v3341, %v3343
    %v3346 = vmul.u32 %v3341, %v3344
    %v3347 = vmul.u32 %v3342, %v3343
    %v3348 = vmul.u32 %v3342, %v3344
    %v3349 = vshll.u32 %v3346, 16
    %v3350 = vshrl.u32 %v3346, 16
    %v3351 = vshll.u32 %v3347, 16
    %v3352 = vshrl.u32 %v3347, 16
    %vm3353 = vc.u32 %v3345, %v3349
    %v3354 = vsel %vm3353, 1, 0
    %v3355 = vadd.s32 %v3345, %v3349
    %v3356 = vadd.s32 %v3348, %v3354
    %vm3357 = vc.u32 %v3355, %v3351
    %v3358 = vsel %vm3357, 1, 0
    %v3359 = vadd.s32 %v3355, %v3351
    %v3360 = vadd.s32 %v3356, %v3358
    %v3361 = vadd.s32 %v3360, %v3350
    %v3362 = vadd.s32 %v3361, %v3352
    %v3363 = vmul.u32 %v3318, %v3309
    %v3364 = vadd.s32 %v3340, %v3359
    %vm3365 = vc.u32 %v3340, %v3359
    %v3366 = vadd.s32 %v3362, 1
    %v3367 = vsel %vm3365, %v3366, %v3362
    %v3368 = vadd.s32 %v3363, %v3367
    %v3369 = vadd.s32 %v3368, 536870912
    %v3370 = vshrl.u32 %v3369, 30
    %v3371 = vshll.u32 %v3370, 30
    %v3372 = vsub.s32 %v3368, %v3371
    %vm3373 = vcmp.lt.s32.totalorder %v3372, 0
    %v3374 = vsub.s32 0, %v3372
    %v3375 = vsel %vm3373, %v3374, %v3372
    %v3376 = vclz %v3375
    %v3377 = vsub.s32 %v3376, 2
    %vm3378 = vcmp.gt.s32.totalorder 0, %v3377
    %v3379 = vsel %vm3378, 0, %v3377
    %v3380 = vsub.s32 32, %v3379
    %v3381 = vshll.u32 %v3372, %v3379
    %v3382 = vshrl.u32 %v3364, %v3380
    %v3383 = vor.u32 %v3381, %v3382
    %v3384 = vsub.s32 4294967266, %v3379
    %v3385 = vadd.s32 %v3384, 127
    %v3386 = vshll.u32 %v3385, 23
    %v3387 = vor.u32 4788187, %v3386
    %v3388 = vand.u32 2147483647, %v3387
    %v3390 = vcvt.s32.f32 %v3383
    %v3391 = vmul.f32 %v3390, %v3388
    %v3392 = vxor.u32 %v3391, 2147483648
    %v3393 = vsel %vm3272, %v3392, %v3391
    %v3394 = vsub.s32 4, %v3370
    %v3395 = vsel %vm3272, %v3394, %v3370
    %v3396 = vsel %vm3271, %v2804, %v3393
    %v3397 = vsel %vm3271, 0, %v3395
    %v3398 = vmul.f32 %v3396, %v3396
    %v3399 = vmul.f32 %v3398, -0.001358992
    %v3400 = vadd.f32 %v3399, 0.041655596
    %v3401 = vmul.f32 %v3398, %v3400
    %v3402 = vadd.f32 %v3401, -0.4999988
    %v3403 = vmul.f32 %v3398, %v3402
    %v3404 = vadd.f32 1.0, %v3403
    %v3405 = vmul.f32 %v3396, %v3396
    %v3406 = vmul.f32 %v3405, -0.00019511016
    %v3407 = vadd.f32 %v3406, 0.008332121
    %v3408 = vmul.f32 %v3405, %v3407
    %v3409 = vadd.f32 %v3408, -0.16666654
    %v3410 = vmul.f32 %v3405, %v3409
    %v3411 = vadd.f32 %v3410, 1.0
    %v3412 = vmul.f32 %v3411, %v3396
    %vm3413 = vweird.f32 %v2804
    %v3414 = vadd.s32 %v3397, 3
    %v3415 = vand.u32 %v3414, 3
    %vm3416 = vcmp.lt.s32.totalorder %v3415, 2
    %vm3417 = vcmp.eq.s32.totalorder %v3415, 0
    %v3418 = vxor.u32 %v3412, 2147483648
    %v3419 = vsel %vm3417, %v3404, %v3418
    %vm3420 = vcmp.eq.s32.totalorder %v3415, 2
    %v3421 = vxor.u32 %v3404, 2147483648
    %v3422 = vsel %vm3420, %v3421, %v3412
    %v3423 = vsel %vm3416, %v3419, %v3422
    %v3424 = vsel %vm3413, nan, %v3423
    %v3425 = vadd.f32 %v2091, %v2959
    %v3426 = vadd.f32 %v2092, %v3114
    %v3427 = vadd.f32 %v2093, %v3269
    %v3428 = vadd.f32 %v2094, %v3424
    %v3429 = vand.u32 2147483647, %v2801
    %vm3430 = vcmp.le.f32.partialorder %v3429, 0.7853982
    %vm3431 = vcmp.lt.s32.totalorder %v2801, 0
    %v3432 = vand.u32 %v2801, 2139095040
    %v3433 = vshrl.u32 %v3432, 23
    %v3434 = vsub.s32 %v3433, 127
    %v3435 = vand.u32 2147483647, %v2801
    %v3436 = vand.u32 %v3435, 8388607
    %v3437 = vor.u32 %v3436, 8388608
    %v3438 = vsub.s32 0, %v3437
    %v3439 = vadd.s32 %v3434, 1
    %vm3440 = vcmp.gt.s32.totalorder %v3439, 0
    %v3441 = vsel %vm3440, %v3439, 0
    %v3442 = vshrl.u32 %v3441, 5
    %v3443 = vand.u32 %v3441, 31
    %v3444 = vsub.s32 32, %v3443
    %v3445 = vshrl.u32 683565275, %v3444
    %v3446 = vshll.u32 683565275, %v3443
    %v3447 = vshrl.u32 2475754826, %v3444
    %v3448 = vor.u32 %v3446, %v3447
    %v3449 = vshll.u32 2475754826, %v3443
    %v3450 = vshrl.u32 2131351028, %v3444
    %v3451 = vor.u32 %v3449, %v3450
    %v3452 = vshll.u32 2131351028, %v3443
    %v3453 = vshrl.u32 2102212464, %v3444
    %v3454 = vor.u32 %v3452, %v3453
    %v3455 = vshll.u32 2102212464, %v3443
    %v3456 = vshrl.u32 920167782, %v3444
    %v3457 = vor.u32 %v3455, %v3456
    %v3458 = vshll.u32 920167782, %v3443
    %v3459 = vshrl.u32 1326507024, %v3444
    %v3460 = vor.u32 %v3458, %v3459
    %vm3461 = vcmp.lt.s32.totalorder %v3442, 1
    %vm3462 = vcmp.lt.s32.totalorder %v3442, 2
    %vm3463 = vcmp.lt.s32.totalorder %v3442, 3
    %vm3464 = vcmp.lt.s32.totalorder %v3442, 4
    %v3465 = vsel %vm3461, %v3445, %v3448
    %v3466 = vsel %vm3464, %v3454, 2102212464
    %v3467 = vsel %vm3463, %v3451, %v3466
    %v3468 = vsel %vm3462, %v3465, %v3467
    %v3469 = vsel %vm3461, %v3448, %v3451
    %v3470 = vsel %vm3464, %v3457, 920167782
    %v3471 = vsel %vm3463, %v3454, %v3470
    %v3472 = vsel %vm3462, %v3469, %v3471
    %v3473 = vsel %vm3461, %v3451, %v3454
    %v3474 = vsel %vm3464, %v3460, 1326507024
    %v3475 = vsel %vm3463, %v3457, %v3474
    %v3476 = vsel %vm3462, %v3473, %v3475
    %v3477 = vshll.u32 %v3437, 8
    %v3478 = vand.u32 %v3477, 65535
    %v3479 = vshrl.u32 %v3477, 16
    %v3480 = vand.u32 %v3476, 65535
    %v3481 = vshrl.u32 %v3476, 16
    %v3482 = vmul.u32 %v3478, %v3480
    %v3483 = vmul.u32 %v3478, %v3481
    %v3484 = vmul.u32 %v3479, %v3480
    %v3485 = vmul.u32 %v3479, %v3481
    %v3486 = vshll.u32 %v3483, 16
    %v3487 = vshrl.u32 %v3483, 16
    %v3488 = vshll.u32 %v3484, 16
    %v3489 = vshrl.u32 %v3484, 16
    %vm3490 = vc.u32 %v3482, %v3486
    %v3491 = vsel %vm3490, 1, 0
    %v3492 = vadd.s32 %v3482, %v3486
    %v3493 = vadd.s32 %v3485, %v3491
    %vm3494 = vc.u32 %v3492, %v3488
    %v3495 = vsel %vm3494, 1, 0
    %v3496 = vadd.s32 %v3492, %v3488
    %v3497 = vadd.s32 %v3493, %v3495
    %v3498 = vadd.s32 %v3497, %v3487
    %v3499 = vadd.s32 %v3498, %v3489
    %v3500 = vand.u32 %v3477, 65535
    %v3501 = vshrl.u32 %v3477, 16
    %v3502 = vand.u32 %v3472, 65535
    %v3503 = vshrl.u32 %v3472, 16
    %v3504 = vmul.u32 %v3500, %v3502
    %v3505 = vmul.u32 %v3500, %v3503
    %v3506 = vmul.u32 %v3501, %v3502
    %v3507 = vmul.u32 %v3501, %v3503
    %v3508 = vshll.u32 %v3505, 16
    %v3509 = vshrl.u32 %v3505, 16
    %v3510 = vshll.u32 %v3506, 16
    %v3511 = vshrl.u32 %v3506, 16
    %vm3512 = vc.u32 %v3504, %v3508
    %v3513 = vsel %vm3512, 1, 0
    %v3514 = vadd.s32 %v3504, %v3508
    %v3515 = vadd.s32 %v3507, %v3513
    %vm3516 = vc.u32 %v3514, %v3510
    %v3517 = vsel %vm3516, 1, 0
    %v3518 = vadd.s32 %v3514, %v3510
    %v3519 = vadd.s32 %v3515, %v3517
    %v3520 = vadd.s32 %v3519, %v3509
    %v3521 = vadd.s32 %v3520, %v3511
    %v3522 = vmul.u32 %v3477, %v3468
    %v3523 = vadd.s32 %v3499, %v3518
    %vm3524 = vc.u32 %v3499, %v3518
    %v3525 = vadd.s32 %v3521, 1
    %v3526 = vsel %vm3524, %v3525, %v3521
    %v3527 = vadd.s32 %v3522, %v3526
    %v3528 = vadd.s32 %v3527, 536870912
    %v3529 = vshrl.u32 %v3528, 30
    %v3530 = vshll.u32 %v3529, 30
    %v3531 = vsub.s32 %v3527, %v3530
    %vm3532 = vcmp.lt.s32.totalorder %v3531, 0
    %v3533 = vsub.s32 0, %v3531
    %v3534 = vsel %vm3532, %v3533, %v3531
    %v3535 = vclz %v3534
    %v3536 = vsub.s32 %v3535, 2
    %vm3537 = vcmp.gt.s32.totalorder 0, %v3536
    %v3538 = vsel %vm3537, 0, %v3536
    %v3539 = vsub.s32 32, %v3538
    %v3540 = vshll.u32 %v3531, %v3538
    %v3541 = vshrl.u32 %v3523, %v3539
    %v3542 = vor.u32 %v3540, %v3541
    %v3543 = vsub.s32 4294967266, %v3538
    %v3544 = vadd.s32 %v3543, 127
    %v3545 = vshll.u32 %v3544, 23
    %v3546 = vor.u32 4788187, %v3545
    %v3547 = vand.u32 2147483647, %v3546
    %v3549 = vcvt.s32.f32 %v3542
    %v3550 = vmul.f32 %v3549, %v3547
    %v3551 = vxor.u32 %v3550, 2147483648
    %v3552 = vsel %vm3431, %v3551, %v3550
    %v3553 = vsub.s32 4, %v3529
    %v3554 = vsel %vm3431, %v3553, %v3529
    %v3555 = vsel %vm3430, %v2801, %v3552
    %v3556 = vsel %vm3430, 0, %v3554
    %v3557 = vmul.f32 %v3555, %v3555
    %v3558 = vmul.f32 %v3557, -0.001358992
    %v3559 = vadd.f32 %v3558, 0.041655596
    %v3560 = vmul.f32 %v3557, %v3559
    %v3561 = vadd.f32 %v3560, -0.4999988
    %v3562 = vmul.f32 %v3557, %v3561
    %v3563 = vadd.f32 1.0, %v3562
    %v3564 = vmul.f32 %v3555, %v3555
    %v3565 = vmul.f32 %v3564, -0.00019511016
    %v3566 = vadd.f32 %v3565, 0.008332121
    %v3567 = vmul.f32 %v3564, %v3566
    %v3568 = vadd.f32 %v3567, -0.16666654
    %v3569 = vmul.f32 %v3564, %v3568
    %v3570 = vadd.f32 %v3569, 1.0
    %v3571 = vmul.f32 %v3570, %v3555
    %vm3572 = vweird.f32 %v2801
    %v3573 = vand.u32 %v3556, 3
    %vm3574 = vcmp.lt.s32.totalorder %v3573, 2
    %vm3575 = vcmp.eq.s32.totalorder %v3573, 0
    %v3576 = vxor.u32 %v3571, 2147483648
    %v3577 = vsel %vm3575, %v3563, %v3576
    %vm3578 = vcmp.eq.s32.totalorder %v3573, 2
    %v3579 = vxor.u32 %v3563, 2147483648
    %v3580 = vsel %vm3578, %v3579, %v3571
    %v3581 = vsel %vm3574, %v3577, %v3580
    %v3582 = vsel %vm3572, nan, %v3581
    %v3583 = vand.u32 2147483647, %v2802
    %vm3584 = vcmp.le.f32.partialorder %v3583, 0.7853982
    %vm3585 = vcmp.lt.s32.totalorder %v2802, 0
    %v3586 = vand.u32 %v2802, 2139095040
    %v3587 = vshrl.u32 %v3586, 23
    %v3588 = vsub.s32 %v3587, 127
    %v3589 = vand.u32 2147483647, %v2802
    %v3590 = vand.u32 %v3589, 8388607
    %v3591 = vor.u32 %v3590, 8388608
    %v3592 = vsub.s32 0, %v3591
    %v3593 = vadd.s32 %v3588, 1
    %vm3594 = vcmp.gt.s32.totalorder %v3593, 0
    %v3595 = vsel %vm3594, %v3593, 0
    %v3596 = vshrl.u32 %v3595, 5
    %v3597 = vand.u32 %v3595, 31
    %v3598 = vsub.s32 32, %v3597
    %v3599 = vshrl.u32 683565275, %v3598
    %v3600 = vshll.u32 683565275, %v3597
    %v3601 = vshrl.u32 2475754826, %v3598
    %v3602 = vor.u32 %v3600, %v3601
    %v3603 = vshll.u32 2475754826, %v3597
    %v3604 = vshrl.u32 2131351028, %v3598
    %v3605 = vor.u32 %v3603, %v3604
    %v3606 = vshll.u32 2131351028, %v3597
    %v3607 = vshrl.u32 2102212464, %v3598
    %v3608 = vor.u32 %v3606, %v3607
    %v3609 = vshll.u32 2102212464, %v3597
    %v3610 = vshrl.u32 920167782, %v3598
    %v3611 = vor.u32 %v3609, %v3610
    %v3612 = vshll.u32 920167782, %v3597
    %v3613 = vshrl.u32 1326507024, %v3598
    %v3614 = vor.u32 %v3612, %v3613
    %vm3615 = vcmp.lt.s32.totalorder %v3596, 1
    %vm3616 = vcmp.lt.s32.totalorder %v3596, 2
    %vm3617 = vcmp.lt.s32.totalorder %v3596, 3
    %vm3618 = vcmp.lt.s32.totalorder %v3596, 4
    %v3619 = vsel %vm3615, %v3599, %v3602
    %v3620 = vsel %vm3618, %v3608, 2102212464
    %v3621 = vsel %vm3617, %v3605, %v3620
    %v3622 = vsel %vm3616, %v3619, %v3621
    %v3623 = vsel %vm3615, %v3602, %v3605
    %v3624 = vsel %vm3618, %v3611, 920167782
    %v3625 = vsel %vm3617, %v3608, %v3624
    %v3626 = vsel %vm3616, %v3623, %v3625
    %v3627 = vsel %vm3615, %v3605, %v3608
    %v3628 = vsel %vm3618, %v3614, 1326507024
    %v3629 = vsel %vm3617, %v3611, %v3628
    %v3630 = vsel %vm3616, %v3627, %v3629
    %v3631 = vshll.u32 %v3591, 8
    %v3632 = vand.u32 %v3631, 65535
    %v3633 = vshrl.u32 %v3631, 16
    %v3634 = vand.u32 %v3630, 65535
    %v3635 = vshrl.u32 %v3630, 16
    %v3636 = vmul.u32 %v3632, %v3634
    %v3637 = vmul.u32 %v3632, %v3635
    %v3638 = vmul.u32 %v3633, %v3634
    %v3639 = vmul.u32 %v3633, %v3635
    %v3640 = vshll.u32 %v3637, 16
    %v3641 = vshrl.u32 %v3637, 16
    %v3642 = vshll.u32 %v3638, 16
    %v3643 = vshrl.u32 %v3638, 16
    %vm3644 = vc.u32 %v3636, %v3640
    %v3645 = vsel %vm3644, 1, 0
    %v3646 = vadd.s32 %v3636, %v3640
    %v3647 = vadd.s32 %v3639, %v3645
    %vm3648 = vc.u32 %v3646, %v3642
    %v3649 = vsel %vm3648, 1, 0
    %v3650 = vadd.s32 %v3646, %v3642
    %v3651 = vadd.s32 %v3647, %v3649
    %v3652 = vadd.s32 %v3651, %v3641
    %v3653 = vadd.s32 %v3652, %v3643
    %v3654 = vand.u32 %v3631, 65535
    %v3655 = vshrl.u32 %v3631, 16
    %v3656 = vand.u32 %v3626, 65535
    %v3657 = vshrl.u32 %v3626, 16
    %v3658 = vmul.u32 %v3654, %v3656
    %v3659 = vmul.u32 %v3654, %v3657
    %v3660 = vmul.u32 %v3655, %v3656
    %v3661 = vmul.u32 %v3655, %v3657
    %v3662 = vshll.u32 %v3659, 16
    %v3663 = vshrl.u32 %v3659, 16
    %v3664 = vshll.u32 %v3660, 16
    %v3665 = vshrl.u32 %v3660, 16
    %vm3666 = vc.u32 %v3658, %v3662
    %v3667 = vsel %vm3666, 1, 0
    %v3668 = vadd.s32 %v3658, %v3662
    %v3669 = vadd.s32 %v3661, %v3667
    %vm3670 = vc.u32 %v3668, %v3664
    %v3671 = vsel %vm3670, 1, 0
    %v3672 = vadd.s32 %v3668, %v3664
    %v3673 = vadd.s32 %v3669, %v3671
    %v3674 = vadd.s32 %v3673, %v3663
    %v3675 = vadd.s32 %v3674, %v3665
    %v3676 = vmul.u32 %v3631, %v3622
    %v3677 = vadd.s32 %v3653, %v3672
    %vm3678 = vc.u32 %v3653, %v3672
    %v3679 = vadd.s32 %v3675, 1
    %v3680 = vsel %vm3678, %v3679, %v3675
    %v3681 = vadd.s32 %v3676, %v3680
    %v3682 = vadd.s32 %v3681, 536870912
    %v3683 = vshrl.u32 %v3682, 30
    %v3684 = vshll.u32 %v3683, 30
    %v3685 = vsub.s32 %v3681, %v3684
    %vm3686 = vcmp.lt.s32.totalorder %v3685, 0
    %v3687 = vsub.s32 0, %v3685
    %v3688 = vsel %vm3686, %v3687, %v3685
    %v3689 = vclz %v3688
    %v3690 = vsub.s32 %v3689, 2
    %vm3691 = vcmp.gt.s32.totalorder 0, %v3690
    %v3692 = vsel %vm3691, 0, %v3690
    %v3693 = vsub.s32 32, %v3692
    %v3694 = vshll.u32 %v3685, %v3692
    %v3695 = vshrl.u32 %v3677, %v3693
    %v3696 = vor.u32 %v3694, %v3695
    %v3697 = vsub.s32 4294967266, %v3692
    %v3698 = vadd.s32 %v3697, 127
    %v3699 = vshll.u32 %v3698, 23
    %v3700 = vor.u32 4788187, %v3699
    %v3701 = vand.u32 2147483647, %v3700
    %v3703 = vcvt.s32.f32 %v3696
    %v3704 = vmul.f32 %v3703, %v3701
    %v3705 = vxor.u32 %v3704, 2147483648
    %v3706 = vsel %vm3585, %v3705, %v3704
    %v3707 = vsub.s32 4, %v3683
    %v3708 = vsel %vm3585, %v3707, %v3683
    %v3709 = vsel %vm3584, %v2802, %v3706
    %v3710 = vsel %vm3584, 0, %v3708
    %v3711 = vmul.f32 %v3709, %v3709
    %v3712 = vmul.f32 %v3711, -0.001358992
    %v3713 = vadd.f32 %v3712, 0.041655596
    %v3714 = vmul.f32 %v3711, %v3713
    %v3715 = vadd.f32 %v3714, -0.4999988
    %v3716 = vmul.f32 %v3711, %v3715
    %v3717 = vadd.f32 1.0, %v3716
    %v3718 = vmul.f32 %v3709, %v3709
    %v3719 = vmul.f32 %v3718, -0.00019511016
    %v3720 = vadd.f32 %v3719, 0.008332121
    %v3721 = vmul.f32 %v3718, %v3720
    %v3722 = vadd.f32 %v3721, -0.16666654
    %v3723 = vmul.f32 %v3718, %v3722
    %v3724 = vadd.f32 %v3723, 1.0
    %v3725 = vmul.f32 %v3724, %v3709
    %vm3726 = vweird.f32 %v2802
    %v3727 = vand.u32 %v3710, 3
    %vm3728 = vcmp.lt.s32.totalorder %v3727, 2
    %vm3729 = vcmp.eq.s32.totalorder %v3727, 0
    %v3730 = vxor.u32 %v3725, 2147483648
    %v3731 = vsel %vm3729, %v3717, %v3730
    %vm3732 = vcmp.eq.s32.totalorder %v3727, 2
    %v3733 = vxor.u32 %v3717, 2147483648
    %v3734 = vsel %vm3732, %v3733, %v3725
    %v3735 = vsel %vm3728, %v3731, %v3734
    %v3736 = vsel %vm3726, nan, %v3735
    %v3737 = vand.u32 2147483647, %v2803
    %vm3738 = vcmp.le.f32.partialorder %v3737, 0.7853982
    %vm3739 = vcmp.lt.s32.totalorder %v2803, 0
    %v3740 = vand.u32 %v2803, 2139095040
    %v3741 = vshrl.u32 %v3740, 23
    %v3742 = vsub.s32 %v3741, 127
    %v3743 = vand.u32 2147483647, %v2803
    %v3744 = vand.u32 %v3743, 8388607
    %v3745 = vor.u32 %v3744, 8388608
    %v3746 = vsub.s32 0, %v3745
    %v3747 = vadd.s32 %v3742, 1
    %vm3748 = vcmp.gt.s32.totalorder %v3747, 0
    %v3749 = vsel %vm3748, %v3747, 0
    %v3750 = vshrl.u32 %v3749, 5
    %v3751 = vand.u32 %v3749, 31
    %v3752 = vsub.s32 32, %v3751
    %v3753 = vshrl.u32 683565275, %v3752
    %v3754 = vshll.u32 683565275, %v3751
    %v3755 = vshrl.u32 2475754826, %v3752
    %v3756 = vor.u32 %v3754, %v3755
    %v3757 = vshll.u32 2475754826, %v3751
    %v3758 = vshrl.u32 2131351028, %v3752
    %v3759 = vor.u32 %v3757, %v3758
    %v3760 = vshll.u32 2131351028, %v3751
    %v3761 = vshrl.u32 2102212464, %v3752
    %v3762 = vor.u32 %v3760, %v3761
    %v3763 = vshll.u32 2102212464, %v3751
    %v3764 = vshrl.u32 920167782, %v3752
    %v3765 = vor.u32 %v3763, %v3764
    %v3766 = vshll.u32 920167782, %v3751
    %v3767 = vshrl.u32 1326507024, %v3752
    %v3768 = vor.u32 %v3766, %v3767
    %vm3769 = vcmp.lt.s32.totalorder %v3750, 1
    %vm3770 = vcmp.lt.s32.totalorder %v3750, 2
    %vm3771 = vcmp.lt.s32.totalorder %v3750, 3
    %vm3772 = vcmp.lt.s32.totalorder %v3750, 4
    %v3773 = vsel %vm3769, %v3753, %v3756
    %v3774 = vsel %vm3772, %v3762, 2102212464
    %v3775 = vsel %vm3771, %v3759, %v3774
    %v3776 = vsel %vm3770, %v3773, %v3775
    %v3777 = vsel %vm3769, %v3756, %v3759
    %v3778 = vsel %vm3772, %v3765, 920167782
    %v3779 = vsel %vm3771, %v3762, %v3778
    %v3780 = vsel %vm3770, %v3777, %v3779
    %v3781 = vsel %vm3769, %v3759, %v3762
    %v3782 = vsel %vm3772, %v3768, 1326507024
    %v3783 = vsel %vm3771, %v3765, %v3782
    %v3784 = vsel %vm3770, %v3781, %v3783
    %v3785 = vshll.u32 %v3745, 8
    %v3786 = vand.u32 %v3785, 65535
    %v3787 = vshrl.u32 %v3785, 16
    %v3788 = vand.u32 %v3784, 65535
    %v3789 = vshrl.u32 %v3784, 16
    %v3790 = vmul.u32 %v3786, %v3788
    %v3791 = vmul.u32 %v3786, %v3789
    %v3792 = vmul.u32 %v3787, %v3788
    %v3793 = vmul.u32 %v3787, %v3789
    %v3794 = vshll.u32 %v3791, 16
    %v3795 = vshrl.u32 %v3791, 16
    %v3796 = vshll.u32 %v3792, 16
    %v3797 = vshrl.u32 %v3792, 16
    %vm3798 = vc.u32 %v3790, %v3794
    %v3799 = vsel %vm3798, 1, 0
    %v3800 = vadd.s32 %v3790, %v3794
    %v3801 = vadd.s32 %v3793, %v3799
    %vm3802 = vc.u32 %v3800, %v3796
    %v3803 = vsel %vm3802, 1, 0
    %v3804 = vadd.s32 %v3800, %v3796
    %v3805 = vadd.s32 %v3801, %v3803
    %v3806 = vadd.s32 %v3805, %v3795
    %v3807 = vadd.s32 %v3806, %v3797
    %v3808 = vand.u32 %v3785, 65535
    %v3809 = vshrl.u32 %v3785, 16
    %v3810 = vand.u32 %v3780, 65535
    %v3811 = vshrl.u32 %v3780, 16
    %v3812 = vmul.u32 %v3808, %v3810
    %v3813 = vmul.u32 %v3808, %v3811
    %v3814 = vmul.u32 %v3809, %v3810
    %v3815 = vmul.u32 %v3809, %v3811
    %v3816 = vshll.u32 %v3813, 16
    %v3817 = vshrl.u32 %v3813, 16
    %v3818 = vshll.u32 %v3814, 16
    %v3819 = vshrl.u32 %v3814, 16
    %vm3820 = vc.u32 %v3812, %v3816
    %v3821 = vsel %vm3820, 1, 0
    %v3822 = vadd.s32 %v3812, %v3816
    %v3823 = vadd.s32 %v3815, %v3821
    %vm3824 = vc.u32 %v3822, %v3818
    %v3825 = vsel %vm3824, 1, 0
    %v3826 = vadd.s32 %v3822, %v3818
    %v3827 = vadd.s32 %v3823, %v3825
    %v3828 = vadd.s32 %v3827, %v3817
    %v3829 = vadd.s32 %v3828, %v3819
    %v3830 = vmul.u32 %v3785, %v3776
    %v3831 = vadd.s32 %v3807, %v3826
    %vm3832 = vc.u32 %v3807, %v3826
    %v3833 = vadd.s32 %v3829, 1
    %v3834 = vsel %vm3832, %v3833, %v3829
    %v3835 = vadd.s32 %v3830, %v3834
    %v3836 = vadd.s32 %v3835, 536870912
    %v3837 = vshrl.u32 %v3836, 30
    %v3838 = vshll.u32 %v3837, 30
    %v3839 = vsub.s32 %v3835, %v3838
    %vm3840 = vcmp.lt.s32.totalorder %v3839, 0
    %v3841 = vsub.s32 0, %v3839
    %v3842 = vsel %vm3840, %v3841, %v3839
    %v3843 = vclz %v3842
    %v3844 = vsub.s32 %v3843, 2
    %vm3845 = vcmp.gt.s32.totalorder 0, %v3844
    %v3846 = vsel %vm3845, 0, %v3844
    %v3847 = vsub.s32 32, %v3846
    %v3848 = vshll.u32 %v3839, %v3846
    %v3849 = vshrl.u32 %v3831, %v3847
    %v3850 = vor.u32 %v3848, %v3849
    %v3851 = vsub.s32 4294967266, %v3846
    %v3852 = vadd.s32 %v3851, 127
    %v3853 = vshll.u32 %v3852, 23
    %v3854 = vor.u32 4788187, %v3853
    %v3855 = vand.u32 2147483647, %v3854
    %v3857 = vcvt.s32.f32 %v3850
    %v3858 = vmul.f32 %v3857, %v3855
    %v3859 = vxor.u32 %v3858, 2147483648
    %v3860 = vsel %vm3739, %v3859, %v3858
    %v3861 = vsub.s32 4, %v3837
    %v3862 = vsel %vm3739, %v3861, %v3837
    %v3863 = vsel %vm3738, %v2803, %v3860
    %v3864 = vsel %vm3738, 0, %v3862
    %v3865 = vmul.f32 %v3863, %v3863
    %v3866 = vmul.f32 %v3865, -0.001358992
    %v3867 = vadd.f32 %v3866, 0.041655596
    %v3868 = vmul.f32 %v3865, %v3867
    %v3869 = vadd.f32 %v3868, -0.4999988
    %v3870 = vmul.f32 %v3865, %v3869
    %v3871 = vadd.f32 1.0, %v3870
    %v3872 = vmul.f32 %v3863, %v3863
    %v3873 = vmul.f32 %v3872, -0.00019511016
    %v3874 = vadd.f32 %v3873, 0.008332121
    %v3875 = vmul.f32 %v3872, %v3874
    %v3876 = vadd.f32 %v3875, -0.16666654
    %v3877 = vmul.f32 %v3872, %v3876
    %v3878 = vadd.f32 %v3877, 1.0
    %v3879 = vmul.f32 %v3878, %v3863
    %vm3880 = vweird.f32 %v2803
    %v3881 = vand.u32 %v3864, 3
    %vm3882 = vcmp.lt.s32.totalorder %v3881, 2
    %vm3883 = vcmp.eq.s32.totalorder %v3881, 0
    %v3884 = vxor.u32 %v3879, 2147483648
    %v3885 = vsel %vm3883, %v3871, %v3884
    %vm3886 = vcmp.eq.s32.totalorder %v3881, 2
    %v3887 = vxor.u32 %v3871, 2147483648
    %v3888 = vsel %vm3886, %v3887, %v3879
    %v3889 = vsel %vm3882, %v3885, %v3888
    %v3890 = vsel %vm3880, nan, %v3889
    %v3891 = vand.u32 2147483647, %v2804
    %vm3892 = vcmp.le.f32.partialorder %v3891, 0.7853982
    %vm3893 = vcmp.lt.s32.totalorder %v2804, 0
    %v3894 = vand.u32 %v2804, 2139095040
    %v3895 = vshrl.u32 %v3894, 23
    %v3896 = vsub.s32 %v3895, 127
    %v3897 = vand.u32 2147483647, %v2804
    %v3898 = vand.u32 %v3897, 8388607
    %v3899 = vor.u32 %v3898, 8388608
    %v3900 = vsub.s32 0, %v3899
    %v3901 = vadd.s32 %v3896, 1
    %vm3902 = vcmp.gt.s32.totalorder %v3901, 0
    %v3903 = vsel %vm3902, %v3901, 0
    %v3904 = vshrl.u32 %v3903, 5
    %v3905 = vand.u32 %v3903, 31
    %v3906 = vsub.s32 32, %v3905
    %v3907 = vshrl.u32 683565275, %v3906
    %v3908 = vshll.u32 683565275, %v3905
    %v3909 = vshrl.u32 2475754826, %v3906
    %v3910 = vor.u32 %v3908, %v3909
    %v3911 = vshll.u32 2475754826, %v3905
    %v3912 = vshrl.u32 2131351028, %v3906
    %v3913 = vor.u32 %v3911, %v3912
    %v3914 = vshll.u32 2131351028, %v3905
    %v3915 = vshrl.u32 2102212464, %v3906
    %v3916 = vor.u32 %v3914, %v3915
    %v3917 = vshll.u32 2102212464, %v3905
    %v3918 = vshrl.u32 920167782, %v3906
    %v3919 = vor.u32 %v3917, %v3918
    %v3920 = vshll.u32 920167782, %v3905
    %v3921 = vshrl.u32 1326507024, %v3906
    %v3922 = vor.u32 %v3920, %v3921
    %vm3923 = vcmp.lt.s32.totalorder %v3904, 1
    %vm3924 = vcmp.lt.s32.totalorder %v3904, 2
    %vm3925 = vcmp.lt.s32.totalorder %v3904, 3
    %vm3926 = vcmp.lt.s32.totalorder %v3904, 4
    %v3927 = vsel %vm3923, %v3907, %v3910
    %v3928 = vsel %vm3926, %v3916, 2102212464
    %v3929 = vsel %vm3925, %v3913, %v3928
    %v3930 = vsel %vm3924, %v3927, %v3929
    %v3931 = vsel %vm3923, %v3910, %v3913
    %v3932 = vsel %vm3926, %v3919, 920167782
    %v3933 = vsel %vm3925, %v3916, %v3932
    %v3934 = vsel %vm3924, %v3931, %v3933
    %v3935 = vsel %vm3923, %v3913, %v3916
    %v3936 = vsel %vm3926, %v3922, 1326507024
    %v3937 = vsel %vm3925, %v3919, %v3936
    %v3938 = vsel %vm3924, %v3935, %v3937
    %v3939 = vshll.u32 %v3899, 8
    %v3940 = vand.u32 %v3939, 65535
    %v3941 = vshrl.u32 %v3939, 16
    %v3942 = vand.u32 %v3938, 65535
    %v3943 = vshrl.u32 %v3938, 16
    %v3944 = vmul.u32 %v3940, %v3942
    %v3945 = vmul.u32 %v3940, %v3943
    %v3946 = vmul.u32 %v3941, %v3942
    %v3947 = vmul.u32 %v3941, %v3943
    %v3948 = vshll.u32 %v3945, 16
    %v3949 = vshrl.u32 %v3945, 16
    %v3950 = vshll.u32 %v3946, 16
    %v3951 = vshrl.u32 %v3946, 16
    %vm3952 = vc.u32 %v3944, %v3948
    %v3953 = vsel %vm3952, 1, 0
    %v3954 = vadd.s32 %v3944, %v3948
    %v3955 = vadd.s32 %v3947, %v3953
    %vm3956 = vc.u32 %v3954, %v3950
    %v3957 = vsel %vm3956, 1, 0
    %v3958 = vadd.s32 %v3954, %v3950
    %v3959 = vadd.s32 %v3955, %v3957
    %v3960 = vadd.s32 %v3959, %v3949
    %v3961 = vadd.s32 %v3960, %v3951
    %v3962 = vand.u32 %v3939, 65535
    %v3963 = vshrl.u32 %v3939, 16
    %v3964 = vand.u32 %v3934, 65535
    %v3965 = vshrl.u32 %v3934, 16
    %v3966 = vmul.u32 %v3962, %v3964
    %v3967 = vmul.u32 %v3962, %v3965
    %v3968 = vmul.u32 %v3963, %v3964
    %v3969 = vmul.u32 %v3963, %v3965
    %v3970 = vshll.u32 %v3967, 16
    %v3971 = vshrl.u32 %v3967, 16
    %v3972 = vshll.u32 %v3968, 16
    %v3973 = vshrl.u32 %v3968, 16
    %vm3974 = vc.u32 %v3966, %v3970
    %v3975 = vsel %vm3974, 1, 0
    %v3976 = vadd.s32 %v3966, %v3970
    %v3977 = vadd.s32 %v3969, %v3975
    %vm3978 = vc.u32 %v3976, %v3972
    %v3979 = vsel %vm3978, 1, 0
    %v3980 = vadd.s32 %v3976, %v3972
    %v3981 = vadd.s32 %v3977, %v3979
    %v3982 = vadd.s32 %v3981, %v3971
    %v3983 = vadd.s32 %v3982, %v3973
    %v3984 = vmul.u32 %v3939, %v3930
    %v3985 = vadd.s32 %v3961, %v3980
    %vm3986 = vc.u32 %v3961, %v3980
    %v3987 = vadd.s32 %v3983, 1
    %v3988 = vsel %vm3986, %v3987, %v3983
    %v3989 = vadd.s32 %v3984, %v3988
    %v3990 = vadd.s32 %v3989, 536870912
    %v3991 = vshrl.u32 %v3990, 30
    %v3992 = vshll.u32 %v3991, 30
    %v3993 = vsub.s32 %v3989, %v3992
    %vm3994 = vcmp.lt.s32.totalorder %v3993, 0
    %v3995 = vsub.s32 0, %v3993
    %v3996 = vsel %vm3994, %v3995, %v3993
    %v3997 = vclz %v3996
    %v3998 = vsub.s32 %v3997, 2
    %vm3999 = vcmp.gt.s32.totalorder 0, %v3998
    %v4000 = vsel %vm3999, 0, %v3998
    %v4001 = vsub.s32 32, %v4000
    %v4002 = vshll.u32 %v3993, %v4000
    %v4003 = vshrl.u32 %v3985, %v4001
    %v4004 = vor.u32 %v4002, %v4003
    %v4005 = vsub.s32 4294967266, %v4000
    %v4006 = vadd.s32 %v4005, 127
    %v4007 = vshll.u32 %v4006, 23
    %v4008 = vor.u32 4788187, %v4007
    %v4009 = vand.u32 2147483647, %v4008
    %v4011 = vcvt.s32.f32 %v4004
    %v4012 = vmul.f32 %v4011, %v4009
    %v4013 = vxor.u32 %v4012, 2147483648
    %v4014 = vsel %vm3893, %v4013, %v4012
    %v4015 = vsub.s32 4, %v3991
    %v4016 = vsel %vm3893, %v4015, %v3991
    %v4017 = vsel %vm3892, %v2804, %v4014
    %v4018 = vsel %vm3892, 0, %v4016
    %v4019 = vmul.f32 %v4017, %v4017
    %v4020 = vmul.f32 %v4019, -0.001358992
    %v4021 = vadd.f32 %v4020, 0.041655596
    %v4022 = vmul.f32 %v4019, %v4021
    %v4023 = vadd.f32 %v4022, -0.4999988
    %v4024 = vmul.f32 %v4019, %v4023
    %v4025 = vadd.f32 1.0, %v4024
    %v4026 = vmul.f32 %v4017, %v4017
    %v4027 = vmul.f32 %v4026, -0.00019511016
    %v4028 = vadd.f32 %v4027, 0.008332121
    %v4029 = vmul.f32 %v4026, %v4028
    %v4030 = vadd.f32 %v4029, -0.16666654
    %v4031 = vmul.f32 %v4026, %v4030
    %v4032 = vadd.f32 %v4031, 1.0
    %v4033 = vmul.f32 %v4032, %v4017
    %vm4034 = vweird.f32 %v2804
    %v4035 = vand.u32 %v4018, 3
    %vm4036 = vcmp.lt.s32.totalorder %v4035, 2
    %vm4037 = vcmp.eq.s32.totalorder %v4035, 0
    %v4038 = vxor.u32 %v4033, 2147483648
    %v4039 = vsel %vm4037, %v4025, %v4038
    %vm4040 = vcmp.eq.s32.totalorder %v4035, 2
    %v4041 = vxor.u32 %v4025, 2147483648
    %v4042 = vsel %vm4040, %v4041, %v4033
    %v4043 = vsel %vm4036, %v4039, %v4042
    %v4044 = vsel %vm4034, nan, %v4043
    %v4045 = vadd.f32 %v2711, %v3582
    %v4046 = vadd.f32 %v2712, %v3736
    %v4047 = vadd.f32 %v2713, %v3890
    %v4048 = vadd.f32 %v2714, %v4044
    %s4049 = scalar_lea.vmem [#allocation5], 6
    %v4050 = vld [vmem:[%s4049] sm:$0x3]
    %v4051 = vperm.slane %v4050, 0
    %v4052 = vlaneseq
    %v4053 = vshrl.u32 %v4052, 7
    %4055 = vset.pattern.permute.xlu0 %v4053
    %4056 = vperm.xlu0 %4055, %v4051
    %v4057 = vpop.permute.xlu0 %4056
    %v4058 = vperm.slane %v4050, 1
    %v4059 = vlaneseq
    %v4060 = vshrl.u32 %v4059, 7
    %4062 = vset.pattern.permute.xlu0 %v4060
    %4063 = vperm.xlu0 %4062, %v4058
    %v4064 = vpop.permute.xlu0 %4063
    %v4065 = vmul.f32 %v4057, %v59
    %v4066 = vmul.f32 %v4064, %v59
    %v4067 = vrot.slane %v4065, 4
    %v4068 = vsel %vm64, 0.0, %v4067
    %v4070 = vunpack.c.l.s4 1983009808
    %v4071 = vunpack.c.0.s8 %v4070
    %v4072 = vperm.slane %v4065, %v4071
    %v4074 = vunpack.c.l.s4 1983009808
    %v4075 = vunpack.c.0.s8 %v4074
    %v4076 = vperm.slane %v4068, %v4075
    %v4077 = vrot.slane %v4066, 4
    %v4078 = vsel %vm64, 0.0, %v4077
    %v4080 = vunpack.c.l.s4 1983009808
    %v4081 = vunpack.c.0.s8 %v4080
    %v4082 = vperm.slane %v4066, %v4081
    %v4084 = vunpack.c.l.s4 1983009808
    %v4085 = vunpack.c.0.s8 %v4084
    %v4086 = vperm.slane %v4078, %v4085
    %v4087 = vrot.slane %v4082, 4
    %v4088 = vsel %vm64, %v4087, %v4072
    %v4089 = vrot.slane %v4072, 4
    %v4090 = vsel %vm64, %v4082, %v4089
    %v4092 = vunpack.c.l.s4 1934713408
    %v4093 = vunpack.c.0.s8 %v4092
    %v4094 = vperm.slane %v4088, %v4093
    %v4096 = vunpack.c.l.s4 1934713408
    %v4097 = vunpack.c.0.s8 %v4096
    %v4098 = vperm.slane %v4090, %v4097
    %v4099 = vrot.slane %v4086, 4
    %v4100 = vsel %vm64, %v4099, %v4076
    %v4101 = vrot.slane %v4076, 4
    %v4102 = vsel %vm64, %v4086, %v4101
    %v4104 = vunpack.c.l.s4 1934713408
    %v4105 = vunpack.c.0.s8 %v4104
    %v4106 = vperm.slane %v4100, %v4105
    %v4108 = vunpack.c.l.s4 1934713408
    %v4109 = vunpack.c.0.s8 %v4108
    %v4110 = vperm.slane %v4102, %v4109
    %v4111 = vrot.slane %v4094, 4
    %v4112 = vsel %vm64, 0.0, %v4111
    %v4113 = vrot.slane %v4098, 4
    %v4114 = vsel %vm64, 0.0, %v4113
    %v4115 = vrot.slane %v4106, 4
    %v4116 = vsel %vm64, 0.0, %v4115
    %v4117 = vrot.slane %v4110, 4
    %v4118 = vsel %vm64, 0.0, %v4117
    %4120 = vrot.lane.b32.xlu0 %v4112, 64
    %v4121 = vpop.permute.xlu0 %4120
    %4124 = vrot.lane.b32.xlu0 %v4114, 64
    %v4125 = vpop.permute.xlu0 %4124
    %4128 = vrot.lane.b32.xlu0 %v4116, 64
    %v4129 = vpop.permute.xlu0 %4128
    %4132 = vrot.lane.b32.xlu0 %v4118, 64
    %v4133 = vpop.permute.xlu0 %4132
    %v4135 = vsel %vm132, %v4094, %v4121
    %v4136 = vsel %vm132, %v4098, %v4125
    %v4137 = vsel %vm132, %v4106, %v4129
    %v4138 = vsel %vm132, %v4110, %v4133
    %v4139 = vand.u32 2147483647, %v4135
    %vm4140 = vcmp.le.f32.partialorder %v4139, 0.7853982
    %vm4141 = vcmp.lt.s32.totalorder %v4135, 0
    %v4142 = vand.u32 %v4135, 2139095040
    %v4143 = vshrl.u32 %v4142, 23
    %v4144 = vsub.s32 %v4143, 127
    %v4145 = vand.u32 2147483647, %v4135
    %v4146 = vand.u32 %v4145, 8388607
    %v4147 = vor.u32 %v4146, 8388608
    %v4148 = vsub.s32 0, %v4147
    %v4149 = vadd.s32 %v4144, 1
    %vm4150 = vcmp.gt.s32.totalorder %v4149, 0
    %v4151 = vsel %vm4150, %v4149, 0
    %v4152 = vshrl.u32 %v4151, 5
    %v4153 = vand.u32 %v4151, 31
    %v4154 = vsub.s32 32, %v4153
    %v4155 = vshrl.u32 683565275, %v4154
    %v4156 = vshll.u32 683565275, %v4153
    %v4157 = vshrl.u32 2475754826, %v4154
    %v4158 = vor.u32 %v4156, %v4157
    %v4159 = vshll.u32 2475754826, %v4153
    %v4160 = vshrl.u32 2131351028, %v4154
    %v4161 = vor.u32 %v4159, %v4160
    %v4162 = vshll.u32 2131351028, %v4153
    %v4163 = vshrl.u32 2102212464, %v4154
    %v4164 = vor.u32 %v4162, %v4163
    %v4165 = vshll.u32 2102212464, %v4153
    %v4166 = vshrl.u32 920167782, %v4154
    %v4167 = vor.u32 %v4165, %v4166
    %v4168 = vshll.u32 920167782, %v4153
    %v4169 = vshrl.u32 1326507024, %v4154
    %v4170 = vor.u32 %v4168, %v4169
    %vm4171 = vcmp.lt.s32.totalorder %v4152, 1
    %vm4172 = vcmp.lt.s32.totalorder %v4152, 2
    %vm4173 = vcmp.lt.s32.totalorder %v4152, 3
    %vm4174 = vcmp.lt.s32.totalorder %v4152, 4
    %v4175 = vsel %vm4171, %v4155, %v4158
    %v4176 = vsel %vm4174, %v4164, 2102212464
    %v4177 = vsel %vm4173, %v4161, %v4176
    %v4178 = vsel %vm4172, %v4175, %v4177
    %v4179 = vsel %vm4171, %v4158, %v4161
    %v4180 = vsel %vm4174, %v4167, 920167782
    %v4181 = vsel %vm4173, %v4164, %v4180
    %v4182 = vsel %vm4172, %v4179, %v4181
    %v4183 = vsel %vm4171, %v4161, %v4164
    %v4184 = vsel %vm4174, %v4170, 1326507024
    %v4185 = vsel %vm4173, %v4167, %v4184
    %v4186 = vsel %vm4172, %v4183, %v4185
    %v4187 = vshll.u32 %v4147, 8
    %v4188 = vand.u32 %v4187, 65535
    %v4189 = vshrl.u32 %v4187, 16
    %v4190 = vand.u32 %v4186, 65535
    %v4191 = vshrl.u32 %v4186, 16
    %v4192 = vmul.u32 %v4188, %v4190
    %v4193 = vmul.u32 %v4188, %v4191
    %v4194 = vmul.u32 %v4189, %v4190
    %v4195 = vmul.u32 %v4189, %v4191
    %v4196 = vshll.u32 %v4193, 16
    %v4197 = vshrl.u32 %v4193, 16
    %v4198 = vshll.u32 %v4194, 16
    %v4199 = vshrl.u32 %v4194, 16
    %vm4200 = vc.u32 %v4192, %v4196
    %v4201 = vsel %vm4200, 1, 0
    %v4202 = vadd.s32 %v4192, %v4196
    %v4203 = vadd.s32 %v4195, %v4201
    %vm4204 = vc.u32 %v4202, %v4198
    %v4205 = vsel %vm4204, 1, 0
    %v4206 = vadd.s32 %v4202, %v4198
    %v4207 = vadd.s32 %v4203, %v4205
    %v4208 = vadd.s32 %v4207, %v4197
    %v4209 = vadd.s32 %v4208, %v4199
    %v4210 = vand.u32 %v4187, 65535
    %v4211 = vshrl.u32 %v4187, 16
    %v4212 = vand.u32 %v4182, 65535
    %v4213 = vshrl.u32 %v4182, 16
    %v4214 = vmul.u32 %v4210, %v4212
    %v4215 = vmul.u32 %v4210, %v4213
    %v4216 = vmul.u32 %v4211, %v4212
    %v4217 = vmul.u32 %v4211, %v4213
    %v4218 = vshll.u32 %v4215, 16
    %v4219 = vshrl.u32 %v4215, 16
    %v4220 = vshll.u32 %v4216, 16
    %v4221 = vshrl.u32 %v4216, 16
    %vm4222 = vc.u32 %v4214, %v4218
    %v4223 = vsel %vm4222, 1, 0
    %v4224 = vadd.s32 %v4214, %v4218
    %v4225 = vadd.s32 %v4217, %v4223
    %vm4226 = vc.u32 %v4224, %v4220
    %v4227 = vsel %vm4226, 1, 0
    %v4228 = vadd.s32 %v4224, %v4220
    %v4229 = vadd.s32 %v4225, %v4227
    %v4230 = vadd.s32 %v4229, %v4219
    %v4231 = vadd.s32 %v4230, %v4221
    %v4232 = vmul.u32 %v4187, %v4178
    %v4233 = vadd.s32 %v4209, %v4228
    %vm4234 = vc.u32 %v4209, %v4228
    %v4235 = vadd.s32 %v4231, 1
    %v4236 = vsel %vm4234, %v4235, %v4231
    %v4237 = vadd.s32 %v4232, %v4236
    %v4238 = vadd.s32 %v4237, 536870912
    %v4239 = vshrl.u32 %v4238, 30
    %v4240 = vshll.u32 %v4239, 30
    %v4241 = vsub.s32 %v4237, %v4240
    %vm4242 = vcmp.lt.s32.totalorder %v4241, 0
    %v4243 = vsub.s32 0, %v4241
    %v4244 = vsel %vm4242, %v4243, %v4241
    %v4245 = vclz %v4244
    %v4246 = vsub.s32 %v4245, 2
    %vm4247 = vcmp.gt.s32.totalorder 0, %v4246
    %v4248 = vsel %vm4247, 0, %v4246
    %v4249 = vsub.s32 32, %v4248
    %v4250 = vshll.u32 %v4241, %v4248
    %v4251 = vshrl.u32 %v4233, %v4249
    %v4252 = vor.u32 %v4250, %v4251
    %v4253 = vsub.s32 4294967266, %v4248
    %v4254 = vadd.s32 %v4253, 127
    %v4255 = vshll.u32 %v4254, 23
    %v4256 = vor.u32 4788187, %v4255
    %v4257 = vand.u32 2147483647, %v4256
    %v4259 = vcvt.s32.f32 %v4252
    %v4260 = vmul.f32 %v4259, %v4257
    %v4261 = vxor.u32 %v4260, 2147483648
    %v4262 = vsel %vm4141, %v4261, %v4260
    %v4263 = vsub.s32 4, %v4239
    %v4264 = vsel %vm4141, %v4263, %v4239
    %v4265 = vsel %vm4140, %v4135, %v4262
    %v4266 = vsel %vm4140, 0, %v4264
    %v4267 = vmul.f32 %v4265, %v4265
    %v4268 = vmul.f32 %v4267, -0.001358992
    %v4269 = vadd.f32 %v4268, 0.041655596
    %v4270 = vmul.f32 %v4267, %v4269
    %v4271 = vadd.f32 %v4270, -0.4999988
    %v4272 = vmul.f32 %v4267, %v4271
    %v4273 = vadd.f32 1.0, %v4272
    %v4274 = vmul.f32 %v4265, %v4265
    %v4275 = vmul.f32 %v4274, -0.00019511016
    %v4276 = vadd.f32 %v4275, 0.008332121
    %v4277 = vmul.f32 %v4274, %v4276
    %v4278 = vadd.f32 %v4277, -0.16666654
    %v4279 = vmul.f32 %v4274, %v4278
    %v4280 = vadd.f32 %v4279, 1.0
    %v4281 = vmul.f32 %v4280, %v4265
    %vm4282 = vweird.f32 %v4135
    %v4283 = vadd.s32 %v4266, 3
    %v4284 = vand.u32 %v4283, 3
    %vm4285 = vcmp.lt.s32.totalorder %v4284, 2
    %vm4286 = vcmp.eq.s32.totalorder %v4284, 0
    %v4287 = vxor.u32 %v4281, 2147483648
    %v4288 = vsel %vm4286, %v4273, %v4287
    %vm4289 = vcmp.eq.s32.totalorder %v4284, 2
    %v4290 = vxor.u32 %v4273, 2147483648
    %v4291 = vsel %vm4289, %v4290, %v4281
    %v4292 = vsel %vm4285, %v4288, %v4291
    %v4293 = vsel %vm4282, nan, %v4292
    %v4294 = vand.u32 2147483647, %v4136
    %vm4295 = vcmp.le.f32.partialorder %v4294, 0.7853982
    %vm4296 = vcmp.lt.s32.totalorder %v4136, 0
    %v4297 = vand.u32 %v4136, 2139095040
    %v4298 = vshrl.u32 %v4297, 23
    %v4299 = vsub.s32 %v4298, 127
    %v4300 = vand.u32 2147483647, %v4136
    %v4301 = vand.u32 %v4300, 8388607
    %v4302 = vor.u32 %v4301, 8388608
    %v4303 = vsub.s32 0, %v4302
    %v4304 = vadd.s32 %v4299, 1
    %vm4305 = vcmp.gt.s32.totalorder %v4304, 0
    %v4306 = vsel %vm4305, %v4304, 0
    %v4307 = vshrl.u32 %v4306, 5
    %v4308 = vand.u32 %v4306, 31
    %v4309 = vsub.s32 32, %v4308
    %v4310 = vshrl.u32 683565275, %v4309
    %v4311 = vshll.u32 683565275, %v4308
    %v4312 = vshrl.u32 2475754826, %v4309
    %v4313 = vor.u32 %v4311, %v4312
    %v4314 = vshll.u32 2475754826, %v4308
    %v4315 = vshrl.u32 2131351028, %v4309
    %v4316 = vor.u32 %v4314, %v4315
    %v4317 = vshll.u32 2131351028, %v4308
    %v4318 = vshrl.u32 2102212464, %v4309
    %v4319 = vor.u32 %v4317, %v4318
    %v4320 = vshll.u32 2102212464, %v4308
    %v4321 = vshrl.u32 920167782, %v4309
    %v4322 = vor.u32 %v4320, %v4321
    %v4323 = vshll.u32 920167782, %v4308
    %v4324 = vshrl.u32 1326507024, %v4309
    %v4325 = vor.u32 %v4323, %v4324
    %vm4326 = vcmp.lt.s32.totalorder %v4307, 1
    %vm4327 = vcmp.lt.s32.totalorder %v4307, 2
    %vm4328 = vcmp.lt.s32.totalorder %v4307, 3
    %vm4329 = vcmp.lt.s32.totalorder %v4307, 4
    %v4330 = vsel %vm4326, %v4310, %v4313
    %v4331 = vsel %vm4329, %v4319, 2102212464
    %v4332 = vsel %vm4328, %v4316, %v4331
    %v4333 = vsel %vm4327, %v4330, %v4332
    %v4334 = vsel %vm4326, %v4313, %v4316
    %v4335 = vsel %vm4329, %v4322, 920167782
    %v4336 = vsel %vm4328, %v4319, %v4335
    %v4337 = vsel %vm4327, %v4334, %v4336
    %v4338 = vsel %vm4326, %v4316, %v4319
    %v4339 = vsel %vm4329, %v4325, 1326507024
    %v4340 = vsel %vm4328, %v4322, %v4339
    %v4341 = vsel %vm4327, %v4338, %v4340
    %v4342 = vshll.u32 %v4302, 8
    %v4343 = vand.u32 %v4342, 65535
    %v4344 = vshrl.u32 %v4342, 16
    %v4345 = vand.u32 %v4341, 65535
    %v4346 = vshrl.u32 %v4341, 16
    %v4347 = vmul.u32 %v4343, %v4345
    %v4348 = vmul.u32 %v4343, %v4346
    %v4349 = vmul.u32 %v4344, %v4345
    %v4350 = vmul.u32 %v4344, %v4346
    %v4351 = vshll.u32 %v4348, 16
    %v4352 = vshrl.u32 %v4348, 16
    %v4353 = vshll.u32 %v4349, 16
    %v4354 = vshrl.u32 %v4349, 16
    %vm4355 = vc.u32 %v4347, %v4351
    %v4356 = vsel %vm4355, 1, 0
    %v4357 = vadd.s32 %v4347, %v4351
    %v4358 = vadd.s32 %v4350, %v4356
    %vm4359 = vc.u32 %v4357, %v4353
    %v4360 = vsel %vm4359, 1, 0
    %v4361 = vadd.s32 %v4357, %v4353
    %v4362 = vadd.s32 %v4358, %v4360
    %v4363 = vadd.s32 %v4362, %v4352
    %v4364 = vadd.s32 %v4363, %v4354
    %v4365 = vand.u32 %v4342, 65535
    %v4366 = vshrl.u32 %v4342, 16
    %v4367 = vand.u32 %v4337, 65535
    %v4368 = vshrl.u32 %v4337, 16
    %v4369 = vmul.u32 %v4365, %v4367
    %v4370 = vmul.u32 %v4365, %v4368
    %v4371 = vmul.u32 %v4366, %v4367
    %v4372 = vmul.u32 %v4366, %v4368
    %v4373 = vshll.u32 %v4370, 16
    %v4374 = vshrl.u32 %v4370, 16
    %v4375 = vshll.u32 %v4371, 16
    %v4376 = vshrl.u32 %v4371, 16
    %vm4377 = vc.u32 %v4369, %v4373
    %v4378 = vsel %vm4377, 1, 0
    %v4379 = vadd.s32 %v4369, %v4373
    %v4380 = vadd.s32 %v4372, %v4378
    %vm4381 = vc.u32 %v4379, %v4375
    %v4382 = vsel %vm4381, 1, 0
    %v4383 = vadd.s32 %v4379, %v4375
    %v4384 = vadd.s32 %v4380, %v4382
    %v4385 = vadd.s32 %v4384, %v4374
    %v4386 = vadd.s32 %v4385, %v4376
    %v4387 = vmul.u32 %v4342, %v4333
    %v4388 = vadd.s32 %v4364, %v4383
    %vm4389 = vc.u32 %v4364, %v4383
    %v4390 = vadd.s32 %v4386, 1
    %v4391 = vsel %vm4389, %v4390, %v4386
    %v4392 = vadd.s32 %v4387, %v4391
    %v4393 = vadd.s32 %v4392, 536870912
    %v4394 = vshrl.u32 %v4393, 30
    %v4395 = vshll.u32 %v4394, 30
    %v4396 = vsub.s32 %v4392, %v4395
    %vm4397 = vcmp.lt.s32.totalorder %v4396, 0
    %v4398 = vsub.s32 0, %v4396
    %v4399 = vsel %vm4397, %v4398, %v4396
    %v4400 = vclz %v4399
    %v4401 = vsub.s32 %v4400, 2
    %vm4402 = vcmp.gt.s32.totalorder 0, %v4401
    %v4403 = vsel %vm4402, 0, %v4401
    %v4404 = vsub.s32 32, %v4403
    %v4405 = vshll.u32 %v4396, %v4403
    %v4406 = vshrl.u32 %v4388, %v4404
    %v4407 = vor.u32 %v4405, %v4406
    %v4408 = vsub.s32 4294967266, %v4403
    %v4409 = vadd.s32 %v4408, 127
    %v4410 = vshll.u32 %v4409, 23
    %v4411 = vor.u32 4788187, %v4410
    %v4412 = vand.u32 2147483647, %v4411
    %v4414 = vcvt.s32.f32 %v4407
    %v4415 = vmul.f32 %v4414, %v4412
    %v4416 = vxor.u32 %v4415, 2147483648
    %v4417 = vsel %vm4296, %v4416, %v4415
    %v4418 = vsub.s32 4, %v4394
    %v4419 = vsel %vm4296, %v4418, %v4394
    %v4420 = vsel %vm4295, %v4136, %v4417
    %v4421 = vsel %vm4295, 0, %v4419
    %v4422 = vmul.f32 %v4420, %v4420
    %v4423 = vmul.f32 %v4422, -0.001358992
    %v4424 = vadd.f32 %v4423, 0.041655596
    %v4425 = vmul.f32 %v4422, %v4424
    %v4426 = vadd.f32 %v4425, -0.4999988
    %v4427 = vmul.f32 %v4422, %v4426
    %v4428 = vadd.f32 1.0, %v4427
    %v4429 = vmul.f32 %v4420, %v4420
    %v4430 = vmul.f32 %v4429, -0.00019511016
    %v4431 = vadd.f32 %v4430, 0.008332121
    %v4432 = vmul.f32 %v4429, %v4431
    %v4433 = vadd.f32 %v4432, -0.16666654
    %v4434 = vmul.f32 %v4429, %v4433
    %v4435 = vadd.f32 %v4434, 1.0
    %v4436 = vmul.f32 %v4435, %v4420
    %vm4437 = vweird.f32 %v4136
    %v4438 = vadd.s32 %v4421, 3
    %v4439 = vand.u32 %v4438, 3
    %vm4440 = vcmp.lt.s32.totalorder %v4439, 2
    %vm4441 = vcmp.eq.s32.totalorder %v4439, 0
    %v4442 = vxor.u32 %v4436, 2147483648
    %v4443 = vsel %vm4441, %v4428, %v4442
    %vm4444 = vcmp.eq.s32.totalorder %v4439, 2
    %v4445 = vxor.u32 %v4428, 2147483648
    %v4446 = vsel %vm4444, %v4445, %v4436
    %v4447 = vsel %vm4440, %v4443, %v4446
    %v4448 = vsel %vm4437, nan, %v4447
    %v4449 = vand.u32 2147483647, %v4137
    %vm4450 = vcmp.le.f32.partialorder %v4449, 0.7853982
    %vm4451 = vcmp.lt.s32.totalorder %v4137, 0
    %v4452 = vand.u32 %v4137, 2139095040
    %v4453 = vshrl.u32 %v4452, 23
    %v4454 = vsub.s32 %v4453, 127
    %v4455 = vand.u32 2147483647, %v4137
    %v4456 = vand.u32 %v4455, 8388607
    %v4457 = vor.u32 %v4456, 8388608
    %v4458 = vsub.s32 0, %v4457
    %v4459 = vadd.s32 %v4454, 1
    %vm4460 = vcmp.gt.s32.totalorder %v4459, 0
    %v4461 = vsel %vm4460, %v4459, 0
    %v4462 = vshrl.u32 %v4461, 5
    %v4463 = vand.u32 %v4461, 31
    %v4464 = vsub.s32 32, %v4463
    %v4465 = vshrl.u32 683565275, %v4464
    %v4466 = vshll.u32 683565275, %v4463
    %v4467 = vshrl.u32 2475754826, %v4464
    %v4468 = vor.u32 %v4466, %v4467
    %v4469 = vshll.u32 2475754826, %v4463
    %v4470 = vshrl.u32 2131351028, %v4464
    %v4471 = vor.u32 %v4469, %v4470
    %v4472 = vshll.u32 2131351028, %v4463
    %v4473 = vshrl.u32 2102212464, %v4464
    %v4474 = vor.u32 %v4472, %v4473
    %v4475 = vshll.u32 2102212464, %v4463
    %v4476 = vshrl.u32 920167782, %v4464
    %v4477 = vor.u32 %v4475, %v4476
    %v4478 = vshll.u32 920167782, %v4463
    %v4479 = vshrl.u32 1326507024, %v4464
    %v4480 = vor.u32 %v4478, %v4479
    %vm4481 = vcmp.lt.s32.totalorder %v4462, 1
    %vm4482 = vcmp.lt.s32.totalorder %v4462, 2
    %vm4483 = vcmp.lt.s32.totalorder %v4462, 3
    %vm4484 = vcmp.lt.s32.totalorder %v4462, 4
    %v4485 = vsel %vm4481, %v4465, %v4468
    %v4486 = vsel %vm4484, %v4474, 2102212464
    %v4487 = vsel %vm4483, %v4471, %v4486
    %v4488 = vsel %vm4482, %v4485, %v4487
    %v4489 = vsel %vm4481, %v4468, %v4471
    %v4490 = vsel %vm4484, %v4477, 920167782
    %v4491 = vsel %vm4483, %v4474, %v4490
    %v4492 = vsel %vm4482, %v4489, %v4491
    %v4493 = vsel %vm4481, %v4471, %v4474
    %v4494 = vsel %vm4484, %v4480, 1326507024
    %v4495 = vsel %vm4483, %v4477, %v4494
    %v4496 = vsel %vm4482, %v4493, %v4495
    %v4497 = vshll.u32 %v4457, 8
    %v4498 = vand.u32 %v4497, 65535
    %v4499 = vshrl.u32 %v4497, 16
    %v4500 = vand.u32 %v4496, 65535
    %v4501 = vshrl.u32 %v4496, 16
    %v4502 = vmul.u32 %v4498, %v4500
    %v4503 = vmul.u32 %v4498, %v4501
    %v4504 = vmul.u32 %v4499, %v4500
    %v4505 = vmul.u32 %v4499, %v4501
    %v4506 = vshll.u32 %v4503, 16
    %v4507 = vshrl.u32 %v4503, 16
    %v4508 = vshll.u32 %v4504, 16
    %v4509 = vshrl.u32 %v4504, 16
    %vm4510 = vc.u32 %v4502, %v4506
    %v4511 = vsel %vm4510, 1, 0
    %v4512 = vadd.s32 %v4502, %v4506
    %v4513 = vadd.s32 %v4505, %v4511
    %vm4514 = vc.u32 %v4512, %v4508
    %v4515 = vsel %vm4514, 1, 0
    %v4516 = vadd.s32 %v4512, %v4508
    %v4517 = vadd.s32 %v4513, %v4515
    %v4518 = vadd.s32 %v4517, %v4507
    %v4519 = vadd.s32 %v4518, %v4509
    %v4520 = vand.u32 %v4497, 65535
    %v4521 = vshrl.u32 %v4497, 16
    %v4522 = vand.u32 %v4492, 65535
    %v4523 = vshrl.u32 %v4492, 16
    %v4524 = vmul.u32 %v4520, %v4522
    %v4525 = vmul.u32 %v4520, %v4523
    %v4526 = vmul.u32 %v4521, %v4522
    %v4527 = vmul.u32 %v4521, %v4523
    %v4528 = vshll.u32 %v4525, 16
    %v4529 = vshrl.u32 %v4525, 16
    %v4530 = vshll.u32 %v4526, 16
    %v4531 = vshrl.u32 %v4526, 16
    %vm4532 = vc.u32 %v4524, %v4528
    %v4533 = vsel %vm4532, 1, 0
    %v4534 = vadd.s32 %v4524, %v4528
    %v4535 = vadd.s32 %v4527, %v4533
    %vm4536 = vc.u32 %v4534, %v4530
    %v4537 = vsel %vm4536, 1, 0
    %v4538 = vadd.s32 %v4534, %v4530
    %v4539 = vadd.s32 %v4535, %v4537
    %v4540 = vadd.s32 %v4539, %v4529
    %v4541 = vadd.s32 %v4540, %v4531
    %v4542 = vmul.u32 %v4497, %v4488
    %v4543 = vadd.s32 %v4519, %v4538
    %vm4544 = vc.u32 %v4519, %v4538
    %v4545 = vadd.s32 %v4541, 1
    %v4546 = vsel %vm4544, %v4545, %v4541
    %v4547 = vadd.s32 %v4542, %v4546
    %v4548 = vadd.s32 %v4547, 536870912
    %v4549 = vshrl.u32 %v4548, 30
    %v4550 = vshll.u32 %v4549, 30
    %v4551 = vsub.s32 %v4547, %v4550
    %vm4552 = vcmp.lt.s32.totalorder %v4551, 0
    %v4553 = vsub.s32 0, %v4551
    %v4554 = vsel %vm4552, %v4553, %v4551
    %v4555 = vclz %v4554
    %v4556 = vsub.s32 %v4555, 2
    %vm4557 = vcmp.gt.s32.totalorder 0, %v4556
    %v4558 = vsel %vm4557, 0, %v4556
    %v4559 = vsub.s32 32, %v4558
    %v4560 = vshll.u32 %v4551, %v4558
    %v4561 = vshrl.u32 %v4543, %v4559
    %v4562 = vor.u32 %v4560, %v4561
    %v4563 = vsub.s32 4294967266, %v4558
    %v4564 = vadd.s32 %v4563, 127
    %v4565 = vshll.u32 %v4564, 23
    %v4566 = vor.u32 4788187, %v4565
    %v4567 = vand.u32 2147483647, %v4566
    %v4569 = vcvt.s32.f32 %v4562
    %v4570 = vmul.f32 %v4569, %v4567
    %v4571 = vxor.u32 %v4570, 2147483648
    %v4572 = vsel %vm4451, %v4571, %v4570
    %v4573 = vsub.s32 4, %v4549
    %v4574 = vsel %vm4451, %v4573, %v4549
    %v4575 = vsel %vm4450, %v4137, %v4572
    %v4576 = vsel %vm4450, 0, %v4574
    %v4577 = vmul.f32 %v4575, %v4575
    %v4578 = vmul.f32 %v4577, -0.001358992
    %v4579 = vadd.f32 %v4578, 0.041655596
    %v4580 = vmul.f32 %v4577, %v4579
    %v4581 = vadd.f32 %v4580, -0.4999988
    %v4582 = vmul.f32 %v4577, %v4581
    %v4583 = vadd.f32 1.0, %v4582
    %v4584 = vmul.f32 %v4575, %v4575
    %v4585 = vmul.f32 %v4584, -0.00019511016
    %v4586 = vadd.f32 %v4585, 0.008332121
    %v4587 = vmul.f32 %v4584, %v4586
    %v4588 = vadd.f32 %v4587, -0.16666654
    %v4589 = vmul.f32 %v4584, %v4588
    %v4590 = vadd.f32 %v4589, 1.0
    %v4591 = vmul.f32 %v4590, %v4575
    %vm4592 = vweird.f32 %v4137
    %v4593 = vadd.s32 %v4576, 3
    %v4594 = vand.u32 %v4593, 3
    %vm4595 = vcmp.lt.s32.totalorder %v4594, 2
    %vm4596 = vcmp.eq.s32.totalorder %v4594, 0
    %v4597 = vxor.u32 %v4591, 2147483648
    %v4598 = vsel %vm4596, %v4583, %v4597
    %vm4599 = vcmp.eq.s32.totalorder %v4594, 2
    %v4600 = vxor.u32 %v4583, 2147483648
    %v4601 = vsel %vm4599, %v4600, %v4591
    %v4602 = vsel %vm4595, %v4598, %v4601
    %v4603 = vsel %vm4592, nan, %v4602
    %v4604 = vand.u32 2147483647, %v4138
    %vm4605 = vcmp.le.f32.partialorder %v4604, 0.7853982
    %vm4606 = vcmp.lt.s32.totalorder %v4138, 0
    %v4607 = vand.u32 %v4138, 2139095040
    %v4608 = vshrl.u32 %v4607, 23
    %v4609 = vsub.s32 %v4608, 127
    %v4610 = vand.u32 2147483647, %v4138
    %v4611 = vand.u32 %v4610, 8388607
    %v4612 = vor.u32 %v4611, 8388608
    %v4613 = vsub.s32 0, %v4612
    %v4614 = vadd.s32 %v4609, 1
    %vm4615 = vcmp.gt.s32.totalorder %v4614, 0
    %v4616 = vsel %vm4615, %v4614, 0
    %v4617 = vshrl.u32 %v4616, 5
    %v4618 = vand.u32 %v4616, 31
    %v4619 = vsub.s32 32, %v4618
    %v4620 = vshrl.u32 683565275, %v4619
    %v4621 = vshll.u32 683565275, %v4618
    %v4622 = vshrl.u32 2475754826, %v4619
    %v4623 = vor.u32 %v4621, %v4622
    %v4624 = vshll.u32 2475754826, %v4618
    %v4625 = vshrl.u32 2131351028, %v4619
    %v4626 = vor.u32 %v4624, %v4625
    %v4627 = vshll.u32 2131351028, %v4618
    %v4628 = vshrl.u32 2102212464, %v4619
    %v4629 = vor.u32 %v4627, %v4628
    %v4630 = vshll.u32 2102212464, %v4618
    %v4631 = vshrl.u32 920167782, %v4619
    %v4632 = vor.u32 %v4630, %v4631
    %v4633 = vshll.u32 920167782, %v4618
    %v4634 = vshrl.u32 1326507024, %v4619
    %v4635 = vor.u32 %v4633, %v4634
    %vm4636 = vcmp.lt.s32.totalorder %v4617, 1
    %vm4637 = vcmp.lt.s32.totalorder %v4617, 2
    %vm4638 = vcmp.lt.s32.totalorder %v4617, 3
    %vm4639 = vcmp.lt.s32.totalorder %v4617, 4
    %v4640 = vsel %vm4636, %v4620, %v4623
    %v4641 = vsel %vm4639, %v4629, 2102212464
    %v4642 = vsel %vm4638, %v4626, %v4641
    %v4643 = vsel %vm4637, %v4640, %v4642
    %v4644 = vsel %vm4636, %v4623, %v4626
    %v4645 = vsel %vm4639, %v4632, 920167782
    %v4646 = vsel %vm4638, %v4629, %v4645
    %v4647 = vsel %vm4637, %v4644, %v4646
    %v4648 = vsel %vm4636, %v4626, %v4629
    %v4649 = vsel %vm4639, %v4635, 1326507024
    %v4650 = vsel %vm4638, %v4632, %v4649
    %v4651 = vsel %vm4637, %v4648, %v4650
    %v4652 = vshll.u32 %v4612, 8
    %v4653 = vand.u32 %v4652, 65535
    %v4654 = vshrl.u32 %v4652, 16
    %v4655 = vand.u32 %v4651, 65535
    %v4656 = vshrl.u32 %v4651, 16
    %v4657 = vmul.u32 %v4653, %v4655
    %v4658 = vmul.u32 %v4653, %v4656
    %v4659 = vmul.u32 %v4654, %v4655
    %v4660 = vmul.u32 %v4654, %v4656
    %v4661 = vshll.u32 %v4658, 16
    %v4662 = vshrl.u32 %v4658, 16
    %v4663 = vshll.u32 %v4659, 16
    %v4664 = vshrl.u32 %v4659, 16
    %vm4665 = vc.u32 %v4657, %v4661
    %v4666 = vsel %vm4665, 1, 0
    %v4667 = vadd.s32 %v4657, %v4661
    %v4668 = vadd.s32 %v4660, %v4666
    %vm4669 = vc.u32 %v4667, %v4663
    %v4670 = vsel %vm4669, 1, 0
    %v4671 = vadd.s32 %v4667, %v4663
    %v4672 = vadd.s32 %v4668, %v4670
    %v4673 = vadd.s32 %v4672, %v4662
    %v4674 = vadd.s32 %v4673, %v4664
    %v4675 = vand.u32 %v4652, 65535
    %v4676 = vshrl.u32 %v4652, 16
    %v4677 = vand.u32 %v4647, 65535
    %v4678 = vshrl.u32 %v4647, 16
    %v4679 = vmul.u32 %v4675, %v4677
    %v4680 = vmul.u32 %v4675, %v4678
    %v4681 = vmul.u32 %v4676, %v4677
    %v4682 = vmul.u32 %v4676, %v4678
    %v4683 = vshll.u32 %v4680, 16
    %v4684 = vshrl.u32 %v4680, 16
    %v4685 = vshll.u32 %v4681, 16
    %v4686 = vshrl.u32 %v4681, 16
    %vm4687 = vc.u32 %v4679, %v4683
    %v4688 = vsel %vm4687, 1, 0
    %v4689 = vadd.s32 %v4679, %v4683
    %v4690 = vadd.s32 %v4682, %v4688
    %vm4691 = vc.u32 %v4689, %v4685
    %v4692 = vsel %vm4691, 1, 0
    %v4693 = vadd.s32 %v4689, %v4685
    %v4694 = vadd.s32 %v4690, %v4692
    %v4695 = vadd.s32 %v4694, %v4684
    %v4696 = vadd.s32 %v4695, %v4686
    %v4697 = vmul.u32 %v4652, %v4643
    %v4698 = vadd.s32 %v4674, %v4693
    %vm4699 = vc.u32 %v4674, %v4693
    %v4700 = vadd.s32 %v4696, 1
    %v4701 = vsel %vm4699, %v4700, %v4696
    %v4702 = vadd.s32 %v4697, %v4701
    %v4703 = vadd.s32 %v4702, 536870912
    %v4704 = vshrl.u32 %v4703, 30
    %v4705 = vshll.u32 %v4704, 30
    %v4706 = vsub.s32 %v4702, %v4705
    %vm4707 = vcmp.lt.s32.totalorder %v4706, 0
    %v4708 = vsub.s32 0, %v4706
    %v4709 = vsel %vm4707, %v4708, %v4706
    %v4710 = vclz %v4709
    %v4711 = vsub.s32 %v4710, 2
    %vm4712 = vcmp.gt.s32.totalorder 0, %v4711
    %v4713 = vsel %vm4712, 0, %v4711
    %v4714 = vsub.s32 32, %v4713
    %v4715 = vshll.u32 %v4706, %v4713
    %v4716 = vshrl.u32 %v4698, %v4714
    %v4717 = vor.u32 %v4715, %v4716
    %v4718 = vsub.s32 4294967266, %v4713
    %v4719 = vadd.s32 %v4718, 127
    %v4720 = vshll.u32 %v4719, 23
    %v4721 = vor.u32 4788187, %v4720
    %v4722 = vand.u32 2147483647, %v4721
    %v4724 = vcvt.s32.f32 %v4717
    %v4725 = vmul.f32 %v4724, %v4722
    %v4726 = vxor.u32 %v4725, 2147483648
    %v4727 = vsel %vm4606, %v4726, %v4725
    %v4728 = vsub.s32 4, %v4704
    %v4729 = vsel %vm4606, %v4728, %v4704
    %v4730 = vsel %vm4605, %v4138, %v4727
    %v4731 = vsel %vm4605, 0, %v4729
    %v4732 = vmul.f32 %v4730, %v4730
    %v4733 = vmul.f32 %v4732, -0.001358992
    %v4734 = vadd.f32 %v4733, 0.041655596
    %v4735 = vmul.f32 %v4732, %v4734
    %v4736 = vadd.f32 %v4735, -0.4999988
    %v4737 = vmul.f32 %v4732, %v4736
    %v4738 = vadd.f32 1.0, %v4737
    %v4739 = vmul.f32 %v4730, %v4730
    %v4740 = vmul.f32 %v4739, -0.00019511016
    %v4741 = vadd.f32 %v4740, 0.008332121
    %v4742 = vmul.f32 %v4739, %v4741
    %v4743 = vadd.f32 %v4742, -0.16666654
    %v4744 = vmul.f32 %v4739, %v4743
    %v4745 = vadd.f32 %v4744, 1.0
    %v4746 = vmul.f32 %v4745, %v4730
    %vm4747 = vweird.f32 %v4138
    %v4748 = vadd.s32 %v4731, 3
    %v4749 = vand.u32 %v4748, 3
    %vm4750 = vcmp.lt.s32.totalorder %v4749, 2
    %vm4751 = vcmp.eq.s32.totalorder %v4749, 0
    %v4752 = vxor.u32 %v4746, 2147483648
    %v4753 = vsel %vm4751, %v4738, %v4752
    %vm4754 = vcmp.eq.s32.totalorder %v4749, 2
    %v4755 = vxor.u32 %v4738, 2147483648
    %v4756 = vsel %vm4754, %v4755, %v4746
    %v4757 = vsel %vm4750, %v4753, %v4756
    %v4758 = vsel %vm4747, nan, %v4757
    %v4759 = vadd.f32 %v3425, %v4293
    %v4760 = vadd.f32 %v3426, %v4448
    %v4761 = vadd.f32 %v3427, %v4603
    %v4762 = vadd.f32 %v3428, %v4758
    %v4763 = vand.u32 2147483647, %v4135
    %vm4764 = vcmp.le.f32.partialorder %v4763, 0.7853982
    %vm4765 = vcmp.lt.s32.totalorder %v4135, 0
    %v4766 = vand.u32 %v4135, 2139095040
    %v4767 = vshrl.u32 %v4766, 23
    %v4768 = vsub.s32 %v4767, 127
    %v4769 = vand.u32 2147483647, %v4135
    %v4770 = vand.u32 %v4769, 8388607
    %v4771 = vor.u32 %v4770, 8388608
    %v4772 = vsub.s32 0, %v4771
    %v4773 = vadd.s32 %v4768, 1
    %vm4774 = vcmp.gt.s32.totalorder %v4773, 0
    %v4775 = vsel %vm4774, %v4773, 0
    %v4776 = vshrl.u32 %v4775, 5
    %v4777 = vand.u32 %v4775, 31
    %v4778 = vsub.s32 32, %v4777
    %v4779 = vshrl.u32 683565275, %v4778
    %v4780 = vshll.u32 683565275, %v4777
    %v4781 = vshrl.u32 2475754826, %v4778
    %v4782 = vor.u32 %v4780, %v4781
    %v4783 = vshll.u32 2475754826, %v4777
    %v4784 = vshrl.u32 2131351028, %v4778
    %v4785 = vor.u32 %v4783, %v4784
    %v4786 = vshll.u32 2131351028, %v4777
    %v4787 = vshrl.u32 2102212464, %v4778
    %v4788 = vor.u32 %v4786, %v4787
    %v4789 = vshll.u32 2102212464, %v4777
    %v4790 = vshrl.u32 920167782, %v4778
    %v4791 = vor.u32 %v4789, %v4790
    %v4792 = vshll.u32 920167782, %v4777
    %v4793 = vshrl.u32 1326507024, %v4778
    %v4794 = vor.u32 %v4792, %v4793
    %vm4795 = vcmp.lt.s32.totalorder %v4776, 1
    %vm4796 = vcmp.lt.s32.totalorder %v4776, 2
    %vm4797 = vcmp.lt.s32.totalorder %v4776, 3
    %vm4798 = vcmp.lt.s32.totalorder %v4776, 4
    %v4799 = vsel %vm4795, %v4779, %v4782
    %v4800 = vsel %vm4798, %v4788, 2102212464
    %v4801 = vsel %vm4797, %v4785, %v4800
    %v4802 = vsel %vm4796, %v4799, %v4801
    %v4803 = vsel %vm4795, %v4782, %v4785
    %v4804 = vsel %vm4798, %v4791, 920167782
    %v4805 = vsel %vm4797, %v4788, %v4804
    %v4806 = vsel %vm4796, %v4803, %v4805
    %v4807 = vsel %vm4795, %v4785, %v4788
    %v4808 = vsel %vm4798, %v4794, 1326507024
    %v4809 = vsel %vm4797, %v4791, %v4808
    %v4810 = vsel %vm4796, %v4807, %v4809
    %v4811 = vshll.u32 %v4771, 8
    %v4812 = vand.u32 %v4811, 65535
    %v4813 = vshrl.u32 %v4811, 16
    %v4814 = vand.u32 %v4810, 65535
    %v4815 = vshrl.u32 %v4810, 16
    %v4816 = vmul.u32 %v4812, %v4814
    %v4817 = vmul.u32 %v4812, %v4815
    %v4818 = vmul.u32 %v4813, %v4814
    %v4819 = vmul.u32 %v4813, %v4815
    %v4820 = vshll.u32 %v4817, 16
    %v4821 = vshrl.u32 %v4817, 16
    %v4822 = vshll.u32 %v4818, 16
    %v4823 = vshrl.u32 %v4818, 16
    %vm4824 = vc.u32 %v4816, %v4820
    %v4825 = vsel %vm4824, 1, 0
    %v4826 = vadd.s32 %v4816, %v4820
    %v4827 = vadd.s32 %v4819, %v4825
    %vm4828 = vc.u32 %v4826, %v4822
    %v4829 = vsel %vm4828, 1, 0
    %v4830 = vadd.s32 %v4826, %v4822
    %v4831 = vadd.s32 %v4827, %v4829
    %v4832 = vadd.s32 %v4831, %v4821
    %v4833 = vadd.s32 %v4832, %v4823
    %v4834 = vand.u32 %v4811, 65535
    %v4835 = vshrl.u32 %v4811, 16
    %v4836 = vand.u32 %v4806, 65535
    %v4837 = vshrl.u32 %v4806, 16
    %v4838 = vmul.u32 %v4834, %v4836
    %v4839 = vmul.u32 %v4834, %v4837
    %v4840 = vmul.u32 %v4835, %v4836
    %v4841 = vmul.u32 %v4835, %v4837
    %v4842 = vshll.u32 %v4839, 16
    %v4843 = vshrl.u32 %v4839, 16
    %v4844 = vshll.u32 %v4840, 16
    %v4845 = vshrl.u32 %v4840, 16
    %vm4846 = vc.u32 %v4838, %v4842
    %v4847 = vsel %vm4846, 1, 0
    %v4848 = vadd.s32 %v4838, %v4842
    %v4849 = vadd.s32 %v4841, %v4847
    %vm4850 = vc.u32 %v4848, %v4844
    %v4851 = vsel %vm4850, 1, 0
    %v4852 = vadd.s32 %v4848, %v4844
    %v4853 = vadd.s32 %v4849, %v4851
    %v4854 = vadd.s32 %v4853, %v4843
    %v4855 = vadd.s32 %v4854, %v4845
    %v4856 = vmul.u32 %v4811, %v4802
    %v4857 = vadd.s32 %v4833, %v4852
    %vm4858 = vc.u32 %v4833, %v4852
    %v4859 = vadd.s32 %v4855, 1
    %v4860 = vsel %vm4858, %v4859, %v4855
    %v4861 = vadd.s32 %v4856, %v4860
    %v4862 = vadd.s32 %v4861, 536870912
    %v4863 = vshrl.u32 %v4862, 30
    %v4864 = vshll.u32 %v4863, 30
    %v4865 = vsub.s32 %v4861, %v4864
    %vm4866 = vcmp.lt.s32.totalorder %v4865, 0
    %v4867 = vsub.s32 0, %v4865
    %v4868 = vsel %vm4866, %v4867, %v4865
    %v4869 = vclz %v4868
    %v4870 = vsub.s32 %v4869, 2
    %vm4871 = vcmp.gt.s32.totalorder 0, %v4870
    %v4872 = vsel %vm4871, 0, %v4870
    %v4873 = vsub.s32 32, %v4872
    %v4874 = vshll.u32 %v4865, %v4872
    %v4875 = vshrl.u32 %v4857, %v4873
    %v4876 = vor.u32 %v4874, %v4875
    %v4877 = vsub.s32 4294967266, %v4872
    %v4878 = vadd.s32 %v4877, 127
    %v4879 = vshll.u32 %v4878, 23
    %v4880 = vor.u32 4788187, %v4879
    %v4881 = vand.u32 2147483647, %v4880
    %v4883 = vcvt.s32.f32 %v4876
    %v4884 = vmul.f32 %v4883, %v4881
    %v4885 = vxor.u32 %v4884, 2147483648
    %v4886 = vsel %vm4765, %v4885, %v4884
    %v4887 = vsub.s32 4, %v4863
    %v4888 = vsel %vm4765, %v4887, %v4863
    %v4889 = vsel %vm4764, %v4135, %v4886
    %v4890 = vsel %vm4764, 0, %v4888
    %v4891 = vmul.f32 %v4889, %v4889
    %v4892 = vmul.f32 %v4891, -0.001358992
    %v4893 = vadd.f32 %v4892, 0.041655596
    %v4894 = vmul.f32 %v4891, %v4893
    %v4895 = vadd.f32 %v4894, -0.4999988
    %v4896 = vmul.f32 %v4891, %v4895
    %v4897 = vadd.f32 1.0, %v4896
    %v4898 = vmul.f32 %v4889, %v4889
    %v4899 = vmul.f32 %v4898, -0.00019511016
    %v4900 = vadd.f32 %v4899, 0.008332121
    %v4901 = vmul.f32 %v4898, %v4900
    %v4902 = vadd.f32 %v4901, -0.16666654
    %v4903 = vmul.f32 %v4898, %v4902
    %v4904 = vadd.f32 %v4903, 1.0
    %v4905 = vmul.f32 %v4904, %v4889
    %vm4906 = vweird.f32 %v4135
    %v4907 = vand.u32 %v4890, 3
    %vm4908 = vcmp.lt.s32.totalorder %v4907, 2
    %vm4909 = vcmp.eq.s32.totalorder %v4907, 0
    %v4910 = vxor.u32 %v4905, 2147483648
    %v4911 = vsel %vm4909, %v4897, %v4910
    %vm4912 = vcmp.eq.s32.totalorder %v4907, 2
    %v4913 = vxor.u32 %v4897, 2147483648
    %v4914 = vsel %vm4912, %v4913, %v4905
    %v4915 = vsel %vm4908, %v4911, %v4914
    %v4916 = vsel %vm4906, nan, %v4915
    %v4917 = vand.u32 2147483647, %v4136
    %vm4918 = vcmp.le.f32.partialorder %v4917, 0.7853982
    %vm4919 = vcmp.lt.s32.totalorder %v4136, 0
    %v4920 = vand.u32 %v4136, 2139095040
    %v4921 = vshrl.u32 %v4920, 23
    %v4922 = vsub.s32 %v4921, 127
    %v4923 = vand.u32 2147483647, %v4136
    %v4924 = vand.u32 %v4923, 8388607
    %v4925 = vor.u32 %v4924, 8388608
    %v4926 = vsub.s32 0, %v4925
    %v4927 = vadd.s32 %v4922, 1
    %vm4928 = vcmp.gt.s32.totalorder %v4927, 0
    %v4929 = vsel %vm4928, %v4927, 0
    %v4930 = vshrl.u32 %v4929, 5
    %v4931 = vand.u32 %v4929, 31
    %v4932 = vsub.s32 32, %v4931
    %v4933 = vshrl.u32 683565275, %v4932
    %v4934 = vshll.u32 683565275, %v4931
    %v4935 = vshrl.u32 2475754826, %v4932
    %v4936 = vor.u32 %v4934, %v4935
    %v4937 = vshll.u32 2475754826, %v4931
    %v4938 = vshrl.u32 2131351028, %v4932
    %v4939 = vor.u32 %v4937, %v4938
    %v4940 = vshll.u32 2131351028, %v4931
    %v4941 = vshrl.u32 2102212464, %v4932
    %v4942 = vor.u32 %v4940, %v4941
    %v4943 = vshll.u32 2102212464, %v4931
    %v4944 = vshrl.u32 920167782, %v4932
    %v4945 = vor.u32 %v4943, %v4944
    %v4946 = vshll.u32 920167782, %v4931
    %v4947 = vshrl.u32 1326507024, %v4932
    %v4948 = vor.u32 %v4946, %v4947
    %vm4949 = vcmp.lt.s32.totalorder %v4930, 1
    %vm4950 = vcmp.lt.s32.totalorder %v4930, 2
    %vm4951 = vcmp.lt.s32.totalorder %v4930, 3
    %vm4952 = vcmp.lt.s32.totalorder %v4930, 4
    %v4953 = vsel %vm4949, %v4933, %v4936
    %v4954 = vsel %vm4952, %v4942, 2102212464
    %v4955 = vsel %vm4951, %v4939, %v4954
    %v4956 = vsel %vm4950, %v4953, %v4955
    %v4957 = vsel %vm4949, %v4936, %v4939
    %v4958 = vsel %vm4952, %v4945, 920167782
    %v4959 = vsel %vm4951, %v4942, %v4958
    %v4960 = vsel %vm4950, %v4957, %v4959
    %v4961 = vsel %vm4949, %v4939, %v4942
    %v4962 = vsel %vm4952, %v4948, 1326507024
    %v4963 = vsel %vm4951, %v4945, %v4962
    %v4964 = vsel %vm4950, %v4961, %v4963
    %v4965 = vshll.u32 %v4925, 8
    %v4966 = vand.u32 %v4965, 65535
    %v4967 = vshrl.u32 %v4965, 16
    %v4968 = vand.u32 %v4964, 65535
    %v4969 = vshrl.u32 %v4964, 16
    %v4970 = vmul.u32 %v4966, %v4968
    %v4971 = vmul.u32 %v4966, %v4969
    %v4972 = vmul.u32 %v4967, %v4968
    %v4973 = vmul.u32 %v4967, %v4969
    %v4974 = vshll.u32 %v4971, 16
    %v4975 = vshrl.u32 %v4971, 16
    %v4976 = vshll.u32 %v4972, 16
    %v4977 = vshrl.u32 %v4972, 16
    %vm4978 = vc.u32 %v4970, %v4974
    %v4979 = vsel %vm4978, 1, 0
    %v4980 = vadd.s32 %v4970, %v4974
    %v4981 = vadd.s32 %v4973, %v4979
    %vm4982 = vc.u32 %v4980, %v4976
    %v4983 = vsel %vm4982, 1, 0
    %v4984 = vadd.s32 %v4980, %v4976
    %v4985 = vadd.s32 %v4981, %v4983
    %v4986 = vadd.s32 %v4985, %v4975
    %v4987 = vadd.s32 %v4986, %v4977
    %v4988 = vand.u32 %v4965, 65535
    %v4989 = vshrl.u32 %v4965, 16
    %v4990 = vand.u32 %v4960, 65535
    %v4991 = vshrl.u32 %v4960, 16
    %v4992 = vmul.u32 %v4988, %v4990
    %v4993 = vmul.u32 %v4988, %v4991
    %v4994 = vmul.u32 %v4989, %v4990
    %v4995 = vmul.u32 %v4989, %v4991
    %v4996 = vshll.u32 %v4993, 16
    %v4997 = vshrl.u32 %v4993, 16
    %v4998 = vshll.u32 %v4994, 16
    %v4999 = vshrl.u32 %v4994, 16
    %vm5000 = vc.u32 %v4992, %v4996
    %v5001 = vsel %vm5000, 1, 0
    %v5002 = vadd.s32 %v4992, %v4996
    %v5003 = vadd.s32 %v4995, %v5001
    %vm5004 = vc.u32 %v5002, %v4998
    %v5005 = vsel %vm5004, 1, 0
    %v5006 = vadd.s32 %v5002, %v4998
    %v5007 = vadd.s32 %v5003, %v5005
    %v5008 = vadd.s32 %v5007, %v4997
    %v5009 = vadd.s32 %v5008, %v4999
    %v5010 = vmul.u32 %v4965, %v4956
    %v5011 = vadd.s32 %v4987, %v5006
    %vm5012 = vc.u32 %v4987, %v5006
    %v5013 = vadd.s32 %v5009, 1
    %v5014 = vsel %vm5012, %v5013, %v5009
    %v5015 = vadd.s32 %v5010, %v5014
    %v5016 = vadd.s32 %v5015, 536870912
    %v5017 = vshrl.u32 %v5016, 30
    %v5018 = vshll.u32 %v5017, 30
    %v5019 = vsub.s32 %v5015, %v5018
    %vm5020 = vcmp.lt.s32.totalorder %v5019, 0
    %v5021 = vsub.s32 0, %v5019
    %v5022 = vsel %vm5020, %v5021, %v5019
    %v5023 = vclz %v5022
    %v5024 = vsub.s32 %v5023, 2
    %vm5025 = vcmp.gt.s32.totalorder 0, %v5024
    %v5026 = vsel %vm5025, 0, %v5024
    %v5027 = vsub.s32 32, %v5026
    %v5028 = vshll.u32 %v5019, %v5026
    %v5029 = vshrl.u32 %v5011, %v5027
    %v5030 = vor.u32 %v5028, %v5029
    %v5031 = vsub.s32 4294967266, %v5026
    %v5032 = vadd.s32 %v5031, 127
    %v5033 = vshll.u32 %v5032, 23
    %v5034 = vor.u32 4788187, %v5033
    %v5035 = vand.u32 2147483647, %v5034
    %v5037 = vcvt.s32.f32 %v5030
    %v5038 = vmul.f32 %v5037, %v5035
    %v5039 = vxor.u32 %v5038, 2147483648
    %v5040 = vsel %vm4919, %v5039, %v5038
    %v5041 = vsub.s32 4, %v5017
    %v5042 = vsel %vm4919, %v5041, %v5017
    %v5043 = vsel %vm4918, %v4136, %v5040
    %v5044 = vsel %vm4918, 0, %v5042
    %v5045 = vmul.f32 %v5043, %v5043
    %v5046 = vmul.f32 %v5045, -0.001358992
    %v5047 = vadd.f32 %v5046, 0.041655596
    %v5048 = vmul.f32 %v5045, %v5047
    %v5049 = vadd.f32 %v5048, -0.4999988
    %v5050 = vmul.f32 %v5045, %v5049
    %v5051 = vadd.f32 1.0, %v5050
    %v5052 = vmul.f32 %v5043, %v5043
    %v5053 = vmul.f32 %v5052, -0.00019511016
    %v5054 = vadd.f32 %v5053, 0.008332121
    %v5055 = vmul.f32 %v5052, %v5054
    %v5056 = vadd.f32 %v5055, -0.16666654
    %v5057 = vmul.f32 %v5052, %v5056
    %v5058 = vadd.f32 %v5057, 1.0
    %v5059 = vmul.f32 %v5058, %v5043
    %vm5060 = vweird.f32 %v4136
    %v5061 = vand.u32 %v5044, 3
    %vm5062 = vcmp.lt.s32.totalorder %v5061, 2
    %vm5063 = vcmp.eq.s32.totalorder %v5061, 0
    %v5064 = vxor.u32 %v5059, 2147483648
    %v5065 = vsel %vm5063, %v5051, %v5064
    %vm5066 = vcmp.eq.s32.totalorder %v5061, 2
    %v5067 = vxor.u32 %v5051, 2147483648
    %v5068 = vsel %vm5066, %v5067, %v5059
    %v5069 = vsel %vm5062, %v5065, %v5068
    %v5070 = vsel %vm5060, nan, %v5069
    %v5071 = vand.u32 2147483647, %v4137
    %vm5072 = vcmp.le.f32.partialorder %v5071, 0.7853982
    %vm5073 = vcmp.lt.s32.totalorder %v4137, 0
    %v5074 = vand.u32 %v4137, 2139095040
    %v5075 = vshrl.u32 %v5074, 23
    %v5076 = vsub.s32 %v5075, 127
    %v5077 = vand.u32 2147483647, %v4137
    %v5078 = vand.u32 %v5077, 8388607
    %v5079 = vor.u32 %v5078, 8388608
    %v5080 = vsub.s32 0, %v5079
    %v5081 = vadd.s32 %v5076, 1
    %vm5082 = vcmp.gt.s32.totalorder %v5081, 0
    %v5083 = vsel %vm5082, %v5081, 0
    %v5084 = vshrl.u32 %v5083, 5
    %v5085 = vand.u32 %v5083, 31
    %v5086 = vsub.s32 32, %v5085
    %v5087 = vshrl.u32 683565275, %v5086
    %v5088 = vshll.u32 683565275, %v5085
    %v5089 = vshrl.u32 2475754826, %v5086
    %v5090 = vor.u32 %v5088, %v5089
    %v5091 = vshll.u32 2475754826, %v5085
    %v5092 = vshrl.u32 2131351028, %v5086
    %v5093 = vor.u32 %v5091, %v5092
    %v5094 = vshll.u32 2131351028, %v5085
    %v5095 = vshrl.u32 2102212464, %v5086
    %v5096 = vor.u32 %v5094, %v5095
    %v5097 = vshll.u32 2102212464, %v5085
    %v5098 = vshrl.u32 920167782, %v5086
    %v5099 = vor.u32 %v5097, %v5098
    %v5100 = vshll.u32 920167782, %v5085
    %v5101 = vshrl.u32 1326507024, %v5086
    %v5102 = vor.u32 %v5100, %v5101
    %vm5103 = vcmp.lt.s32.totalorder %v5084, 1
    %vm5104 = vcmp.lt.s32.totalorder %v5084, 2
    %vm5105 = vcmp.lt.s32.totalorder %v5084, 3
    %vm5106 = vcmp.lt.s32.totalorder %v5084, 4
    %v5107 = vsel %vm5103, %v5087, %v5090
    %v5108 = vsel %vm5106, %v5096, 2102212464
    %v5109 = vsel %vm5105, %v5093, %v5108
    %v5110 = vsel %vm5104, %v5107, %v5109
    %v5111 = vsel %vm5103, %v5090, %v5093
    %v5112 = vsel %vm5106, %v5099, 920167782
    %v5113 = vsel %vm5105, %v5096, %v5112
    %v5114 = vsel %vm5104, %v5111, %v5113
    %v5115 = vsel %vm5103, %v5093, %v5096
    %v5116 = vsel %vm5106, %v5102, 1326507024
    %v5117 = vsel %vm5105, %v5099, %v5116
    %v5118 = vsel %vm5104, %v5115, %v5117
    %v5119 = vshll.u32 %v5079, 8
    %v5120 = vand.u32 %v5119, 65535
    %v5121 = vshrl.u32 %v5119, 16
    %v5122 = vand.u32 %v5118, 65535
    %v5123 = vshrl.u32 %v5118, 16
    %v5124 = vmul.u32 %v5120, %v5122
    %v5125 = vmul.u32 %v5120, %v5123
    %v5126 = vmul.u32 %v5121, %v5122
    %v5127 = vmul.u32 %v5121, %v5123
    %v5128 = vshll.u32 %v5125, 16
    %v5129 = vshrl.u32 %v5125, 16
    %v5130 = vshll.u32 %v5126, 16
    %v5131 = vshrl.u32 %v5126, 16
    %vm5132 = vc.u32 %v5124, %v5128
    %v5133 = vsel %vm5132, 1, 0
    %v5134 = vadd.s32 %v5124, %v5128
    %v5135 = vadd.s32 %v5127, %v5133
    %vm5136 = vc.u32 %v5134, %v5130
    %v5137 = vsel %vm5136, 1, 0
    %v5138 = vadd.s32 %v5134, %v5130
    %v5139 = vadd.s32 %v5135, %v5137
    %v5140 = vadd.s32 %v5139, %v5129
    %v5141 = vadd.s32 %v5140, %v5131
    %v5142 = vand.u32 %v5119, 65535
    %v5143 = vshrl.u32 %v5119, 16
    %v5144 = vand.u32 %v5114, 65535
    %v5145 = vshrl.u32 %v5114, 16
    %v5146 = vmul.u32 %v5142, %v5144
    %v5147 = vmul.u32 %v5142, %v5145
    %v5148 = vmul.u32 %v5143, %v5144
    %v5149 = vmul.u32 %v5143, %v5145
    %v5150 = vshll.u32 %v5147, 16
    %v5151 = vshrl.u32 %v5147, 16
    %v5152 = vshll.u32 %v5148, 16
    %v5153 = vshrl.u32 %v5148, 16
    %vm5154 = vc.u32 %v5146, %v5150
    %v5155 = vsel %vm5154, 1, 0
    %v5156 = vadd.s32 %v5146, %v5150
    %v5157 = vadd.s32 %v5149, %v5155
    %vm5158 = vc.u32 %v5156, %v5152
    %v5159 = vsel %vm5158, 1, 0
    %v5160 = vadd.s32 %v5156, %v5152
    %v5161 = vadd.s32 %v5157, %v5159
    %v5162 = vadd.s32 %v5161, %v5151
    %v5163 = vadd.s32 %v5162, %v5153
    %v5164 = vmul.u32 %v5119, %v5110
    %v5165 = vadd.s32 %v5141, %v5160
    %vm5166 = vc.u32 %v5141, %v5160
    %v5167 = vadd.s32 %v5163, 1
    %v5168 = vsel %vm5166, %v5167, %v5163
    %v5169 = vadd.s32 %v5164, %v5168
    %v5170 = vadd.s32 %v5169, 536870912
    %v5171 = vshrl.u32 %v5170, 30
    %v5172 = vshll.u32 %v5171, 30
    %v5173 = vsub.s32 %v5169, %v5172
    %vm5174 = vcmp.lt.s32.totalorder %v5173, 0
    %v5175 = vsub.s32 0, %v5173
    %v5176 = vsel %vm5174, %v5175, %v5173
    %v5177 = vclz %v5176
    %v5178 = vsub.s32 %v5177, 2
    %vm5179 = vcmp.gt.s32.totalorder 0, %v5178
    %v5180 = vsel %vm5179, 0, %v5178
    %v5181 = vsub.s32 32, %v5180
    %v5182 = vshll.u32 %v5173, %v5180
    %v5183 = vshrl.u32 %v5165, %v5181
    %v5184 = vor.u32 %v5182, %v5183
    %v5185 = vsub.s32 4294967266, %v5180
    %v5186 = vadd.s32 %v5185, 127
    %v5187 = vshll.u32 %v5186, 23
    %v5188 = vor.u32 4788187, %v5187
    %v5189 = vand.u32 2147483647, %v5188
    %v5191 = vcvt.s32.f32 %v5184
    %v5192 = vmul.f32 %v5191, %v5189
    %v5193 = vxor.u32 %v5192, 2147483648
    %v5194 = vsel %vm5073, %v5193, %v5192
    %v5195 = vsub.s32 4, %v5171
    %v5196 = vsel %vm5073, %v5195, %v5171
    %v5197 = vsel %vm5072, %v4137, %v5194
    %v5198 = vsel %vm5072, 0, %v5196
    %v5199 = vmul.f32 %v5197, %v5197
    %v5200 = vmul.f32 %v5199, -0.001358992
    %v5201 = vadd.f32 %v5200, 0.041655596
    %v5202 = vmul.f32 %v5199, %v5201
    %v5203 = vadd.f32 %v5202, -0.4999988
    %v5204 = vmul.f32 %v5199, %v5203
    %v5205 = vadd.f32 1.0, %v5204
    %v5206 = vmul.f32 %v5197, %v5197
    %v5207 = vmul.f32 %v5206, -0.00019511016
    %v5208 = vadd.f32 %v5207, 0.008332121
    %v5209 = vmul.f32 %v5206, %v5208
    %v5210 = vadd.f32 %v5209, -0.16666654
    %v5211 = vmul.f32 %v5206, %v5210
    %v5212 = vadd.f32 %v5211, 1.0
    %v5213 = vmul.f32 %v5212, %v5197
    %vm5214 = vweird.f32 %v4137
    %v5215 = vand.u32 %v5198, 3
    %vm5216 = vcmp.lt.s32.totalorder %v5215, 2
    %vm5217 = vcmp.eq.s32.totalorder %v5215, 0
    %v5218 = vxor.u32 %v5213, 2147483648
    %v5219 = vsel %vm5217, %v5205, %v5218
    %vm5220 = vcmp.eq.s32.totalorder %v5215, 2
    %v5221 = vxor.u32 %v5205, 2147483648
    %v5222 = vsel %vm5220, %v5221, %v5213
    %v5223 = vsel %vm5216, %v5219, %v5222
    %v5224 = vsel %vm5214, nan, %v5223
    %v5225 = vand.u32 2147483647, %v4138
    %vm5226 = vcmp.le.f32.partialorder %v5225, 0.7853982
    %vm5227 = vcmp.lt.s32.totalorder %v4138, 0
    %v5228 = vand.u32 %v4138, 2139095040
    %v5229 = vshrl.u32 %v5228, 23
    %v5230 = vsub.s32 %v5229, 127
    %v5231 = vand.u32 2147483647, %v4138
    %v5232 = vand.u32 %v5231, 8388607
    %v5233 = vor.u32 %v5232, 8388608
    %v5234 = vsub.s32 0, %v5233
    %v5235 = vadd.s32 %v5230, 1
    %vm5236 = vcmp.gt.s32.totalorder %v5235, 0
    %v5237 = vsel %vm5236, %v5235, 0
    %v5238 = vshrl.u32 %v5237, 5
    %v5239 = vand.u32 %v5237, 31
    %v5240 = vsub.s32 32, %v5239
    %v5241 = vshrl.u32 683565275, %v5240
    %v5242 = vshll.u32 683565275, %v5239
    %v5243 = vshrl.u32 2475754826, %v5240
    %v5244 = vor.u32 %v5242, %v5243
    %v5245 = vshll.u32 2475754826, %v5239
    %v5246 = vshrl.u32 2131351028, %v5240
    %v5247 = vor.u32 %v5245, %v5246
    %v5248 = vshll.u32 2131351028, %v5239
    %v5249 = vshrl.u32 2102212464, %v5240
    %v5250 = vor.u32 %v5248, %v5249
    %v5251 = vshll.u32 2102212464, %v5239
    %v5252 = vshrl.u32 920167782, %v5240
    %v5253 = vor.u32 %v5251, %v5252
    %v5254 = vshll.u32 920167782, %v5239
    %v5255 = vshrl.u32 1326507024, %v5240
    %v5256 = vor.u32 %v5254, %v5255
    %vm5257 = vcmp.lt.s32.totalorder %v5238, 1
    %vm5258 = vcmp.lt.s32.totalorder %v5238, 2
    %vm5259 = vcmp.lt.s32.totalorder %v5238, 3
    %vm5260 = vcmp.lt.s32.totalorder %v5238, 4
    %v5261 = vsel %vm5257, %v5241, %v5244
    %v5262 = vsel %vm5260, %v5250, 2102212464
    %v5263 = vsel %vm5259, %v5247, %v5262
    %v5264 = vsel %vm5258, %v5261, %v5263
    %v5265 = vsel %vm5257, %v5244, %v5247
    %v5266 = vsel %vm5260, %v5253, 920167782
    %v5267 = vsel %vm5259, %v5250, %v5266
    %v5268 = vsel %vm5258, %v5265, %v5267
    %v5269 = vsel %vm5257, %v5247, %v5250
    %v5270 = vsel %vm5260, %v5256, 1326507024
    %v5271 = vsel %vm5259, %v5253, %v5270
    %v5272 = vsel %vm5258, %v5269, %v5271
    %v5273 = vshll.u32 %v5233, 8
    %v5274 = vand.u32 %v5273, 65535
    %v5275 = vshrl.u32 %v5273, 16
    %v5276 = vand.u32 %v5272, 65535
    %v5277 = vshrl.u32 %v5272, 16
    %v5278 = vmul.u32 %v5274, %v5276
    %v5279 = vmul.u32 %v5274, %v5277
    %v5280 = vmul.u32 %v5275, %v5276
    %v5281 = vmul.u32 %v5275, %v5277
    %v5282 = vshll.u32 %v5279, 16
    %v5283 = vshrl.u32 %v5279, 16
    %v5284 = vshll.u32 %v5280, 16
    %v5285 = vshrl.u32 %v5280, 16
    %vm5286 = vc.u32 %v5278, %v5282
    %v5287 = vsel %vm5286, 1, 0
    %v5288 = vadd.s32 %v5278, %v5282
    %v5289 = vadd.s32 %v5281, %v5287
    %vm5290 = vc.u32 %v5288, %v5284
    %v5291 = vsel %vm5290, 1, 0
    %v5292 = vadd.s32 %v5288, %v5284
    %v5293 = vadd.s32 %v5289, %v5291
    %v5294 = vadd.s32 %v5293, %v5283
    %v5295 = vadd.s32 %v5294, %v5285
    %v5296 = vand.u32 %v5273, 65535
    %v5297 = vshrl.u32 %v5273, 16
    %v5298 = vand.u32 %v5268, 65535
    %v5299 = vshrl.u32 %v5268, 16
    %v5300 = vmul.u32 %v5296, %v5298
    %v5301 = vmul.u32 %v5296, %v5299
    %v5302 = vmul.u32 %v5297, %v5298
    %v5303 = vmul.u32 %v5297, %v5299
    %v5304 = vshll.u32 %v5301, 16
    %v5305 = vshrl.u32 %v5301, 16
    %v5306 = vshll.u32 %v5302, 16
    %v5307 = vshrl.u32 %v5302, 16
    %vm5308 = vc.u32 %v5300, %v5304
    %v5309 = vsel %vm5308, 1, 0
    %v5310 = vadd.s32 %v5300, %v5304
    %v5311 = vadd.s32 %v5303, %v5309
    %vm5312 = vc.u32 %v5310, %v5306
    %v5313 = vsel %vm5312, 1, 0
    %v5314 = vadd.s32 %v5310, %v5306
    %v5315 = vadd.s32 %v5311, %v5313
    %v5316 = vadd.s32 %v5315, %v5305
    %v5317 = vadd.s32 %v5316, %v5307
    %v5318 = vmul.u32 %v5273, %v5264
    %v5319 = vadd.s32 %v5295, %v5314
    %vm5320 = vc.u32 %v5295, %v5314
    %v5321 = vadd.s32 %v5317, 1
    %v5322 = vsel %vm5320, %v5321, %v5317
    %v5323 = vadd.s32 %v5318, %v5322
    %v5324 = vadd.s32 %v5323, 536870912
    %v5325 = vshrl.u32 %v5324, 30
    %v5326 = vshll.u32 %v5325, 30
    %v5327 = vsub.s32 %v5323, %v5326
    %vm5328 = vcmp.lt.s32.totalorder %v5327, 0
    %v5329 = vsub.s32 0, %v5327
    %v5330 = vsel %vm5328, %v5329, %v5327
    %v5331 = vclz %v5330
    %v5332 = vsub.s32 %v5331, 2
    %vm5333 = vcmp.gt.s32.totalorder 0, %v5332
    %v5334 = vsel %vm5333, 0, %v5332
    %v5335 = vsub.s32 32, %v5334
    %v5336 = vshll.u32 %v5327, %v5334
    %v5337 = vshrl.u32 %v5319, %v5335
    %v5338 = vor.u32 %v5336, %v5337
    %v5339 = vsub.s32 4294967266, %v5334
    %v5340 = vadd.s32 %v5339, 127
    %v5341 = vshll.u32 %v5340, 23
    %v5342 = vor.u32 4788187, %v5341
    %v5343 = vand.u32 2147483647, %v5342
    %v5345 = vcvt.s32.f32 %v5338
    %v5346 = vmul.f32 %v5345, %v5343
    %v5347 = vxor.u32 %v5346, 2147483648
    %v5348 = vsel %vm5227, %v5347, %v5346
    %v5349 = vsub.s32 4, %v5325
    %v5350 = vsel %vm5227, %v5349, %v5325
    %v5351 = vsel %vm5226, %v4138, %v5348
    %v5352 = vsel %vm5226, 0, %v5350
    %v5353 = vmul.f32 %v5351, %v5351
    %v5354 = vmul.f32 %v5353, -0.001358992
    %v5355 = vadd.f32 %v5354, 0.041655596
    %v5356 = vmul.f32 %v5353, %v5355
    %v5357 = vadd.f32 %v5356, -0.4999988
    %v5358 = vmul.f32 %v5353, %v5357
    %v5359 = vadd.f32 1.0, %v5358
    %v5360 = vmul.f32 %v5351, %v5351
    %v5361 = vmul.f32 %v5360, -0.00019511016
    %v5362 = vadd.f32 %v5361, 0.008332121
    %v5363 = vmul.f32 %v5360, %v5362
    %v5364 = vadd.f32 %v5363, -0.16666654
    %v5365 = vmul.f32 %v5360, %v5364
    %v5366 = vadd.f32 %v5365, 1.0
    %v5367 = vmul.f32 %v5366, %v5351
    %vm5368 = vweird.f32 %v4138
    %v5369 = vand.u32 %v5352, 3
    %vm5370 = vcmp.lt.s32.totalorder %v5369, 2
    %vm5371 = vcmp.eq.s32.totalorder %v5369, 0
    %v5372 = vxor.u32 %v5367, 2147483648
    %v5373 = vsel %vm5371, %v5359, %v5372
    %vm5374 = vcmp.eq.s32.totalorder %v5369, 2
    %v5375 = vxor.u32 %v5359, 2147483648
    %v5376 = vsel %vm5374, %v5375, %v5367
    %v5377 = vsel %vm5370, %v5373, %v5376
    %v5378 = vsel %vm5368, nan, %v5377
    %v5379 = vadd.f32 %v4045, %v4916
    %v5380 = vadd.f32 %v4046, %v5070
    %v5381 = vadd.f32 %v4047, %v5224
    %v5382 = vadd.f32 %v4048, %v5378
    %v5383 = vmul.f32 %v4759, 0.25
    %v5384 = vmul.f32 %v4760, 0.25
    %v5385 = vmul.f32 %v4761, 0.25
    %v5386 = vmul.f32 %v4762, 0.25
    %v5391 = vrot.slane %v5384, 6
    %v5392 = vrot.slane %v5385, 4
    %v5393 = vrot.slane %v5386, 2
    %vm5394 = vcmask 1041408
    %v5395 = vsel %vm5394, %v5383, %v5391
    %vm5396 = vcmask 1045508
    %v5397 = vsel %vm5396, %v5392, %v5393
    %vm5398 = vcmask 1043456
    %v5399 = vsel %vm5398, %v5395, %v5397
    %5401 = vst [vmem:[#allocation7] sm:$0xff] %v5399
    %v5402 = vmul.f32 %v5379, 0.25
    %v5403 = vmul.f32 %v5380, 0.25
    %v5404 = vmul.f32 %v5381, 0.25
    %v5405 = vmul.f32 %v5382, 0.25
    %v5410 = vrot.slane %v5403, 6
    %v5411 = vrot.slane %v5404, 4
    %v5412 = vrot.slane %v5405, 2
    %v5413 = vsel %vm5394, %v5402, %v5410
    %v5414 = vsel %vm5396, %v5411, %v5412
    %v5415 = vsel %vm5398, %v5413, %v5414
    %5417 = vst [vmem:[#allocation7 + $0x8] sm:$0xff] %v5415
    // Predicated region
    $region18: #{tpu_custom_call.1} parent=1 // pred_check
      _
    $region19: #{tpu_custom_call.1} parent=1 // pred_check_branch
      %5419 = sbr.rel (0) target = $region21
    $region20: #{tpu_custom_call.1} parent=1 // pred_region
      %5421 = vsyncadd [#allocation4], 0
      %s5423 = sshll.u32 [#allocation7], 4
      %s5424 = int_to_ptr.vmem [resolvable:$true] %s5423
      %s5425 = sshll.u32 %s2, 4
      %s5426 = int_to_ptr.hbm [resolvable:$true] %s5425
      %5428 = dma.vmem_to_hbm [thread:$0]  %s5424, 256, %s5426, [#allocation4]
    $region21: #{tpu_custom_call.1} parent=1 // pred_fallthru
      _
    // Predicated region
    $region22: #{tpu_custom_call.1} parent=1 // pred_check
      _
    $region23: #{tpu_custom_call.1} parent=1 // pred_check_branch
      %5430 = sbr.rel (0) target = $region25
    $region24: #{tpu_custom_call.1} parent=1 // pred_region
      %5432 = dma.done [#allocation4], 256
    $region25: #{tpu_custom_call.1} parent=1 // pred_fallthru
      _
    %5433 = vsyncpa [#allocation3], 1
    %5434 = vsyncpa [#allocation6], 1
    %5435 = vsyncpa [#allocation4], 1

</llo_original>
